<compile_context>
chip_gen: v6e
topology: v6e:2x2x1
jax: 0.10.0
libtpu: 0.0.40
codegen_flags: <defaults>
</compile_context>

<pallas_src>
import functools

import numpy as np
import jax
import jax.numpy as jnp
from jax import lax
from jax.experimental import pallas as pl
from jax.experimental.pallas import tpu as pltpu


def _layernorm(x, gamma, beta, eps=1e-5):
    x = x.astype(jnp.float32)                      # statistics always in f32
    mu = jnp.mean(x, axis=-1, keepdims=True)
    xc = x - mu
    var = jnp.mean(xc * xc, axis=-1, keepdims=True)
    return xc * lax.rsqrt(var + eps) * gamma + beta


def decoder_layer_kernel(
    tgt_ref, mem_ref, qpos_ref, pos_ref,
    wqkv_ref, bqkv_ref, wo_ref, bo_ref,
    w1_ref, b1_ref, w2_ref, b2_ref,
    g1_ref, be1_ref, g2_ref, be2_ref, g3_ref, be3_ref,
    out_ref, ws_ref,
    *, nhead, s_real, fast):
    """One grid step handles `batch_block` batch elements.

    Row-wise ops (projections, out-projection, FFN, layernorms) run on flattened
    (B*L, E) / (B*S_pad, E) operands so matmuls have a tall M dimension; only the
    per-head score/softmax einsums use the (B, seq, Dh) view.
    """
    B, L, S_pad = ws_ref.shape
    E = out_ref.shape[-1]
    H = nhead
    Dh = E // H
    f32 = jnp.float32

    def cast(v):
        return v.astype(jnp.bfloat16) if fast else v.astype(f32)

    def mm(a, w):                                  # plain (M,K)@(K,N): weights pre-transposed
        return jnp.dot(cast(a), w, preferred_element_type=f32)

    x = tgt_ref[...]        # (B*L, E)     bf16 in fast_math (DMA halved), f32 otherwise
    qp = qpos_ref[...]      # (B*L, E)
    mem = mem_ref[...]      # (B*S_pad, E)
    mp = pos_ref[...]       # (B*S_pad, E)

    # NOTE: forward_post discards the self-attention output, so that dead compute is omitted;
    # norm1 acts on the ORIGINAL tgt.
    t1 = _layernorm(x, g1_ref[...], be1_ref[...])                     # f32 (B*L, E)

    # ---------------- cross multi-head attention ----------------
    bqkv = bqkv_ref[...]                                              # (3, E) f32 bias rows
    q_in = t1 + qp.astype(f32)
    k_in = mem.astype(f32) + mp.astype(f32)
    scale = 1.0 / float(Dh) ** 0.5
    # three tall projections; softmax scale hoisted; cast to MXU dtype ONCE (outside head loop)
    Q = cast((mm(q_in, wqkv_ref[0]) + bqkv[0:1, :]) * scale)          # (B*L, E)
    K = cast(mm(k_in, wqkv_ref[1]) + bqkv[1:2, :])                    # (B*S_pad, E)
    V = cast(mm(mem, wqkv_ref[2]) + bqkv[2:3, :])                     # (B*S_pad, E)

    # key-padding mask for the lane-density padding of S (finite: zero the exponentials)
    if S_pad != s_real:
        col = lax.broadcasted_iota(jnp.int32, (1, 1, S_pad), 2)
        kmask = (col < s_real).astype(f32)
    else:
        kmask = None

    ws_acc = None                 # head-average accumulates in registers; single ws store below
    ctx_parts = []                # per-head ctx concatenated once -> one fused out-projection
    for h in range(H):            # static unroll over heads
        lo = h * Dh
        Qh = Q[:, lo:lo + Dh].reshape(B, L, Dh)
        Kh = K[:, lo:lo + Dh].reshape(B, S_pad, Dh)
        Vh = V[:, lo:lo + Dh].reshape(B, S_pad, Dh)
        s = jnp.einsum('bld,bsd->bls', Qh, Kh, preferred_element_type=f32)   # (B, L, S_pad)
        s = s - jnp.max(s, axis=-1, keepdims=True)
        e = jnp.exp(s)
        if kmask is not None:
            e = e * kmask                                             # padded keys contribute 0
        denom = jnp.sum(e, axis=-1, keepdims=True)
        if fast:
            p = e * pl.reciprocal(denom, approx=True)                 # EUP slot; VPU stays free
        else:
            p = e / denom
        ws_acc = p if ws_acc is None else ws_acc + p
        ctx_parts.append(
            jnp.einsum('bls,bsd->bld', cast(p), Vh,
                       preferred_element_type=f32).reshape(B * L, Dh))
    # torch need_weights=True averages over heads; 1/H folded into the single store
    ws_ref[...] = (ws_acc * f32(1.0 / H)).astype(ws_ref.dtype)

    ctx = jnp.concatenate(ctx_parts, axis=-1)                         # (B*L, E)
    attn = mm(ctx, wo_ref[...]) + bo_ref[...]                         # one (B*L,E)x(E,E) matmul

    # residual (dropout2 = identity) + norm2, then FFN + norm3
    t2 = _layernorm(t1 + attn, g2_ref[...], be2_ref[...])
    h1 = jnp.maximum(mm(t2, w1_ref[...]) + b1_ref[...], 0.0)
    ff = mm(h1, w2_ref[...]) + b2_ref[...]
    out_ref[...] = _layernorm(t2 + ff, g3_ref[...], be3_ref[...]).astype(out_ref.dtype)


def _pick_batch_block(N, L, max_rows=512):
    """>=2 grid steps when N>=2 (v7x megacore), <= max_rows rows of B*L per step,
    and (batch_block*L) % 8 == 0 whenever the block is not the full batch."""
    cands = [d for d in range(1, N + 1)
             if N % d == 0 and (d == N or (d * L) % 8 == 0)]
    for d in sorted(cands, reverse=True):
        if (N == 1 or N // d >= 2) and d * L <= max_rows:
            return d
    for d in sorted(cands, reverse=True):
        if N == 1 or N // d >= 2:
            return d
    return N


def _vmem_limit_bytes(need_bytes):
    """Generation-aware VMEM budget: cap at 56 MiB (safe on v7x's 64 MiB physical) unless the
    hardware reports more capacity (v5e/v6e: 128 MiB -> allow up to 112 MiB)."""
    limit = need_bytes + (16 << 20)
    cap = 56 << 20
    try:
        phys = int(pltpu.get_tpu_info().vmem_capacity_bytes)
        cap = max(cap, min(phys - (8 << 20), 112 << 20))
    except Exception:
        pass
    return int(min(max(limit, 32 << 20), cap))


def transformer_decoder_layer_post_batched(tgt, memory, memory_global, params, *, nhead,
                                           pos=None, query_pos=None,
                                           fast_math=False, batch_block=None):
    """Batch-major entry point (preferred; no layout transposes).

    tgt: (N, L, E), memory/memory_global: (N, S, E). Returns (out (N,L,E), ws (N,L,S)).
    """
    del memory_global                          # unused by forward_post of the reference module
    N, L, E = tgt.shape
    S = memory.shape[1]
    dff = params["w1"].shape[0]
    assert E % nhead == 0
    if query_pos is None:
        query_pos = jnp.zeros_like(tgt)
    if pos is None:
        pos = jnp.zeros_like(memory)

    f32 = jnp.float32
    cdt = jnp.bfloat16 if fast_math else f32   # MXU weight dtype
    adt = jnp.bfloat16 if fast_math else f32   # streamed activation dtype (halves DMA on fast path)

    # pad memory length to a multiple of 128 so scores / ws stores are lane-dense
    S_pad = max(128, ((S + 127) // 128) * 128)
    if S_pad != S:
        memory = jnp.pad(memory, ((0, 0), (0, S_pad - S), (0, 0)))
        pos = jnp.pad(pos, ((0, 0), (0, S_pad - S), (0, 0)))

    if batch_block is None:
        # TODO(synk): sweep max_rows up to ~1024 on v5e/v6e (128 MiB VMEM) at production sizes.
        batch_block = _pick_batch_block(N, L)
    assert N % batch_block == 0
    grid = (N // batch_block,)
    BL, BS = batch_block * L, batch_block * S_pad

    # flatten (batch, seq) so per-row ops see tall 2-D operands
    tgt2 = tgt.reshape(N * L, E).astype(adt)
    qp2 = query_pos.reshape(N * L, E).astype(adt)
    mem2 = memory.reshape(N * S_pad, E).astype(adt)
    pos2 = pos.reshape(N * S_pad, E).astype(adt)

    row = lambda v: v.reshape(1, -1).astype(f32)
    # pre-transposed weights: kernel runs plain (M,K)@(K,N) matmuls, clean MXU feed path
    wqkv = jnp.transpose(params["ca_wi"].reshape(3, E, E), (0, 2, 1)).astype(cdt)   # Wq^T/Wk^T/Wv^T
    bqkv = params["ca_bi"].reshape(3, E).astype(f32)
    wo = params["ca_wo"].T.astype(cdt)                  # (E, E)
    w1 = params["w1"].T.astype(cdt)                     # (E, dff)
    w2 = params["w2"].T.astype(cdt)                     # (dff, E)
    # TODO(synk): fp8 weight path for fast_math on v7x (bf16 activations, f32 accumulation).

    # conservative VMEM need estimate (count everything double-buffered + headroom)
    act_b = 2 if fast_math else 4
    w_b = 2 if fast_math else 4
    need = (2 * ((2 * BL * E + 2 * BS * E) * act_b
                 + BL * E * 4 + batch_block * L * S_pad * 4)
            + 2 * (int(wqkv.size) + int(wo.size) + int(w1.size) + int(w2.size)) * w_b
            + 2 * (3 * E + 4 * E + dff + 6 * E) * 4)
    vmem_limit = _vmem_limit_bytes(need)

    kern = functools.partial(decoder_layer_kernel, nhead=nhead, s_real=S, fast=fast_math)

    def call(single_buffer_weights):
        def wspec(shape):
            zeros = lambda *_: (0,) * len(shape)
            if single_buffer_weights:
                # grid-invariant blocks: one VMEM buffer, no pointless double-buffering
                return pl.BlockSpec(shape, zeros, pipeline_mode=pl.Buffered(1))
            return pl.BlockSpec(shape, zeros)

        grid_spec = pltpu.PrefetchScalarGridSpec(
            num_scalar_prefetch=0,
            grid=grid,
            in_specs=[
                pl.BlockSpec((BL, E), lambda b: (b, 0)),        # tgt       (flattened)
                pl.BlockSpec((BS, E), lambda b: (b, 0)),        # memory    (flattened, padded)
                pl.BlockSpec((BL, E), lambda b: (b, 0)),        # query_pos
                pl.BlockSpec((BS, E), lambda b: (b, 0)),        # pos
                wspec((3, E, E)),                               # cross-attn in_proj weight (T)
                wspec((3, E)),                                  # cross-attn in_proj bias
                wspec((E, E)),                                  # cross-attn out_proj weight (T)
                wspec((1, E)),                                  # cross-attn out_proj bias
                wspec((E, dff)),                                # linear1 weight (T)
                wspec((1, dff)),                                # linear1 bias
                wspec((dff, E)),                                # linear2 weight (T)
                wspec((1, E)),                                  # linear2 bias
                wspec((1, E)), wspec((1, E)),                   # norm1 gamma/beta
                wspec((1, E)), wspec((1, E)),                   # norm2 gamma/beta
                wspec((1, E)), wspec((1, E)),                   # norm3 gamma/beta
            ],
            out_specs=(
                pl.BlockSpec((BL, E), lambda b: (b, 0)),                     # out (flattened)
                pl.BlockSpec((batch_block, L, S_pad), lambda b: (b, 0, 0)),  # ws (lane-dense)
            ),
        )
        return pl.pallas_call(
            kern,
            grid_spec=grid_spec,
            out_shape=(
                jax.ShapeDtypeStruct((N * L, E), f32),
                jax.ShapeDtypeStruct((N, L, S_pad), f32),
            ),
            compiler_params=pltpu.CompilerParams(
                dimension_semantics=("parallel",),
                vmem_limit_bytes=vmem_limit,
            ),
        )(tgt2, mem2, qp2, pos2,
          wqkv, bqkv, wo, row(params["ca_bo"]),
          w1, row(params["b1"]), w2, row(params["b2"]),
          row(params["g1"]), row(params["be1"]),
          row(params["g2"]), row(params["be2"]),
          row(params["g3"]), row(params["be3"]))

    try:
        out2, ws = call(True)
    except Exception:
        # Fallback if this JAX build rejects pl.Buffered(1) single-buffering of invariant blocks.
        out2, ws = call(False)

    return out2.reshape(N, L, E), ws[:, :, :S]


def transformer_decoder_layer_post(tgt, memory, memory_global, params, *, nhead,
                                   pos=None, query_pos=None, fast_math=False):
    """PyTorch seq-first layout compat: tgt (L,N,E), memory (S,N,E). Returns ((L,N,E), (N,L,S))."""
    to_b = lambda v: None if v is None else jnp.transpose(v, (1, 0, 2))
    out_b, ws = transformer_decoder_layer_post_batched(
        to_b(tgt), to_b(memory), to_b(memory_global), params, nhead=nhead,
        pos=to_b(pos), query_pos=to_b(query_pos), fast_math=fast_math)
    return jnp.transpose(out_b, (1, 0, 2)), ws


# ---------------- pure-JAX reference (mirrors torch forward_post, eval mode; batch-major) --------
def reference_forward(tgt, memory, query_pos, pos, p, nhead):
    N, L, E = tgt.shape
    S = memory.shape[1]
    H = nhead
    Dh = E // H

    def ln(x, g, b):
        mu = x.mean(-1, keepdims=True)
        var = ((x - mu) ** 2).mean(-1, keepdims=True)
        return (x - mu) / jnp.sqrt(var + 1e-5) * g + b

    Wi, bi, Wo, bo = p["ca_wi"], p["ca_bi"], p["ca_wo"], p["ca_bo"]
    t1 = ln(tgt, p["g1"], p["be1"])
    q = (t1 + query_pos) @ Wi[:E].T + bi[:E]
    k = (memory + pos) @ Wi[E:2 * E].T + bi[E:2 * E]
    v = memory @ Wi[2 * E:].T + bi[2 * E:]
    qh = q.reshape(N, L, H, Dh).transpose(0, 2, 1, 3)
    kh = k.reshape(N, S, H, Dh).transpose(0, 2, 1, 3)
    vh = v.reshape(N, S, H, Dh).transpose(0, 2, 1, 3)
    scores = (qh * (Dh ** -0.5)) @ kh.transpose(0, 1, 3, 2)
    pw = jax.nn.softmax(scores, axis=-1)                     # (N, H, L, S)
    ctx = (pw @ vh).transpose(0, 2, 1, 3).reshape(N, L, E)
    attn = ctx @ Wo.T + bo
    ws = pw.mean(axis=1)                                     # averaged over heads
    t2 = ln(t1 + attn, p["g2"], p["be2"])
    ff = jax.nn.relu(t2 @ p["w1"].T + p["b1"]) @ p["w2"].T + p["b2"]
    out = ln(t2 + ff, p["g3"], p["be3"])
    return out, ws


def init_params(key, d_model, dff):
    ks = jax.random.split(key, 16)
    s = 0.1
    f32 = jnp.float32
    return {
        # self-attn params exist in the module but its output is dead in forward_post;
        # created for shape-faithfulness only (not passed to the kernel).
        "sa_wi": jax.random.normal(ks[0], (3 * d_model, d_model), f32) * s,
        "sa_bi": jax.random.normal(ks[1], (3 * d_model,), f32) * s,
        "sa_wo": jax.random.normal(ks[2], (d_model, d_model), f32) * s,
        "sa_bo": jax.random.normal(ks[3], (d_model,), f32) * s,
        "ca_wi": jax.random.normal(ks[4], (3 * d_model, d_model), f32) * s,
        "ca_bi": jax.random.normal(ks[5], (3 * d_model,), f32) * s,
        "ca_wo": jax.random.normal(ks[6], (d_model, d_model), f32) * s,
        "ca_bo": jax.random.normal(ks[7], (d_model,), f32) * s,
        "w1": jax.random.normal(ks[8], (dff, d_model), f32) * s,
        "b1": jax.random.normal(ks[9], (dff,), f32) * s,
        "w2": jax.random.normal(ks[10], (d_model, dff), f32) * s,
        "b2": jax.random.normal(ks[11], (d_model,), f32) * s,
        "g1": 1.0 + 0.1 * jax.random.normal(ks[12], (d_model,), f32),
        "be1": 0.1 * jax.random.normal(ks[13], (d_model,), f32),
        "g2": 1.0 + 0.1 * jax.random.normal(ks[14], (d_model,), f32),
        "be2": 0.1 * jax.random.normal(ks[15], (d_model,), f32),
        "g3": jnp.ones((d_model,), f32),
        "be3": jnp.zeros((d_model,), f32),
    }


if __name__ == "__main__":
    N, L, S, E = 2, 8, 8, 32          # batch, tgt len, memory len, d_model
    nhead, dff = 4, 64

    key = jax.random.PRNGKey(0)
    k_tgt, k_mem, k_memg, k_pos, k_qpos, k_par = jax.random.split(key, 6)
    # batch-major inputs (N, L, E) / (N, S, E): preferred entry point, no wrapper transposes
    tgt = jax.random.normal(k_tgt, (N, L, E), jnp.float32)
    memory = jax.random.normal(k_mem, (N, S, E), jnp.float32)
    memory_global = jax.random.normal(k_memg, (N, S, E), jnp.float32)   # unused in forward_post
    pos = jax.random.normal(k_pos, (N, S, E), jnp.float32)
    query_pos = jax.random.normal(k_qpos, (N, L, E), jnp.float32)
    params = init_params(k_par, E, dff)

    # exact (fp32) path — grid has 2 steps (one batch element per step -> megacore-shardable)
    out, ws = transformer_decoder_layer_post_batched(
        tgt, memory, memory_global, params, nhead=nhead,
        pos=pos, query_pos=query_pos, fast_math=False)
    out = jax.block_until_ready(out)
    ws = jax.block_until_ready(ws)

    out_ref, ws_ref = reference_forward(tgt, memory, query_pos, pos, params, nhead)
    assert out.shape == (N, L, E) and ws.shape == (N, L, S)
    np.testing.assert_allclose(np.asarray(out), np.asarray(out_ref), rtol=1e-4, atol=1e-5)
    np.testing.assert_allclose(np.asarray(ws), np.asarray(ws_ref), rtol=1e-4, atol=1e-5)

    # fast path: bf16 streamed activations + bf16 MXU inputs + approx-EUP reciprocal
    out_f, ws_f = transformer_decoder_layer_post_batched(
        tgt, memory, memory_global, params, nhead=nhead,
        pos=pos, query_pos=query_pos, fast_math=True)
    out_f = jax.block_until_ready(out_f)
    ws_f = jax.block_until_ready(ws_f)
    assert float(jnp.max(jnp.abs(out_f - out_ref))) < 1e-1
    assert float(jnp.max(jnp.abs(ws_f - ws_ref))) < 5e-2

    print("KERNEL_OK")
</pallas_src>

<mosaic_0001>
module attributes {stable_mosaic.version = 11 : i64} {
  func.func @decoder_layer_kernel(%arg0: i32, %arg1: memref<8x32xf32, #tpu.memory_space<vmem>>, %arg2: memref<128x32xf32, #tpu.memory_space<vmem>>, %arg3: memref<8x32xf32, #tpu.memory_space<vmem>>, %arg4: memref<128x32xf32, #tpu.memory_space<vmem>>, %arg5: memref<3x32x32xf32, #tpu.memory_space<vmem>>, %arg6: memref<3x32xf32, #tpu.memory_space<vmem>>, %arg7: memref<32x32xf32, #tpu.memory_space<vmem>>, %arg8: memref<1x32xf32, #tpu.memory_space<vmem>>, %arg9: memref<32x64xf32, #tpu.memory_space<vmem>>, %arg10: memref<1x64xf32, #tpu.memory_space<vmem>>, %arg11: memref<64x32xf32, #tpu.memory_space<vmem>>, %arg12: memref<1x32xf32, #tpu.memory_space<vmem>>, %arg13: memref<1x32xf32, #tpu.memory_space<vmem>>, %arg14: memref<1x32xf32, #tpu.memory_space<vmem>>, %arg15: memref<1x32xf32, #tpu.memory_space<vmem>>, %arg16: memref<1x32xf32, #tpu.memory_space<vmem>>, %arg17: memref<1x32xf32, #tpu.memory_space<vmem>>, %arg18: memref<1x32xf32, #tpu.memory_space<vmem>>, %arg19: memref<8x32xf32, #tpu.memory_space<vmem>>, %arg20: memref<1x8x128xf32, #tpu.memory_space<vmem>>) attributes {dimension_semantics = [#tpu.dimension_semantics<parallel>], iteration_bounds = array<i64: 2>, scalar_prefetch = 0 : i64, scratch_operands = 0 : i64, tpu.core_type = #tpu.core_type<tc>, window_params = [{transform_indices = @transform_0, window_bounds = array<i64: 8, 32>}, {transform_indices = @transform_1, window_bounds = array<i64: 128, 32>}, {transform_indices = @transform_2, window_bounds = array<i64: 8, 32>}, {transform_indices = @transform_3, window_bounds = array<i64: 128, 32>}, {pipeline_mode = #tpu.pipeline_mode<synchronous>, transform_indices = @transform_4, window_bounds = array<i64: 3, 32, 32>}, {pipeline_mode = #tpu.pipeline_mode<synchronous>, transform_indices = @transform_5, window_bounds = array<i64: 3, 32>}, {pipeline_mode = #tpu.pipeline_mode<synchronous>, transform_indices = @transform_6, window_bounds = array<i64: 32, 32>}, {pipeline_mode = #tpu.pipeline_mode<synchronous>, transform_indices = @transform_7, window_bounds = array<i64: 1, 32>}, {pipeline_mode = #tpu.pipeline_mode<synchronous>, transform_indices = @transform_8, window_bounds = array<i64: 32, 64>}, {pipeline_mode = #tpu.pipeline_mode<synchronous>, transform_indices = @transform_9, window_bounds = array<i64: 1, 64>}, {pipeline_mode = #tpu.pipeline_mode<synchronous>, transform_indices = @transform_10, window_bounds = array<i64: 64, 32>}, {pipeline_mode = #tpu.pipeline_mode<synchronous>, transform_indices = @transform_11, window_bounds = array<i64: 1, 32>}, {pipeline_mode = #tpu.pipeline_mode<synchronous>, transform_indices = @transform_12, window_bounds = array<i64: 1, 32>}, {pipeline_mode = #tpu.pipeline_mode<synchronous>, transform_indices = @transform_13, window_bounds = array<i64: 1, 32>}, {pipeline_mode = #tpu.pipeline_mode<synchronous>, transform_indices = @transform_14, window_bounds = array<i64: 1, 32>}, {pipeline_mode = #tpu.pipeline_mode<synchronous>, transform_indices = @transform_15, window_bounds = array<i64: 1, 32>}, {pipeline_mode = #tpu.pipeline_mode<synchronous>, transform_indices = @transform_16, window_bounds = array<i64: 1, 32>}, {pipeline_mode = #tpu.pipeline_mode<synchronous>, transform_indices = @transform_17, window_bounds = array<i64: 1, 32>}, {transform_indices = @transform_18, window_bounds = array<i64: 8, 32>}, {transform_indices = @transform_19, window_bounds = array<i64: 1, 8, 128>}]} {
    %c0 = arith.constant 0 : index
    %c0_0 = arith.constant 0 : index
    %0 = vector.load %arg1[%c0, %c0_0] : memref<8x32xf32, #tpu.memory_space<vmem>>, vector<8x32xf32>
    %c0_1 = arith.constant 0 : index
    %c0_2 = arith.constant 0 : index
    %1 = vector.load %arg3[%c0_1, %c0_2] : memref<8x32xf32, #tpu.memory_space<vmem>>, vector<8x32xf32>
    %c0_3 = arith.constant 0 : index
    %c0_4 = arith.constant 0 : index
    %2 = vector.load %arg2[%c0_3, %c0_4] : memref<128x32xf32, #tpu.memory_space<vmem>>, vector<128x32xf32>
    %c0_5 = arith.constant 0 : index
    %c0_6 = arith.constant 0 : index
    %3 = vector.load %arg4[%c0_5, %c0_6] : memref<128x32xf32, #tpu.memory_space<vmem>>, vector<128x32xf32>
    %c0_7 = arith.constant 0 : index
    %c0_8 = arith.constant 0 : index
    %4 = vector.load %arg13[%c0_7, %c0_8] : memref<1x32xf32, #tpu.memory_space<vmem>>, vector<1x32xf32>
    %c0_9 = arith.constant 0 : index
    %c0_10 = arith.constant 0 : index
    %5 = vector.load %arg14[%c0_9, %c0_10] : memref<1x32xf32, #tpu.memory_space<vmem>>, vector<1x32xf32>
    %cst = arith.constant dense<0.000000e+00> : vector<8xf32>
    %6 = vector.multi_reduction <add>, %0, %cst [1] : vector<8x32xf32> to vector<8xf32>
    %7 = vector.shape_cast %6 : vector<8xf32> to vector<8x1xf32>
    %cst_11 = arith.constant 3.200000e+01 : f32
    %8 = vector.broadcast %cst_11 : f32 to vector<8x1xf32>
    %9 = arith.divf %7, %8 : vector<8x1xf32>
    %10 = vector.broadcast %9 : vector<8x1xf32> to vector<8x32xf32>
    %11 = arith.subf %0, %10 : vector<8x32xf32>
    %12 = arith.mulf %11, %11 : vector<8x32xf32>
    %cst_12 = arith.constant dense<0.000000e+00> : vector<8xf32>
    %13 = vector.multi_reduction <add>, %12, %cst_12 [1] : vector<8x32xf32> to vector<8xf32>
    %14 = vector.shape_cast %13 : vector<8xf32> to vector<8x1xf32>
    %cst_13 = arith.constant 3.200000e+01 : f32
    %15 = vector.broadcast %cst_13 : f32 to vector<8x1xf32>
    %16 = arith.divf %14, %15 : vector<8x1xf32>
    %cst_14 = arith.constant 9.99999974E-6 : f32
    %17 = vector.broadcast %cst_14 : f32 to vector<8x1xf32>
    %18 = arith.addf %16, %17 : vector<8x1xf32>
    %19 = math.rsqrt %18 : vector<8x1xf32>
    %20 = vector.broadcast %19 : vector<8x1xf32> to vector<8x32xf32>
    %21 = arith.mulf %11, %20 : vector<8x32xf32>
    %22 = vector.broadcast %4 : vector<1x32xf32> to vector<8x32xf32>
    %23 = arith.mulf %21, %22 : vector<8x32xf32>
    %24 = vector.broadcast %5 : vector<1x32xf32> to vector<8x32xf32>
    %25 = arith.addf %23, %24 : vector<8x32xf32>
    %c0_15 = arith.constant 0 : index
    %c0_16 = arith.constant 0 : index
    %26 = vector.load %arg6[%c0_15, %c0_16] : memref<3x32xf32, #tpu.memory_space<vmem>>, vector<3x32xf32>
    %27 = arith.addf %25, %1 : vector<8x32xf32>
    %28 = arith.addf %2, %3 : vector<128x32xf32>
    %c0_17 = arith.constant 0 : index
    %c0_18 = arith.constant 0 : index
    %c0_19 = arith.constant 0 : index
    %29 = vector.load %arg5[%c0_17, %c0_18, %c0_19] : memref<3x32x32xf32, #tpu.memory_space<vmem>>, vector<1x32x32xf32>
    %30 = vector.shape_cast %29 : vector<1x32x32xf32> to vector<32x32xf32>
    %cst_20 = arith.constant dense<0.000000e+00> : vector<8x32xf32>
    %31 = tpu.matmul %27, %30, %cst_20 {dimension_numbers = #tpu.dot_dimension_numbers<[1], [0], [0], [1], [0, 0, 1, 1], [], []>} : vector<8x32xf32>, vector<32x32xf32>, vector<8x32xf32> -> vector<8x32xf32>
    %32 = vector.extract_strided_slice %26 {offsets = [0, 0], sizes = [1, 32], strides = [1, 1]} : vector<3x32xf32> to vector<1x32xf32>
    %33 = vector.broadcast %32 : vector<1x32xf32> to vector<8x32xf32>
    %34 = arith.addf %31, %33 : vector<8x32xf32>
    %cst_21 = arith.constant 0.353553385 : f32
    %35 = vector.broadcast %cst_21 : f32 to vector<8x32xf32>
    %36 = arith.mulf %34, %35 : vector<8x32xf32>
    %c1 = arith.constant 1 : index
    %c0_22 = arith.constant 0 : index
    %c0_23 = arith.constant 0 : index
    %37 = vector.load %arg5[%c1, %c0_22, %c0_23] : memref<3x32x32xf32, #tpu.memory_space<vmem>>, vector<1x32x32xf32>
    %38 = vector.shape_cast %37 : vector<1x32x32xf32> to vector<32x32xf32>
    %cst_24 = arith.constant dense<0.000000e+00> : vector<128x32xf32>
    %39 = tpu.matmul %28, %38, %cst_24 {dimension_numbers = #tpu.dot_dimension_numbers<[1], [0], [0], [1], [0, 0, 1, 1], [], []>} : vector<128x32xf32>, vector<32x32xf32>, vector<128x32xf32> -> vector<128x32xf32>
    %40 = vector.extract_strided_slice %26 {offsets = [1, 0], sizes = [1, 32], strides = [1, 1]} : vector<3x32xf32> to vector<1x32xf32>
    %41 = vector.broadcast %40 : vector<1x32xf32> to vector<128x32xf32>
    %42 = arith.addf %39, %41 : vector<128x32xf32>
    %c2 = arith.constant 2 : index
    %c0_25 = arith.constant 0 : index
    %c0_26 = arith.constant 0 : index
    %43 = vector.load %arg5[%c2, %c0_25, %c0_26] : memref<3x32x32xf32, #tpu.memory_space<vmem>>, vector<1x32x32xf32>
    %44 = vector.shape_cast %43 : vector<1x32x32xf32> to vector<32x32xf32>
    %cst_27 = arith.constant dense<0.000000e+00> : vector<128x32xf32>
    %45 = tpu.matmul %2, %44, %cst_27 {dimension_numbers = #tpu.dot_dimension_numbers<[1], [0], [0], [1], [0, 0, 1, 1], [], []>} : vector<128x32xf32>, vector<32x32xf32>, vector<128x32xf32> -> vector<128x32xf32>
    %46 = vector.extract_strided_slice %26 {offsets = [2, 0], sizes = [1, 32], strides = [1, 1]} : vector<3x32xf32> to vector<1x32xf32>
    %47 = vector.broadcast %46 : vector<1x32xf32> to vector<128x32xf32>
    %48 = arith.addf %45, %47 : vector<128x32xf32>
    %49 = tpu.iota {dimensions = array<i32: 2>} : vector<1x1x128xi32>
    %c8_i32 = arith.constant 8 : i32
    %50 = vector.broadcast %c8_i32 : i32 to vector<1x1x128xi32>
    %51 = arith.cmpi slt, %49, %50 : vector<1x1x128xi32>
    %52 = arith.extui %51 : vector<1x1x128xi1> to vector<1x1x128xi32>
    %53 = arith.sitofp %52 : vector<1x1x128xi32> to vector<1x1x128xf32>
    %54 = vector.extract_strided_slice %36 {offsets = [0, 0], sizes = [8, 8], strides = [1, 1]} : vector<8x32xf32> to vector<8x8xf32>
    %55 = vector.shape_cast %54 : vector<8x8xf32> to vector<1x8x8xf32>
    %56 = vector.extract_strided_slice %42 {offsets = [0, 0], sizes = [128, 8], strides = [1, 1]} : vector<128x32xf32> to vector<128x8xf32>
    %57 = vector.shape_cast %56 : vector<128x8xf32> to vector<1x128x8xf32>
    %58 = vector.extract_strided_slice %48 {offsets = [0, 0], sizes = [128, 8], strides = [1, 1]} : vector<128x32xf32> to vector<128x8xf32>
    %59 = vector.shape_cast %58 : vector<128x8xf32> to vector<1x128x8xf32>
    "tpu.trace_start"() <{level = 10 : i32, message = "bld,bsd->bls"}> : () -> ()
    %cst_28 = arith.constant dense<0.000000e+00> : vector<1x8x128xf32>
    %60 = tpu.matmul %55, %57, %cst_28 {dimension_numbers = #tpu.dot_dimension_numbers<[2], [2], [1], [1], [0, 0, 0, 1, 1, 1], [0], [0]>} : vector<1x8x8xf32>, vector<1x128x8xf32>, vector<1x8x128xf32> -> vector<1x8x128xf32>
    "tpu.trace_stop"() : () -> ()
    %cst_29 = arith.constant dense<0xFF800000> : vector<1x8xf32>
    %61 = vector.multi_reduction <maximumf>, %60, %cst_29 [2] : vector<1x8x128xf32> to vector<1x8xf32>
    %62 = vector.shape_cast %61 : vector<1x8xf32> to vector<1x8x1xf32>
    %63 = vector.broadcast %62 : vector<1x8x1xf32> to vector<1x8x128xf32>
    %64 = arith.subf %60, %63 : vector<1x8x128xf32>
    %65 = math.exp %64 : vector<1x8x128xf32>
    %66 = vector.broadcast %53 : vector<1x1x128xf32> to vector<1x8x128xf32>
    %67 = arith.mulf %65, %66 : vector<1x8x128xf32>
    %cst_30 = arith.constant dense<0.000000e+00> : vector<1x8xf32>
    %68 = vector.multi_reduction <add>, %67, %cst_30 [2] : vector<1x8x128xf32> to vector<1x8xf32>
    %69 = vector.shape_cast %68 : vector<1x8xf32> to vector<1x8x1xf32>
    %70 = vector.broadcast %69 : vector<1x8x1xf32> to vector<1x8x128xf32>
    %71 = arith.divf %67, %70 : vector<1x8x128xf32>
    "tpu.trace_start"() <{level = 10 : i32, message = "bls,bsd->bld"}> : () -> ()
    %cst_31 = arith.constant dense<0.000000e+00> : vector<1x8x8xf32>
    %72 = tpu.matmul %71, %59, %cst_31 {dimension_numbers = #tpu.dot_dimension_numbers<[2], [1], [1], [2], [0, 0, 0, 1, 1, 2], [0], [0]>} : vector<1x8x128xf32>, vector<1x128x8xf32>, vector<1x8x8xf32> -> vector<1x8x8xf32>
    "tpu.trace_stop"() : () -> ()
    %73 = vector.shape_cast %72 : vector<1x8x8xf32> to vector<8x8xf32>
    %74 = vector.extract_strided_slice %36 {offsets = [0, 8], sizes = [8, 8], strides = [1, 1]} : vector<8x32xf32> to vector<8x8xf32>
    %75 = vector.shape_cast %74 : vector<8x8xf32> to vector<1x8x8xf32>
    %76 = vector.extract_strided_slice %42 {offsets = [0, 8], sizes = [128, 8], strides = [1, 1]} : vector<128x32xf32> to vector<128x8xf32>
    %77 = vector.shape_cast %76 : vector<128x8xf32> to vector<1x128x8xf32>
    %78 = vector.extract_strided_slice %48 {offsets = [0, 8], sizes = [128, 8], strides = [1, 1]} : vector<128x32xf32> to vector<128x8xf32>
    %79 = vector.shape_cast %78 : vector<128x8xf32> to vector<1x128x8xf32>
    "tpu.trace_start"() <{level = 10 : i32, message = "bld,bsd->bls"}> : () -> ()
    %cst_32 = arith.constant dense<0.000000e+00> : vector<1x8x128xf32>
    %80 = tpu.matmul %75, %77, %cst_32 {dimension_numbers = #tpu.dot_dimension_numbers<[2], [2], [1], [1], [0, 0, 0, 1, 1, 1], [0], [0]>} : vector<1x8x8xf32>, vector<1x128x8xf32>, vector<1x8x128xf32> -> vector<1x8x128xf32>
    "tpu.trace_stop"() : () -> ()
    %cst_33 = arith.constant dense<0xFF800000> : vector<1x8xf32>
    %81 = vector.multi_reduction <maximumf>, %80, %cst_33 [2] : vector<1x8x128xf32> to vector<1x8xf32>
    %82 = vector.shape_cast %81 : vector<1x8xf32> to vector<1x8x1xf32>
    %83 = vector.broadcast %82 : vector<1x8x1xf32> to vector<1x8x128xf32>
    %84 = arith.subf %80, %83 : vector<1x8x128xf32>
    %85 = math.exp %84 : vector<1x8x128xf32>
    %86 = vector.broadcast %53 : vector<1x1x128xf32> to vector<1x8x128xf32>
    %87 = arith.mulf %85, %86 : vector<1x8x128xf32>
    %cst_34 = arith.constant dense<0.000000e+00> : vector<1x8xf32>
    %88 = vector.multi_reduction <add>, %87, %cst_34 [2] : vector<1x8x128xf32> to vector<1x8xf32>
    %89 = vector.shape_cast %88 : vector<1x8xf32> to vector<1x8x1xf32>
    %90 = vector.broadcast %89 : vector<1x8x1xf32> to vector<1x8x128xf32>
    %91 = arith.divf %87, %90 : vector<1x8x128xf32>
    %92 = arith.addf %71, %91 : vector<1x8x128xf32>
    "tpu.trace_start"() <{level = 10 : i32, message = "bls,bsd->bld"}> : () -> ()
    %cst_35 = arith.constant dense<0.000000e+00> : vector<1x8x8xf32>
    %93 = tpu.matmul %91, %79, %cst_35 {dimension_numbers = #tpu.dot_dimension_numbers<[2], [1], [1], [2], [0, 0, 0, 1, 1, 2], [0], [0]>} : vector<1x8x128xf32>, vector<1x128x8xf32>, vector<1x8x8xf32> -> vector<1x8x8xf32>
    "tpu.trace_stop"() : () -> ()
    %94 = vector.shape_cast %93 : vector<1x8x8xf32> to vector<8x8xf32>
    %95 = vector.extract_strided_slice %36 {offsets = [0, 16], sizes = [8, 8], strides = [1, 1]} : vector<8x32xf32> to vector<8x8xf32>
    %96 = vector.shape_cast %95 : vector<8x8xf32> to vector<1x8x8xf32>
    %97 = vector.extract_strided_slice %42 {offsets = [0, 16], sizes = [128, 8], strides = [1, 1]} : vector<128x32xf32> to vector<128x8xf32>
    %98 = vector.shape_cast %97 : vector<128x8xf32> to vector<1x128x8xf32>
    %99 = vector.extract_strided_slice %48 {offsets = [0, 16], sizes = [128, 8], strides = [1, 1]} : vector<128x32xf32> to vector<128x8xf32>
    %100 = vector.shape_cast %99 : vector<128x8xf32> to vector<1x128x8xf32>
    "tpu.trace_start"() <{level = 10 : i32, message = "bld,bsd->bls"}> : () -> ()
    %cst_36 = arith.constant dense<0.000000e+00> : vector<1x8x128xf32>
    %101 = tpu.matmul %96, %98, %cst_36 {dimension_numbers = #tpu.dot_dimension_numbers<[2], [2], [1], [1], [0, 0, 0, 1, 1, 1], [0], [0]>} : vector<1x8x8xf32>, vector<1x128x8xf32>, vector<1x8x128xf32> -> vector<1x8x128xf32>
    "tpu.trace_stop"() : () -> ()
    %cst_37 = arith.constant dense<0xFF800000> : vector<1x8xf32>
    %102 = vector.multi_reduction <maximumf>, %101, %cst_37 [2] : vector<1x8x128xf32> to vector<1x8xf32>
    %103 = vector.shape_cast %102 : vector<1x8xf32> to vector<1x8x1xf32>
    %104 = vector.broadcast %103 : vector<1x8x1xf32> to vector<1x8x128xf32>
    %105 = arith.subf %101, %104 : vector<1x8x128xf32>
    %106 = math.exp %105 : vector<1x8x128xf32>
    %107 = vector.broadcast %53 : vector<1x1x128xf32> to vector<1x8x128xf32>
    %108 = arith.mulf %106, %107 : vector<1x8x128xf32>
    %cst_38 = arith.constant dense<0.000000e+00> : vector<1x8xf32>
    %109 = vector.multi_reduction <add>, %108, %cst_38 [2] : vector<1x8x128xf32> to vector<1x8xf32>
    %110 = vector.shape_cast %109 : vector<1x8xf32> to vector<1x8x1xf32>
    %111 = vector.broadcast %110 : vector<1x8x1xf32> to vector<1x8x128xf32>
    %112 = arith.divf %108, %111 : vector<1x8x128xf32>
    %113 = arith.addf %92, %112 : vector<1x8x128xf32>
    "tpu.trace_start"() <{level = 10 : i32, message = "bls,bsd->bld"}> : () -> ()
    %cst_39 = arith.constant dense<0.000000e+00> : vector<1x8x8xf32>
    %114 = tpu.matmul %112, %100, %cst_39 {dimension_numbers = #tpu.dot_dimension_numbers<[2], [1], [1], [2], [0, 0, 0, 1, 1, 2], [0], [0]>} : vector<1x8x128xf32>, vector<1x128x8xf32>, vector<1x8x8xf32> -> vector<1x8x8xf32>
    "tpu.trace_stop"() : () -> ()
    %115 = vector.shape_cast %114 : vector<1x8x8xf32> to vector<8x8xf32>
    %116 = vector.extract_strided_slice %36 {offsets = [0, 24], sizes = [8, 8], strides = [1, 1]} : vector<8x32xf32> to vector<8x8xf32>
    %117 = vector.shape_cast %116 : vector<8x8xf32> to vector<1x8x8xf32>
    %118 = vector.extract_strided_slice %42 {offsets = [0, 24], sizes = [128, 8], strides = [1, 1]} : vector<128x32xf32> to vector<128x8xf32>
    %119 = vector.shape_cast %118 : vector<128x8xf32> to vector<1x128x8xf32>
    %120 = vector.extract_strided_slice %48 {offsets = [0, 24], sizes = [128, 8], strides = [1, 1]} : vector<128x32xf32> to vector<128x8xf32>
    %121 = vector.shape_cast %120 : vector<128x8xf32> to vector<1x128x8xf32>
    "tpu.trace_start"() <{level = 10 : i32, message = "bld,bsd->bls"}> : () -> ()
    %cst_40 = arith.constant dense<0.000000e+00> : vector<1x8x128xf32>
    %122 = tpu.matmul %117, %119, %cst_40 {dimension_numbers = #tpu.dot_dimension_numbers<[2], [2], [1], [1], [0, 0, 0, 1, 1, 1], [0], [0]>} : vector<1x8x8xf32>, vector<1x128x8xf32>, vector<1x8x128xf32> -> vector<1x8x128xf32>
    "tpu.trace_stop"() : () -> ()
    %cst_41 = arith.constant dense<0xFF800000> : vector<1x8xf32>
    %123 = vector.multi_reduction <maximumf>, %122, %cst_41 [2] : vector<1x8x128xf32> to vector<1x8xf32>
    %124 = vector.shape_cast %123 : vector<1x8xf32> to vector<1x8x1xf32>
    %125 = vector.broadcast %124 : vector<1x8x1xf32> to vector<1x8x128xf32>
    %126 = arith.subf %122, %125 : vector<1x8x128xf32>
    %127 = math.exp %126 : vector<1x8x128xf32>
    %128 = vector.broadcast %53 : vector<1x1x128xf32> to vector<1x8x128xf32>
    %129 = arith.mulf %127, %128 : vector<1x8x128xf32>
    %cst_42 = arith.constant dense<0.000000e+00> : vector<1x8xf32>
    %130 = vector.multi_reduction <add>, %129, %cst_42 [2] : vector<1x8x128xf32> to vector<1x8xf32>
    %131 = vector.shape_cast %130 : vector<1x8xf32> to vector<1x8x1xf32>
    %132 = vector.broadcast %131 : vector<1x8x1xf32> to vector<1x8x128xf32>
    %133 = arith.divf %129, %132 : vector<1x8x128xf32>
    %134 = arith.addf %113, %133 : vector<1x8x128xf32>
    "tpu.trace_start"() <{level = 10 : i32, message = "bls,bsd->bld"}> : () -> ()
    %cst_43 = arith.constant dense<0.000000e+00> : vector<1x8x8xf32>
    %135 = tpu.matmul %133, %121, %cst_43 {dimension_numbers = #tpu.dot_dimension_numbers<[2], [1], [1], [2], [0, 0, 0, 1, 1, 2], [0], [0]>} : vector<1x8x128xf32>, vector<1x128x8xf32>, vector<1x8x8xf32> -> vector<1x8x8xf32>
    "tpu.trace_stop"() : () -> ()
    %136 = vector.shape_cast %135 : vector<1x8x8xf32> to vector<8x8xf32>
    %cst_44 = arith.constant 2.500000e-01 : f32
    %137 = vector.broadcast %cst_44 : f32 to vector<1x8x128xf32>
    %138 = arith.mulf %134, %137 : vector<1x8x128xf32>
    %c0_45 = arith.constant 0 : index
    %c0_46 = arith.constant 0 : index
    %c0_47 = arith.constant 0 : index
    %139 = vector.load %arg20[%c0_45, %c0_46, %c0_47] : memref<1x8x128xf32, #tpu.memory_space<vmem>>, vector<1x8x128xf32>
    tpu.vector_store %arg20[%c0_45, %c0_46, %c0_47], %138 {strides = array<i32>} : memref<1x8x128xf32, #tpu.memory_space<vmem>>, vector<1x8x128xf32>,
    %140 = tpu.concatenate %73, %94, %115, %136 in 1 : vector<8x8xf32>, vector<8x8xf32>, vector<8x8xf32>, vector<8x8xf32> -> vector<8x32xf32>
    %c0_48 = arith.constant 0 : index
    %c0_49 = arith.constant 0 : index
    %141 = vector.load %arg7[%c0_48, %c0_49] : memref<32x32xf32, #tpu.memory_space<vmem>>, vector<32x32xf32>
    %cst_50 = arith.constant dense<0.000000e+00> : vector<8x32xf32>
    %142 = tpu.matmul %140, %141, %cst_50 {dimension_numbers = #tpu.dot_dimension_numbers<[1], [0], [0], [1], [0, 0, 1, 1], [], []>} : vector<8x32xf32>, vector<32x32xf32>, vector<8x32xf32> -> vector<8x32xf32>
    %c0_51 = arith.constant 0 : index
    %c0_52 = arith.constant 0 : index
    %143 = vector.load %arg8[%c0_51, %c0_52] : memref<1x32xf32, #tpu.memory_space<vmem>>, vector<1x32xf32>
    %144 = vector.broadcast %143 : vector<1x32xf32> to vector<8x32xf32>
    %145 = arith.addf %142, %144 : vector<8x32xf32>
    %146 = arith.addf %25, %145 : vector<8x32xf32>
    %c0_53 = arith.constant 0 : index
    %c0_54 = arith.constant 0 : index
    %147 = vector.load %arg15[%c0_53, %c0_54] : memref<1x32xf32, #tpu.memory_space<vmem>>, vector<1x32xf32>
    %c0_55 = arith.constant 0 : index
    %c0_56 = arith.constant 0 : index
    %148 = vector.load %arg16[%c0_55, %c0_56] : memref<1x32xf32, #tpu.memory_space<vmem>>, vector<1x32xf32>
    %cst_57 = arith.constant dense<0.000000e+00> : vector<8xf32>
    %149 = vector.multi_reduction <add>, %146, %cst_57 [1] : vector<8x32xf32> to vector<8xf32>
    %150 = vector.shape_cast %149 : vector<8xf32> to vector<8x1xf32>
    %cst_58 = arith.constant 3.200000e+01 : f32
    %151 = vector.broadcast %cst_58 : f32 to vector<8x1xf32>
    %152 = arith.divf %150, %151 : vector<8x1xf32>
    %153 = vector.broadcast %152 : vector<8x1xf32> to vector<8x32xf32>
    %154 = arith.subf %146, %153 : vector<8x32xf32>
    %155 = arith.mulf %154, %154 : vector<8x32xf32>
    %cst_59 = arith.constant dense<0.000000e+00> : vector<8xf32>
    %156 = vector.multi_reduction <add>, %155, %cst_59 [1] : vector<8x32xf32> to vector<8xf32>
    %157 = vector.shape_cast %156 : vector<8xf32> to vector<8x1xf32>
    %cst_60 = arith.constant 3.200000e+01 : f32
    %158 = vector.broadcast %cst_60 : f32 to vector<8x1xf32>
    %159 = arith.divf %157, %158 : vector<8x1xf32>
    %cst_61 = arith.constant 9.99999974E-6 : f32
    %160 = vector.broadcast %cst_61 : f32 to vector<8x1xf32>
    %161 = arith.addf %159, %160 : vector<8x1xf32>
    %162 = math.rsqrt %161 : vector<8x1xf32>
    %163 = vector.broadcast %162 : vector<8x1xf32> to vector<8x32xf32>
    %164 = arith.mulf %154, %163 : vector<8x32xf32>
    %165 = vector.broadcast %147 : vector<1x32xf32> to vector<8x32xf32>
    %166 = arith.mulf %164, %165 : vector<8x32xf32>
    %167 = vector.broadcast %148 : vector<1x32xf32> to vector<8x32xf32>
    %168 = arith.addf %166, %167 : vector<8x32xf32>
    %c0_62 = arith.constant 0 : index
    %c0_63 = arith.constant 0 : index
    %169 = vector.load %arg9[%c0_62, %c0_63] : memref<32x64xf32, #tpu.memory_space<vmem>>, vector<32x64xf32>
    %cst_64 = arith.constant dense<0.000000e+00> : vector<8x64xf32>
    %170 = tpu.matmul %168, %169, %cst_64 {dimension_numbers = #tpu.dot_dimension_numbers<[1], [0], [0], [1], [0, 0, 1, 1], [], []>} : vector<8x32xf32>, vector<32x64xf32>, vector<8x64xf32> -> vector<8x64xf32>
    %c0_65 = arith.constant 0 : index
    %c0_66 = arith.constant 0 : index
    %171 = vector.load %arg10[%c0_65, %c0_66] : memref<1x64xf32, #tpu.memory_space<vmem>>, vector<1x64xf32>
    %172 = vector.broadcast %171 : vector<1x64xf32> to vector<8x64xf32>
    %173 = arith.addf %170, %172 : vector<8x64xf32>
    %cst_67 = arith.constant 0.000000e+00 : f32
    %174 = vector.broadcast %cst_67 : f32 to vector<8x64xf32>
    %175 = arith.maximumf %173, %174 : vector<8x64xf32>
    %c0_68 = arith.constant 0 : index
    %c0_69 = arith.constant 0 : index
    %176 = vector.load %arg11[%c0_68, %c0_69] : memref<64x32xf32, #tpu.memory_space<vmem>>, vector<64x32xf32>
    %cst_70 = arith.constant dense<0.000000e+00> : vector<8x32xf32>
    %177 = tpu.matmul %175, %176, %cst_70 {dimension_numbers = #tpu.dot_dimension_numbers<[1], [0], [0], [1], [0, 0, 1, 1], [], []>} : vector<8x64xf32>, vector<64x32xf32>, vector<8x32xf32> -> vector<8x32xf32>
    %c0_71 = arith.constant 0 : index
    %c0_72 = arith.constant 0 : index
    %178 = vector.load %arg12[%c0_71, %c0_72] : memref<1x32xf32, #tpu.memory_space<vmem>>, vector<1x32xf32>
    %179 = vector.broadcast %178 : vector<1x32xf32> to vector<8x32xf32>
    %180 = arith.addf %177, %179 : vector<8x32xf32>
    %181 = arith.addf %168, %180 : vector<8x32xf32>
    %c0_73 = arith.constant 0 : index
    %c0_74 = arith.constant 0 : index
    %182 = vector.load %arg17[%c0_73, %c0_74] : memref<1x32xf32, #tpu.memory_space<vmem>>, vector<1x32xf32>
    %c0_75 = arith.constant 0 : index
    %c0_76 = arith.constant 0 : index
    %183 = vector.load %arg18[%c0_75, %c0_76] : memref<1x32xf32, #tpu.memory_space<vmem>>, vector<1x32xf32>
    %cst_77 = arith.constant dense<0.000000e+00> : vector<8xf32>
    %184 = vector.multi_reduction <add>, %181, %cst_77 [1] : vector<8x32xf32> to vector<8xf32>
    %185 = vector.shape_cast %184 : vector<8xf32> to vector<8x1xf32>
    %cst_78 = arith.constant 3.200000e+01 : f32
    %186 = vector.broadcast %cst_78 : f32 to vector<8x1xf32>
    %187 = arith.divf %185, %186 : vector<8x1xf32>
    %188 = vector.broadcast %187 : vector<8x1xf32> to vector<8x32xf32>
    %189 = arith.subf %181, %188 : vector<8x32xf32>
    %190 = arith.mulf %189, %189 : vector<8x32xf32>
    %cst_79 = arith.constant dense<0.000000e+00> : vector<8xf32>
    %191 = vector.multi_reduction <add>, %190, %cst_79 [1] : vector<8x32xf32> to vector<8xf32>
    %192 = vector.shape_cast %191 : vector<8xf32> to vector<8x1xf32>
    %cst_80 = arith.constant 3.200000e+01 : f32
    %193 = vector.broadcast %cst_80 : f32 to vector<8x1xf32>
    %194 = arith.divf %192, %193 : vector<8x1xf32>
    %cst_81 = arith.constant 9.99999974E-6 : f32
    %195 = vector.broadcast %cst_81 : f32 to vector<8x1xf32>
    %196 = arith.addf %194, %195 : vector<8x1xf32>
    %197 = math.rsqrt %196 : vector<8x1xf32>
    %198 = vector.broadcast %197 : vector<8x1xf32> to vector<8x32xf32>
    %199 = arith.mulf %189, %198 : vector<8x32xf32>
    %200 = vector.broadcast %182 : vector<1x32xf32> to vector<8x32xf32>
    %201 = arith.mulf %199, %200 : vector<8x32xf32>
    %202 = vector.broadcast %183 : vector<1x32xf32> to vector<8x32xf32>
    %203 = arith.addf %201, %202 : vector<8x32xf32>
    %c0_82 = arith.constant 0 : index
    %c0_83 = arith.constant 0 : index
    %204 = vector.load %arg19[%c0_82, %c0_83] : memref<8x32xf32, #tpu.memory_space<vmem>>, vector<8x32xf32>
    tpu.vector_store %arg19[%c0_82, %c0_83], %203 {strides = array<i32>} : memref<8x32xf32, #tpu.memory_space<vmem>>, vector<8x32xf32>,
    return
  }
  func.func @transform_0(%arg0: i32) -> (i32, i32) {
    %c0_i32 = arith.constant 0 : i32
    %c0_i32_0 = arith.constant 0 : i32
    return %arg0, %c0_i32 : i32, i32
  }
  func.func @transform_1(%arg0: i32) -> (i32, i32) {
    %c0_i32 = arith.constant 0 : i32
    %c0_i32_0 = arith.constant 0 : i32
    return %arg0, %c0_i32 : i32, i32
  }
  func.func @transform_2(%arg0: i32) -> (i32, i32) {
    %c0_i32 = arith.constant 0 : i32
    %c0_i32_0 = arith.constant 0 : i32
    return %arg0, %c0_i32 : i32, i32
  }
  func.func @transform_3(%arg0: i32) -> (i32, i32) {
    %c0_i32 = arith.constant 0 : i32
    %c0_i32_0 = arith.constant 0 : i32
    return %arg0, %c0_i32 : i32, i32
  }
  func.func @transform_4(%arg0: i32) -> (i32, i32, i32) {
    %c0_i32 = arith.constant 0 : i32
    %c0_i32_0 = arith.constant 0 : i32
    %c0_i32_1 = arith.constant 0 : i32
    %c0_i32_2 = arith.constant 0 : i32
    return %c0_i32, %c0_i32_0, %c0_i32_1 : i32, i32, i32
  }
  func.func @transform_5(%arg0: i32) -> (i32, i32) {
    %c0_i32 = arith.constant 0 : i32
    %c0_i32_0 = arith.constant 0 : i32
    %c0_i32_1 = arith.constant 0 : i32
    return %c0_i32, %c0_i32_0 : i32, i32
  }
  func.func @transform_6(%arg0: i32) -> (i32, i32) {
    %c0_i32 = arith.constant 0 : i32
    %c0_i32_0 = arith.constant 0 : i32
    %c0_i32_1 = arith.constant 0 : i32
    return %c0_i32, %c0_i32_0 : i32, i32
  }
  func.func @transform_7(%arg0: i32) -> (i32, i32) {
    %c0_i32 = arith.constant 0 : i32
    %c0_i32_0 = arith.constant 0 : i32
    %c0_i32_1 = arith.constant 0 : i32
    return %c0_i32, %c0_i32_0 : i32, i32
  }
  func.func @transform_8(%arg0: i32) -> (i32, i32) {
    %c0_i32 = arith.constant 0 : i32
    %c0_i32_0 = arith.constant 0 : i32
    %c0_i32_1 = arith.constant 0 : i32
    return %c0_i32, %c0_i32_0 : i32, i32
  }
  func.func @transform_9(%arg0: i32) -> (i32, i32) {
    %c0_i32 = arith.constant 0 : i32
    %c0_i32_0 = arith.constant 0 : i32
    %c0_i32_1 = arith.constant 0 : i32
    return %c0_i32, %c0_i32_0 : i32, i32
  }
  func.func @transform_10(%arg0: i32) -> (i32, i32) {
    %c0_i32 = arith.constant 0 : i32
    %c0_i32_0 = arith.constant 0 : i32
    %c0_i32_1 = arith.constant 0 : i32
    return %c0_i32, %c0_i32_0 : i32, i32
  }
  func.func @transform_11(%arg0: i32) -> (i32, i32) {
    %c0_i32 = arith.constant 0 : i32
    %c0_i32_0 = arith.constant 0 : i32
    %c0_i32_1 = arith.constant 0 : i32
    return %c0_i32, %c0_i32_0 : i32, i32
  }
  func.func @transform_12(%arg0: i32) -> (i32, i32) {
    %c0_i32 = arith.constant 0 : i32
    %c0_i32_0 = arith.constant 0 : i32
    %c0_i32_1 = arith.constant 0 : i32
    return %c0_i32, %c0_i32_0 : i32, i32
  }
  func.func @transform_13(%arg0: i32) -> (i32, i32) {
    %c0_i32 = arith.constant 0 : i32
    %c0_i32_0 = arith.constant 0 : i32
    %c0_i32_1 = arith.constant 0 : i32
    return %c0_i32, %c0_i32_0 : i32, i32
  }
  func.func @transform_14(%arg0: i32) -> (i32, i32) {
    %c0_i32 = arith.constant 0 : i32
    %c0_i32_0 = arith.constant 0 : i32
    %c0_i32_1 = arith.constant 0 : i32
    return %c0_i32, %c0_i32_0 : i32, i32
  }
  func.func @transform_15(%arg0: i32) -> (i32, i32) {
    %c0_i32 = arith.constant 0 : i32
    %c0_i32_0 = arith.constant 0 : i32
    %c0_i32_1 = arith.constant 0 : i32
    return %c0_i32, %c0_i32_0 : i32, i32
  }
  func.func @transform_16(%arg0: i32) -> (i32, i32) {
    %c0_i32 = arith.constant 0 : i32
    %c0_i32_0 = arith.constant 0 : i32
    %c0_i32_1 = arith.constant 0 : i32
    return %c0_i32, %c0_i32_0 : i32, i32
  }
  func.func @transform_17(%arg0: i32) -> (i32, i32) {
    %c0_i32 = arith.constant 0 : i32
    %c0_i32_0 = arith.constant 0 : i32
    %c0_i32_1 = arith.constant 0 : i32
    return %c0_i32, %c0_i32_0 : i32, i32
  }
  func.func @transform_18(%arg0: i32) -> (i32, i32) {
    %c0_i32 = arith.constant 0 : i32
    %c0_i32_0 = arith.constant 0 : i32
    return %arg0, %c0_i32 : i32, i32
  }
  func.func @transform_19(%arg0: i32) -> (i32, i32, i32) {
    %c0_i32 = arith.constant 0 : i32
    %c0_i32_0 = arith.constant 0 : i32
    %c0_i32_1 = arith.constant 0 : i32
    return %arg0, %c0_i32, %c0_i32_0 : i32, i32, i32
  }
}

module attributes {stable_mosaic.version = 11 : i64} {
  func.func @decoder_layer_kernel(%arg0: i32, %arg1: memref<8x32xf32, #tpu.memory_space<vmem>>, %arg2: memref<128x32xf32, #tpu.memory_space<vmem>>, %arg3: memref<8x32xf32, #tpu.memory_space<vmem>>, %arg4: memref<128x32xf32, #tpu.memory_space<vmem>>, %arg5: memref<3x32x32xf32, #tpu.memory_space<vmem>>, %arg6: memref<3x32xf32, #tpu.memory_space<vmem>>, %arg7: memref<32x32xf32, #tpu.memory_space<vmem>>, %arg8: memref<1x32xf32, #tpu.memory_space<vmem>>, %arg9: memref<32x64xf32, #tpu.memory_space<vmem>>, %arg10: memref<1x64xf32, #tpu.memory_space<vmem>>, %arg11: memref<64x32xf32, #tpu.memory_space<vmem>>, %arg12: memref<1x32xf32, #tpu.memory_space<vmem>>, %arg13: memref<1x32xf32, #tpu.memory_space<vmem>>, %arg14: memref<1x32xf32, #tpu.memory_space<vmem>>, %arg15: memref<1x32xf32, #tpu.memory_space<vmem>>, %arg16: memref<1x32xf32, #tpu.memory_space<vmem>>, %arg17: memref<1x32xf32, #tpu.memory_space<vmem>>, %arg18: memref<1x32xf32, #tpu.memory_space<vmem>>, %arg19: memref<8x32xf32, #tpu.memory_space<vmem>>, %arg20: memref<1x8x128xf32, #tpu.memory_space<vmem>>) attributes {dimension_semantics = [#tpu.dimension_semantics<parallel>], iteration_bounds = array<i64: 2>, scalar_prefetch = 0 : i64, scratch_operands = 0 : i64, tpu.core_type = #tpu.core_type<tc>, window_params = [{transform_indices = @transform_0, window_bounds = array<i64: 8, 32>}, {transform_indices = @transform_1, window_bounds = array<i64: 128, 32>}, {transform_indices = @transform_2, window_bounds = array<i64: 8, 32>}, {transform_indices = @transform_3, window_bounds = array<i64: 128, 32>}, {pipeline_mode = #tpu.pipeline_mode<synchronous>, transform_indices = @transform_4, window_bounds = array<i64: 3, 32, 32>}, {pipeline_mode = #tpu.pipeline_mode<synchronous>, transform_indices = @transform_5, window_bounds = array<i64: 3, 32>}, {pipeline_mode = #tpu.pipeline_mode<synchronous>, transform_indices = @transform_6, window_bounds = array<i64: 32, 32>}, {pipeline_mode = #tpu.pipeline_mode<synchronous>, transform_indices = @transform_7, window_bounds = array<i64: 1, 32>}, {pipeline_mode = #tpu.pipeline_mode<synchronous>, transform_indices = @transform_8, window_bounds = array<i64: 32, 64>}, {pipeline_mode = #tpu.pipeline_mode<synchronous>, transform_indices = @transform_9, window_bounds = array<i64: 1, 64>}, {pipeline_mode = #tpu.pipeline_mode<synchronous>, transform_indices = @transform_10, window_bounds = array<i64: 64, 32>}, {pipeline_mode = #tpu.pipeline_mode<synchronous>, transform_indices = @transform_11, window_bounds = array<i64: 1, 32>}, {pipeline_mode = #tpu.pipeline_mode<synchronous>, transform_indices = @transform_12, window_bounds = array<i64: 1, 32>}, {pipeline_mode = #tpu.pipeline_mode<synchronous>, transform_indices = @transform_13, window_bounds = array<i64: 1, 32>}, {pipeline_mode = #tpu.pipeline_mode<synchronous>, transform_indices = @transform_14, window_bounds = array<i64: 1, 32>}, {pipeline_mode = #tpu.pipeline_mode<synchronous>, transform_indices = @transform_15, window_bounds = array<i64: 1, 32>}, {pipeline_mode = #tpu.pipeline_mode<synchronous>, transform_indices = @transform_16, window_bounds = array<i64: 1, 32>}, {pipeline_mode = #tpu.pipeline_mode<synchronous>, transform_indices = @transform_17, window_bounds = array<i64: 1, 32>}, {transform_indices = @transform_18, window_bounds = array<i64: 8, 32>}, {transform_indices = @transform_19, window_bounds = array<i64: 1, 8, 128>}]} {
    %c0 = arith.constant 0 : index
    %c0_0 = arith.constant 0 : index
    %0 = vector.load %arg1[%c0, %c0_0] : memref<8x32xf32, #tpu.memory_space<vmem>>, vector<8x32xf32>
    %c0_1 = arith.constant 0 : index
    %c0_2 = arith.constant 0 : index
    %1 = vector.load %arg3[%c0_1, %c0_2] : memref<8x32xf32, #tpu.memory_space<vmem>>, vector<8x32xf32>
    %c0_3 = arith.constant 0 : index
    %c0_4 = arith.constant 0 : index
    %2 = vector.load %arg2[%c0_3, %c0_4] : memref<128x32xf32, #tpu.memory_space<vmem>>, vector<128x32xf32>
    %c0_5 = arith.constant 0 : index
    %c0_6 = arith.constant 0 : index
    %3 = vector.load %arg4[%c0_5, %c0_6] : memref<128x32xf32, #tpu.memory_space<vmem>>, vector<128x32xf32>
    %c0_7 = arith.constant 0 : index
    %c0_8 = arith.constant 0 : index
    %4 = vector.load %arg13[%c0_7, %c0_8] : memref<1x32xf32, #tpu.memory_space<vmem>>, vector<1x32xf32>
    %c0_9 = arith.constant 0 : index
    %c0_10 = arith.constant 0 : index
    %5 = vector.load %arg14[%c0_9, %c0_10] : memref<1x32xf32, #tpu.memory_space<vmem>>, vector<1x32xf32>
    %cst = arith.constant dense<0.000000e+00> : vector<8xf32>
    %6 = vector.multi_reduction <add>, %0, %cst [1] : vector<8x32xf32> to vector<8xf32>
    %7 = vector.shape_cast %6 : vector<8xf32> to vector<8x1xf32>
    %cst_11 = arith.constant 3.200000e+01 : f32
    %8 = vector.broadcast %cst_11 : f32 to vector<8x1xf32>
    %9 = arith.divf %7, %8 : vector<8x1xf32>
    %10 = vector.broadcast %9 : vector<8x1xf32> to vector<8x32xf32>
    %11 = arith.subf %0, %10 : vector<8x32xf32>
    %12 = arith.mulf %11, %11 : vector<8x32xf32>
    %cst_12 = arith.constant dense<0.000000e+00> : vector<8xf32>
    %13 = vector.multi_reduction <add>, %12, %cst_12 [1] : vector<8x32xf32> to vector<8xf32>
    %14 = vector.shape_cast %13 : vector<8xf32> to vector<8x1xf32>
    %cst_13 = arith.constant 3.200000e+01 : f32
    %15 = vector.broadcast %cst_13 : f32 to vector<8x1xf32>
    %16 = arith.divf %14, %15 : vector<8x1xf32>
    %cst_14 = arith.constant 9.99999974E-6 : f32
    %17 = vector.broadcast %cst_14 : f32 to vector<8x1xf32>
    %18 = arith.addf %16, %17 : vector<8x1xf32>
    %19 = math.rsqrt %18 : vector<8x1xf32>
    %20 = vector.broadcast %19 : vector<8x1xf32> to vector<8x32xf32>
    %21 = arith.mulf %11, %20 : vector<8x32xf32>
    %22 = vector.broadcast %4 : vector<1x32xf32> to vector<8x32xf32>
    %23 = arith.mulf %21, %22 : vector<8x32xf32>
    %24 = vector.broadcast %5 : vector<1x32xf32> to vector<8x32xf32>
    %25 = arith.addf %23, %24 : vector<8x32xf32>
    %c0_15 = arith.constant 0 : index
    %c0_16 = arith.constant 0 : index
    %26 = vector.load %arg6[%c0_15, %c0_16] : memref<3x32xf32, #tpu.memory_space<vmem>>, vector<3x32xf32>
    %27 = arith.addf %25, %1 : vector<8x32xf32>
    %28 = arith.addf %2, %3 : vector<128x32xf32>
    %c0_17 = arith.constant 0 : index
    %c0_18 = arith.constant 0 : index
    %c0_19 = arith.constant 0 : index
    %29 = vector.load %arg5[%c0_17, %c0_18, %c0_19] : memref<3x32x32xf32, #tpu.memory_space<vmem>>, vector<1x32x32xf32>
    %30 = vector.shape_cast %29 : vector<1x32x32xf32> to vector<32x32xf32>
    %cst_20 = arith.constant dense<0.000000e+00> : vector<8x32xf32>
    %31 = tpu.matmul %27, %30, %cst_20 {dimension_numbers = #tpu.dot_dimension_numbers<[1], [0], [0], [1], [0, 0, 1, 1], [], []>} : vector<8x32xf32>, vector<32x32xf32>, vector<8x32xf32> -> vector<8x32xf32>
    %32 = vector.extract_strided_slice %26 {offsets = [0, 0], sizes = [1, 32], strides = [1, 1]} : vector<3x32xf32> to vector<1x32xf32>
    %33 = vector.broadcast %32 : vector<1x32xf32> to vector<8x32xf32>
    %34 = arith.addf %31, %33 : vector<8x32xf32>
    %cst_21 = arith.constant 0.353553385 : f32
    %35 = vector.broadcast %cst_21 : f32 to vector<8x32xf32>
    %36 = arith.mulf %34, %35 : vector<8x32xf32>
    %c1 = arith.constant 1 : index
    %c0_22 = arith.constant 0 : index
    %c0_23 = arith.constant 0 : index
    %37 = vector.load %arg5[%c1, %c0_22, %c0_23] : memref<3x32x32xf32, #tpu.memory_space<vmem>>, vector<1x32x32xf32>
    %38 = vector.shape_cast %37 : vector<1x32x32xf32> to vector<32x32xf32>
    %cst_24 = arith.constant dense<0.000000e+00> : vector<128x32xf32>
    %39 = tpu.matmul %28, %38, %cst_24 {dimension_numbers = #tpu.dot_dimension_numbers<[1], [0], [0], [1], [0, 0, 1, 1], [], []>} : vector<128x32xf32>, vector<32x32xf32>, vector<128x32xf32> -> vector<128x32xf32>
    %40 = vector.extract_strided_slice %26 {offsets = [1, 0], sizes = [1, 32], strides = [1, 1]} : vector<3x32xf32> to vector<1x32xf32>
    %41 = vector.broadcast %40 : vector<1x32xf32> to vector<128x32xf32>
    %42 = arith.addf %39, %41 : vector<128x32xf32>
    %c2 = arith.constant 2 : index
    %c0_25 = arith.constant 0 : index
    %c0_26 = arith.constant 0 : index
    %43 = vector.load %arg5[%c2, %c0_25, %c0_26] : memref<3x32x32xf32, #tpu.memory_space<vmem>>, vector<1x32x32xf32>
    %44 = vector.shape_cast %43 : vector<1x32x32xf32> to vector<32x32xf32>
    %cst_27 = arith.constant dense<0.000000e+00> : vector<128x32xf32>
    %45 = tpu.matmul %2, %44, %cst_27 {dimension_numbers = #tpu.dot_dimension_numbers<[1], [0], [0], [1], [0, 0, 1, 1], [], []>} : vector<128x32xf32>, vector<32x32xf32>, vector<128x32xf32> -> vector<128x32xf32>
    %46 = vector.extract_strided_slice %26 {offsets = [2, 0], sizes = [1, 32], strides = [1, 1]} : vector<3x32xf32> to vector<1x32xf32>
    %47 = vector.broadcast %46 : vector<1x32xf32> to vector<128x32xf32>
    %48 = arith.addf %45, %47 : vector<128x32xf32>
    %49 = tpu.iota {dimensions = array<i32: 2>} : vector<1x1x128xi32>
    %c8_i32 = arith.constant 8 : i32
    %50 = vector.broadcast %c8_i32 : i32 to vector<1x1x128xi32>
    %51 = arith.cmpi slt, %49, %50 : vector<1x1x128xi32>
    %52 = arith.extui %51 : vector<1x1x128xi1> to vector<1x1x128xi32>
    %53 = arith.sitofp %52 : vector<1x1x128xi32> to vector<1x1x128xf32>
    %54 = vector.extract_strided_slice %36 {offsets = [0, 0], sizes = [8, 8], strides = [1, 1]} : vector<8x32xf32> to vector<8x8xf32>
    %55 = vector.shape_cast %54 : vector<8x8xf32> to vector<1x8x8xf32>
    %56 = vector.extract_strided_slice %42 {offsets = [0, 0], sizes = [128, 8], strides = [1, 1]} : vector<128x32xf32> to vector<128x8xf32>
    %57 = vector.shape_cast %56 : vector<128x8xf32> to vector<1x128x8xf32>
    %58 = vector.extract_strided_slice %48 {offsets = [0, 0], sizes = [128, 8], strides = [1, 1]} : vector<128x32xf32> to vector<128x8xf32>
    %59 = vector.shape_cast %58 : vector<128x8xf32> to vector<1x128x8xf32>
    "tpu.trace_start"() <{level = 10 : i32, message = "bld,bsd->bls"}> : () -> ()
    %cst_28 = arith.constant dense<0.000000e+00> : vector<1x8x128xf32>
    %60 = tpu.matmul %55, %57, %cst_28 {dimension_numbers = #tpu.dot_dimension_numbers<[2], [2], [1], [1], [0, 0, 0, 1, 1, 1], [0], [0]>} : vector<1x8x8xf32>, vector<1x128x8xf32>, vector<1x8x128xf32> -> vector<1x8x128xf32>
    "tpu.trace_stop"() : () -> ()
    %cst_29 = arith.constant dense<0xFF800000> : vector<1x8xf32>
    %61 = vector.multi_reduction <maximumf>, %60, %cst_29 [2] : vector<1x8x128xf32> to vector<1x8xf32>
    %62 = vector.shape_cast %61 : vector<1x8xf32> to vector<1x8x1xf32>
    %63 = vector.broadcast %62 : vector<1x8x1xf32> to vector<1x8x128xf32>
    %64 = arith.subf %60, %63 : vector<1x8x128xf32>
    %65 = math.exp %64 : vector<1x8x128xf32>
    %66 = vector.broadcast %53 : vector<1x1x128xf32> to vector<1x8x128xf32>
    %67 = arith.mulf %65, %66 : vector<1x8x128xf32>
    %cst_30 = arith.constant dense<0.000000e+00> : vector<1x8xf32>
    %68 = vector.multi_reduction <add>, %67, %cst_30 [2] : vector<1x8x128xf32> to vector<1x8xf32>
    %69 = vector.shape_cast %68 : vector<1x8xf32> to vector<1x8x1xf32>
    %70 = vector.broadcast %69 : vector<1x8x1xf32> to vector<1x8x128xf32>
    %71 = arith.divf %67, %70 : vector<1x8x128xf32>
    "tpu.trace_start"() <{level = 10 : i32, message = "bls,bsd->bld"}> : () -> ()
    %cst_31 = arith.constant dense<0.000000e+00> : vector<1x8x8xf32>
    %72 = tpu.matmul %71, %59, %cst_31 {dimension_numbers = #tpu.dot_dimension_numbers<[2], [1], [1], [2], [0, 0, 0, 1, 1, 2], [0], [0]>} : vector<1x8x128xf32>, vector<1x128x8xf32>, vector<1x8x8xf32> -> vector<1x8x8xf32>
    "tpu.trace_stop"() : () -> ()
    %73 = vector.shape_cast %72 : vector<1x8x8xf32> to vector<8x8xf32>
    %74 = vector.extract_strided_slice %36 {offsets = [0, 8], sizes = [8, 8], strides = [1, 1]} : vector<8x32xf32> to vector<8x8xf32>
    %75 = vector.shape_cast %74 : vector<8x8xf32> to vector<1x8x8xf32>
    %76 = vector.extract_strided_slice %42 {offsets = [0, 8], sizes = [128, 8], strides = [1, 1]} : vector<128x32xf32> to vector<128x8xf32>
    %77 = vector.shape_cast %76 : vector<128x8xf32> to vector<1x128x8xf32>
    %78 = vector.extract_strided_slice %48 {offsets = [0, 8], sizes = [128, 8], strides = [1, 1]} : vector<128x32xf32> to vector<128x8xf32>
    %79 = vector.shape_cast %78 : vector<128x8xf32> to vector<1x128x8xf32>
    "tpu.trace_start"() <{level = 10 : i32, message = "bld,bsd->bls"}> : () -> ()
    %cst_32 = arith.constant dense<0.000000e+00> : vector<1x8x128xf32>
    %80 = tpu.matmul %75, %77, %cst_32 {dimension_numbers = #tpu.dot_dimension_numbers<[2], [2], [1], [1], [0, 0, 0, 1, 1, 1], [0], [0]>} : vector<1x8x8xf32>, vector<1x128x8xf32>, vector<1x8x128xf32> -> vector<1x8x128xf32>
    "tpu.trace_stop"() : () -> ()
    %cst_33 = arith.constant dense<0xFF800000> : vector<1x8xf32>
    %81 = vector.multi_reduction <maximumf>, %80, %cst_33 [2] : vector<1x8x128xf32> to vector<1x8xf32>
    %82 = vector.shape_cast %81 : vector<1x8xf32> to vector<1x8x1xf32>
    %83 = vector.broadcast %82 : vector<1x8x1xf32> to vector<1x8x128xf32>
    %84 = arith.subf %80, %83 : vector<1x8x128xf32>
    %85 = math.exp %84 : vector<1x8x128xf32>
    %86 = vector.broadcast %53 : vector<1x1x128xf32> to vector<1x8x128xf32>
    %87 = arith.mulf %85, %86 : vector<1x8x128xf32>
    %cst_34 = arith.constant dense<0.000000e+00> : vector<1x8xf32>
    %88 = vector.multi_reduction <add>, %87, %cst_34 [2] : vector<1x8x128xf32> to vector<1x8xf32>
    %89 = vector.shape_cast %88 : vector<1x8xf32> to vector<1x8x1xf32>
    %90 = vector.broadcast %89 : vector<1x8x1xf32> to vector<1x8x128xf32>
    %91 = arith.divf %87, %90 : vector<1x8x128xf32>
    %92 = arith.addf %71, %91 : vector<1x8x128xf32>
    "tpu.trace_start"() <{level = 10 : i32, message = "bls,bsd->bld"}> : () -> ()
    %cst_35 = arith.constant dense<0.000000e+00> : vector<1x8x8xf32>
    %93 = tpu.matmul %91, %79, %cst_35 {dimension_numbers = #tpu.dot_dimension_numbers<[2], [1], [1], [2], [0, 0, 0, 1, 1, 2], [0], [0]>} : vector<1x8x128xf32>, vector<1x128x8xf32>, vector<1x8x8xf32> -> vector<1x8x8xf32>
    "tpu.trace_stop"() : () -> ()
    %94 = vector.shape_cast %93 : vector<1x8x8xf32> to vector<8x8xf32>
    %95 = vector.extract_strided_slice %36 {offsets = [0, 16], sizes = [8, 8], strides = [1, 1]} : vector<8x32xf32> to vector<8x8xf32>
    %96 = vector.shape_cast %95 : vector<8x8xf32> to vector<1x8x8xf32>
    %97 = vector.extract_strided_slice %42 {offsets = [0, 16], sizes = [128, 8], strides = [1, 1]} : vector<128x32xf32> to vector<128x8xf32>
    %98 = vector.shape_cast %97 : vector<128x8xf32> to vector<1x128x8xf32>
    %99 = vector.extract_strided_slice %48 {offsets = [0, 16], sizes = [128, 8], strides = [1, 1]} : vector<128x32xf32> to vector<128x8xf32>
    %100 = vector.shape_cast %99 : vector<128x8xf32> to vector<1x128x8xf32>
    "tpu.trace_start"() <{level = 10 : i32, message = "bld,bsd->bls"}> : () -> ()
    %cst_36 = arith.constant dense<0.000000e+00> : vector<1x8x128xf32>
    %101 = tpu.matmul %96, %98, %cst_36 {dimension_numbers = #tpu.dot_dimension_numbers<[2], [2], [1], [1], [0, 0, 0, 1, 1, 1], [0], [0]>} : vector<1x8x8xf32>, vector<1x128x8xf32>, vector<1x8x128xf32> -> vector<1x8x128xf32>
    "tpu.trace_stop"() : () -> ()
    %cst_37 = arith.constant dense<0xFF800000> : vector<1x8xf32>
    %102 = vector.multi_reduction <maximumf>, %101, %cst_37 [2] : vector<1x8x128xf32> to vector<1x8xf32>
    %103 = vector.shape_cast %102 : vector<1x8xf32> to vector<1x8x1xf32>
    %104 = vector.broadcast %103 : vector<1x8x1xf32> to vector<1x8x128xf32>
    %105 = arith.subf %101, %104 : vector<1x8x128xf32>
    %106 = math.exp %105 : vector<1x8x128xf32>
    %107 = vector.broadcast %53 : vector<1x1x128xf32> to vector<1x8x128xf32>
    %108 = arith.mulf %106, %107 : vector<1x8x128xf32>
    %cst_38 = arith.constant dense<0.000000e+00> : vector<1x8xf32>
    %109 = vector.multi_reduction <add>, %108, %cst_38 [2] : vector<1x8x128xf32> to vector<1x8xf32>
    %110 = vector.shape_cast %109 : vector<1x8xf32> to vector<1x8x1xf32>
    %111 = vector.broadcast %110 : vector<1x8x1xf32> to vector<1x8x128xf32>
    %112 = arith.divf %108, %111 : vector<1x8x128xf32>
    %113 = arith.addf %92, %112 : vector<1x8x128xf32>
    "tpu.trace_start"() <{level = 10 : i32, message = "bls,bsd->bld"}> : () -> ()
    %cst_39 = arith.constant dense<0.000000e+00> : vector<1x8x8xf32>
    %114 = tpu.matmul %112, %100, %cst_39 {dimension_numbers = #tpu.dot_dimension_numbers<[2], [1], [1], [2], [0, 0, 0, 1, 1, 2], [0], [0]>} : vector<1x8x128xf32>, vector<1x128x8xf32>, vector<1x8x8xf32> -> vector<1x8x8xf32>
    "tpu.trace_stop"() : () -> ()
    %115 = vector.shape_cast %114 : vector<1x8x8xf32> to vector<8x8xf32>
    %116 = vector.extract_strided_slice %36 {offsets = [0, 24], sizes = [8, 8], strides = [1, 1]} : vector<8x32xf32> to vector<8x8xf32>
    %117 = vector.shape_cast %116 : vector<8x8xf32> to vector<1x8x8xf32>
    %118 = vector.extract_strided_slice %42 {offsets = [0, 24], sizes = [128, 8], strides = [1, 1]} : vector<128x32xf32> to vector<128x8xf32>
    %119 = vector.shape_cast %118 : vector<128x8xf32> to vector<1x128x8xf32>
    %120 = vector.extract_strided_slice %48 {offsets = [0, 24], sizes = [128, 8], strides = [1, 1]} : vector<128x32xf32> to vector<128x8xf32>
    %121 = vector.shape_cast %120 : vector<128x8xf32> to vector<1x128x8xf32>
    "tpu.trace_start"() <{level = 10 : i32, message = "bld,bsd->bls"}> : () -> ()
    %cst_40 = arith.constant dense<0.000000e+00> : vector<1x8x128xf32>
    %122 = tpu.matmul %117, %119, %cst_40 {dimension_numbers = #tpu.dot_dimension_numbers<[2], [2], [1], [1], [0, 0, 0, 1, 1, 1], [0], [0]>} : vector<1x8x8xf32>, vector<1x128x8xf32>, vector<1x8x128xf32> -> vector<1x8x128xf32>
    "tpu.trace_stop"() : () -> ()
    %cst_41 = arith.constant dense<0xFF800000> : vector<1x8xf32>
    %123 = vector.multi_reduction <maximumf>, %122, %cst_41 [2] : vector<1x8x128xf32> to vector<1x8xf32>
    %124 = vector.shape_cast %123 : vector<1x8xf32> to vector<1x8x1xf32>
    %125 = vector.broadcast %124 : vector<1x8x1xf32> to vector<1x8x128xf32>
    %126 = arith.subf %122, %125 : vector<1x8x128xf32>
    %127 = math.exp %126 : vector<1x8x128xf32>
    %128 = vector.broadcast %53 : vector<1x1x128xf32> to vector<1x8x128xf32>
    %129 = arith.mulf %127, %128 : vector<1x8x128xf32>
    %cst_42 = arith.constant dense<0.000000e+00> : vector<1x8xf32>
    %130 = vector.multi_reduction <add>, %129, %cst_42 [2] : vector<1x8x128xf32> to vector<1x8xf32>
    %131 = vector.shape_cast %130 : vector<1x8xf32> to vector<1x8x1xf32>
    %132 = vector.broadcast %131 : vector<1x8x1xf32> to vector<1x8x128xf32>
    %133 = arith.divf %129, %132 : vector<1x8x128xf32>
    %134 = arith.addf %113, %133 : vector<1x8x128xf32>
    "tpu.trace_start"() <{level = 10 : i32, message = "bls,bsd->bld"}> : () -> ()
    %cst_43 = arith.constant dense<0.000000e+00> : vector<1x8x8xf32>
    %135 = tpu.matmul %133, %121, %cst_43 {dimension_numbers = #tpu.dot_dimension_numbers<[2], [1], [1], [2], [0, 0, 0, 1, 1, 2], [0], [0]>} : vector<1x8x128xf32>, vector<1x128x8xf32>, vector<1x8x8xf32> -> vector<1x8x8xf32>
    "tpu.trace_stop"() : () -> ()
    %136 = vector.shape_cast %135 : vector<1x8x8xf32> to vector<8x8xf32>
    %cst_44 = arith.constant 2.500000e-01 : f32
    %137 = vector.broadcast %cst_44 : f32 to vector<1x8x128xf32>
    %138 = arith.mulf %134, %137 : vector<1x8x128xf32>
    %c0_45 = arith.constant 0 : index
    %c0_46 = arith.constant 0 : index
    %c0_47 = arith.constant 0 : index
    %139 = vector.load %arg20[%c0_45, %c0_46, %c0_47] : memref<1x8x128xf32, #tpu.memory_space<vmem>>, vector<1x8x128xf32>
    tpu.vector_store %arg20[%c0_45, %c0_46, %c0_47], %138 {strides = array<i32>} : memref<1x8x128xf32, #tpu.memory_space<vmem>>, vector<1x8x128xf32>,
    %140 = tpu.concatenate %73, %94, %115, %136 in 1 : vector<8x8xf32>, vector<8x8xf32>, vector<8x8xf32>, vector<8x8xf32> -> vector<8x32xf32>
    %c0_48 = arith.constant 0 : index
    %c0_49 = arith.constant 0 : index
    %141 = vector.load %arg7[%c0_48, %c0_49] : memref<32x32xf32, #tpu.memory_space<vmem>>, vector<32x32xf32>
    %cst_50 = arith.constant dense<0.000000e+00> : vector<8x32xf32>
    %142 = tpu.matmul %140, %141, %cst_50 {dimension_numbers = #tpu.dot_dimension_numbers<[1], [0], [0], [1], [0, 0, 1, 1], [], []>} : vector<8x32xf32>, vector<32x32xf32>, vector<8x32xf32> -> vector<8x32xf32>
    %c0_51 = arith.constant 0 : index
    %c0_52 = arith.constant 0 : index
    %143 = vector.load %arg8[%c0_51, %c0_52] : memref<1x32xf32, #tpu.memory_space<vmem>>, vector<1x32xf32>
    %144 = vector.broadcast %143 : vector<1x32xf32> to vector<8x32xf32>
    %145 = arith.addf %142, %144 : vector<8x32xf32>
    %146 = arith.addf %25, %145 : vector<8x32xf32>
    %c0_53 = arith.constant 0 : index
    %c0_54 = arith.constant 0 : index
    %147 = vector.load %arg15[%c0_53, %c0_54] : memref<1x32xf32, #tpu.memory_space<vmem>>, vector<1x32xf32>
    %c0_55 = arith.constant 0 : index
    %c0_56 = arith.constant 0 : index
    %148 = vector.load %arg16[%c0_55, %c0_56] : memref<1x32xf32, #tpu.memory_space<vmem>>, vector<1x32xf32>
    %cst_57 = arith.constant dense<0.000000e+00> : vector<8xf32>
    %149 = vector.multi_reduction <add>, %146, %cst_57 [1] : vector<8x32xf32> to vector<8xf32>
    %150 = vector.shape_cast %149 : vector<8xf32> to vector<8x1xf32>
    %cst_58 = arith.constant 3.200000e+01 : f32
    %151 = vector.broadcast %cst_58 : f32 to vector<8x1xf32>
    %152 = arith.divf %150, %151 : vector<8x1xf32>
    %153 = vector.broadcast %152 : vector<8x1xf32> to vector<8x32xf32>
    %154 = arith.subf %146, %153 : vector<8x32xf32>
    %155 = arith.mulf %154, %154 : vector<8x32xf32>
    %cst_59 = arith.constant dense<0.000000e+00> : vector<8xf32>
    %156 = vector.multi_reduction <add>, %155, %cst_59 [1] : vector<8x32xf32> to vector<8xf32>
    %157 = vector.shape_cast %156 : vector<8xf32> to vector<8x1xf32>
    %cst_60 = arith.constant 3.200000e+01 : f32
    %158 = vector.broadcast %cst_60 : f32 to vector<8x1xf32>
    %159 = arith.divf %157, %158 : vector<8x1xf32>
    %cst_61 = arith.constant 9.99999974E-6 : f32
    %160 = vector.broadcast %cst_61 : f32 to vector<8x1xf32>
    %161 = arith.addf %159, %160 : vector<8x1xf32>
    %162 = math.rsqrt %161 : vector<8x1xf32>
    %163 = vector.broadcast %162 : vector<8x1xf32> to vector<8x32xf32>
    %164 = arith.mulf %154, %163 : vector<8x32xf32>
    %165 = vector.broadcast %147 : vector<1x32xf32> to vector<8x32xf32>
    %166 = arith.mulf %164, %165 : vector<8x32xf32>
    %167 = vector.broadcast %148 : vector<1x32xf32> to vector<8x32xf32>
    %168 = arith.addf %166, %167 : vector<8x32xf32>
    %c0_62 = arith.constant 0 : index
    %c0_63 = arith.constant 0 : index
    %169 = vector.load %arg9[%c0_62, %c0_63] : memref<32x64xf32, #tpu.memory_space<vmem>>, vector<32x64xf32>
    %cst_64 = arith.constant dense<0.000000e+00> : vector<8x64xf32>
    %170 = tpu.matmul %168, %169, %cst_64 {dimension_numbers = #tpu.dot_dimension_numbers<[1], [0], [0], [1], [0, 0, 1, 1], [], []>} : vector<8x32xf32>, vector<32x64xf32>, vector<8x64xf32> -> vector<8x64xf32>
    %c0_65 = arith.constant 0 : index
    %c0_66 = arith.constant 0 : index
    %171 = vector.load %arg10[%c0_65, %c0_66] : memref<1x64xf32, #tpu.memory_space<vmem>>, vector<1x64xf32>
    %172 = vector.broadcast %171 : vector<1x64xf32> to vector<8x64xf32>
    %173 = arith.addf %170, %172 : vector<8x64xf32>
    %cst_67 = arith.constant 0.000000e+00 : f32
    %174 = vector.broadcast %cst_67 : f32 to vector<8x64xf32>
    %175 = arith.maximumf %173, %174 : vector<8x64xf32>
    %c0_68 = arith.constant 0 : index
    %c0_69 = arith.constant 0 : index
    %176 = vector.load %arg11[%c0_68, %c0_69] : memref<64x32xf32, #tpu.memory_space<vmem>>, vector<64x32xf32>
    %cst_70 = arith.constant dense<0.000000e+00> : vector<8x32xf32>
    %177 = tpu.matmul %175, %176, %cst_70 {dimension_numbers = #tpu.dot_dimension_numbers<[1], [0], [0], [1], [0, 0, 1, 1], [], []>} : vector<8x64xf32>, vector<64x32xf32>, vector<8x32xf32> -> vector<8x32xf32>
    %c0_71 = arith.constant 0 : index
    %c0_72 = arith.constant 0 : index
    %178 = vector.load %arg12[%c0_71, %c0_72] : memref<1x32xf32, #tpu.memory_space<vmem>>, vector<1x32xf32>
    %179 = vector.broadcast %178 : vector<1x32xf32> to vector<8x32xf32>
    %180 = arith.addf %177, %179 : vector<8x32xf32>
    %181 = arith.addf %168, %180 : vector<8x32xf32>
    %c0_73 = arith.constant 0 : index
    %c0_74 = arith.constant 0 : index
    %182 = vector.load %arg17[%c0_73, %c0_74] : memref<1x32xf32, #tpu.memory_space<vmem>>, vector<1x32xf32>
    %c0_75 = arith.constant 0 : index
    %c0_76 = arith.constant 0 : index
    %183 = vector.load %arg18[%c0_75, %c0_76] : memref<1x32xf32, #tpu.memory_space<vmem>>, vector<1x32xf32>
    %cst_77 = arith.constant dense<0.000000e+00> : vector<8xf32>
    %184 = vector.multi_reduction <add>, %181, %cst_77 [1] : vector<8x32xf32> to vector<8xf32>
    %185 = vector.shape_cast %184 : vector<8xf32> to vector<8x1xf32>
    %cst_78 = arith.constant 3.200000e+01 : f32
    %186 = vector.broadcast %cst_78 : f32 to vector<8x1xf32>
    %187 = arith.divf %185, %186 : vector<8x1xf32>
    %188 = vector.broadcast %187 : vector<8x1xf32> to vector<8x32xf32>
    %189 = arith.subf %181, %188 : vector<8x32xf32>
    %190 = arith.mulf %189, %189 : vector<8x32xf32>
    %cst_79 = arith.constant dense<0.000000e+00> : vector<8xf32>
    %191 = vector.multi_reduction <add>, %190, %cst_79 [1] : vector<8x32xf32> to vector<8xf32>
    %192 = vector.shape_cast %191 : vector<8xf32> to vector<8x1xf32>
    %cst_80 = arith.constant 3.200000e+01 : f32
    %193 = vector.broadcast %cst_80 : f32 to vector<8x1xf32>
    %194 = arith.divf %192, %193 : vector<8x1xf32>
    %cst_81 = arith.constant 9.99999974E-6 : f32
    %195 = vector.broadcast %cst_81 : f32 to vector<8x1xf32>
    %196 = arith.addf %194, %195 : vector<8x1xf32>
    %197 = math.rsqrt %196 : vector<8x1xf32>
    %198 = vector.broadcast %197 : vector<8x1xf32> to vector<8x32xf32>
    %199 = arith.mulf %189, %198 : vector<8x32xf32>
    %200 = vector.broadcast %182 : vector<1x32xf32> to vector<8x32xf32>
    %201 = arith.mulf %199, %200 : vector<8x32xf32>
    %202 = vector.broadcast %183 : vector<1x32xf32> to vector<8x32xf32>
    %203 = arith.addf %201, %202 : vector<8x32xf32>
    %c0_82 = arith.constant 0 : index
    %c0_83 = arith.constant 0 : index
    %204 = vector.load %arg19[%c0_82, %c0_83] : memref<8x32xf32, #tpu.memory_space<vmem>>, vector<8x32xf32>
    tpu.vector_store %arg19[%c0_82, %c0_83], %203 {strides = array<i32>} : memref<8x32xf32, #tpu.memory_space<vmem>>, vector<8x32xf32>,
    return
  }
  func.func @transform_0(%arg0: i32) -> (i32, i32) {
    %c0_i32 = arith.constant 0 : i32
    %c0_i32_0 = arith.constant 0 : i32
    return %arg0, %c0_i32 : i32, i32
  }
  func.func @transform_1(%arg0: i32) -> (i32, i32) {
    %c0_i32 = arith.constant 0 : i32
    %c0_i32_0 = arith.constant 0 : i32
    return %arg0, %c0_i32 : i32, i32
  }
  func.func @transform_2(%arg0: i32) -> (i32, i32) {
    %c0_i32 = arith.constant 0 : i32
    %c0_i32_0 = arith.constant 0 : i32
    return %arg0, %c0_i32 : i32, i32
  }
  func.func @transform_3(%arg0: i32) -> (i32, i32) {
    %c0_i32 = arith.constant 0 : i32
    %c0_i32_0 = arith.constant 0 : i32
    return %arg0, %c0_i32 : i32, i32
  }
  func.func @transform_4(%arg0: i32) -> (i32, i32, i32) {
    %c0_i32 = arith.constant 0 : i32
    %c0_i32_0 = arith.constant 0 : i32
    %c0_i32_1 = arith.constant 0 : i32
    %c0_i32_2 = arith.constant 0 : i32
    return %c0_i32, %c0_i32_0, %c0_i32_1 : i32, i32, i32
  }
  func.func @transform_5(%arg0: i32) -> (i32, i32) {
    %c0_i32 = arith.constant 0 : i32
    %c0_i32_0 = arith.constant 0 : i32
    %c0_i32_1 = arith.constant 0 : i32
    return %c0_i32, %c0_i32_0 : i32, i32
  }
  func.func @transform_6(%arg0: i32) -> (i32, i32) {
    %c0_i32 = arith.constant 0 : i32
    %c0_i32_0 = arith.constant 0 : i32
    %c0_i32_1 = arith.constant 0 : i32
    return %c0_i32, %c0_i32_0 : i32, i32
  }
  func.func @transform_7(%arg0: i32) -> (i32, i32) {
    %c0_i32 = arith.constant 0 : i32
    %c0_i32_0 = arith.constant 0 : i32
    %c0_i32_1 = arith.constant 0 : i32
    return %c0_i32, %c0_i32_0 : i32, i32
  }
  func.func @transform_8(%arg0: i32) -> (i32, i32) {
    %c0_i32 = arith.constant 0 : i32
    %c0_i32_0 = arith.constant 0 : i32
    %c0_i32_1 = arith.constant 0 : i32
    return %c0_i32, %c0_i32_0 : i32, i32
  }
  func.func @transform_9(%arg0: i32) -> (i32, i32) {
    %c0_i32 = arith.constant 0 : i32
    %c0_i32_0 = arith.constant 0 : i32
    %c0_i32_1 = arith.constant 0 : i32
    return %c0_i32, %c0_i32_0 : i32, i32
  }
  func.func @transform_10(%arg0: i32) -> (i32, i32) {
    %c0_i32 = arith.constant 0 : i32
    %c0_i32_0 = arith.constant 0 : i32
    %c0_i32_1 = arith.constant 0 : i32
    return %c0_i32, %c0_i32_0 : i32, i32
  }
  func.func @transform_11(%arg0: i32) -> (i32, i32) {
    %c0_i32 = arith.constant 0 : i32
    %c0_i32_0 = arith.constant 0 : i32
    %c0_i32_1 = arith.constant 0 : i32
    return %c0_i32, %c0_i32_0 : i32, i32
  }
  func.func @transform_12(%arg0: i32) -> (i32, i32) {
    %c0_i32 = arith.constant 0 : i32
    %c0_i32_0 = arith.constant 0 : i32
    %c0_i32_1 = arith.constant 0 : i32
    return %c0_i32, %c0_i32_0 : i32, i32
  }
  func.func @transform_13(%arg0: i32) -> (i32, i32) {
    %c0_i32 = arith.constant 0 : i32
    %c0_i32_0 = arith.constant 0 : i32
    %c0_i32_1 = arith.constant 0 : i32
    return %c0_i32, %c0_i32_0 : i32, i32
  }
  func.func @transform_14(%arg0: i32) -> (i32, i32) {
    %c0_i32 = arith.constant 0 : i32
    %c0_i32_0 = arith.constant 0 : i32
    %c0_i32_1 = arith.constant 0 : i32
    return %c0_i32, %c0_i32_0 : i32, i32
  }
  func.func @transform_15(%arg0: i32) -> (i32, i32) {
    %c0_i32 = arith.constant 0 : i32
    %c0_i32_0 = arith.constant 0 : i32
    %c0_i32_1 = arith.constant 0 : i32
    return %c0_i32, %c0_i32_0 : i32, i32
  }
  func.func @transform_16(%arg0: i32) -> (i32, i32) {
    %c0_i32 = arith.constant 0 : i32
    %c0_i32_0 = arith.constant 0 : i32
    %c0_i32_1 = arith.constant 0 : i32
    return %c0_i32, %c0_i32_0 : i32, i32
  }
  func.func @transform_17(%arg0: i32) -> (i32, i32) {
    %c0_i32 = arith.constant 0 : i32
    %c0_i32_0 = arith.constant 0 : i32
    %c0_i32_1 = arith.constant 0 : i32
    return %c0_i32, %c0_i32_0 : i32, i32
  }
  func.func @transform_18(%arg0: i32) -> (i32, i32) {
    %c0_i32 = arith.constant 0 : i32
    %c0_i32_0 = arith.constant 0 : i32
    return %arg0, %c0_i32 : i32, i32
  }
  func.func @transform_19(%arg0: i32) -> (i32, i32, i32) {
    %c0_i32 = arith.constant 0 : i32
    %c0_i32_0 = arith.constant 0 : i32
    %c0_i32_1 = arith.constant 0 : i32
    return %arg0, %c0_i32, %c0_i32_0 : i32, i32, i32
  }
}

</mosaic_0001>

<llo_original>
// kernel: tpu_custom_call.1
$region0: #{tpu_custom_call.1}
  #allocation0 [shape = 'u32[]', space=smem, size = 0x4, offset = 0x4, fixed_abs, tag = 'smem constant byte address 0x4 - core index']
  #allocation1 [shape = 'u32[144,128]{1,0:T(1,128)}', space=vmem, size = 0x12000, scoped, tag = 'internal scratch']
  %s0 = inlined_call_operand.vmem [shape: f32[16,32], index: 0, kind: input, shape index: {}]
  %s1 = inlined_call_operand.vmem [shape: f32[256,32], index: 1, kind: input, shape index: {}]
  %s2 = inlined_call_operand.vmem [shape: f32[16,32], index: 2, kind: input, shape index: {}]
  %s3 = inlined_call_operand.vmem [shape: f32[256,32], index: 3, kind: input, shape index: {}]
  %s4 = inlined_call_operand.vmem [shape: f32[3,32,32], index: 4, kind: input, shape index: {}]
  %s5 = inlined_call_operand.vmem [shape: f32[3,32], index: 5, kind: input, shape index: {}]
  %s6 = inlined_call_operand.vmem [shape: f32[32,32], index: 6, kind: input, shape index: {}]
  %s7 = inlined_call_operand.vmem [shape: f32[1,32], index: 7, kind: input, shape index: {}]
  %s8 = inlined_call_operand.vmem [shape: f32[32,64], index: 8, kind: input, shape index: {}]
  %s9 = inlined_call_operand.vmem [shape: f32[1,64], index: 9, kind: input, shape index: {}]
  %s10 = inlined_call_operand.vmem [shape: f32[64,32], index: 10, kind: input, shape index: {}]
  %s11 = inlined_call_operand.vmem [shape: f32[1,32], index: 11, kind: input, shape index: {}]
  %s12 = inlined_call_operand.vmem [shape: f32[1,32], index: 12, kind: input, shape index: {}]
  %s13 = inlined_call_operand.vmem [shape: f32[1,32], index: 13, kind: input, shape index: {}]
  %s14 = inlined_call_operand.vmem [shape: f32[1,32], index: 14, kind: input, shape index: {}]
  %s15 = inlined_call_operand.vmem [shape: f32[1,32], index: 15, kind: input, shape index: {}]
  %s16 = inlined_call_operand.vmem [shape: f32[1,32], index: 16, kind: input, shape index: {}]
  %s17 = inlined_call_operand.vmem [shape: f32[1,32], index: 17, kind: input, shape index: {}]
  %s18 = inlined_call_operand.hbm [shape: f32[16,32], index: 18, kind: output, shape index: {0}]
  %s19 = inlined_call_operand.hbm [shape: f32[2,8,128], index: 19, kind: output, shape index: {1}]
  %20 = xla_tuple %s18, %s19
  %s21 = sld [smem:[#allocation0]]
  $region113: #{tpu_custom_call.1} parent=0
    _
  %s23 = ssub.s32 1, %s21
  %s24 = scalar_select 0, %s23, %s21
  $region1: #{tpu_custom_call.1} parent=0
    #allocation2 [shape = 'u8[8192]{0}', space=vmem, size = 0x2000, scoped, tag = 'output window, operand 0']
    #allocation3 [shape = 's32[2]{0}', space=sflag, size = 0x8, scoped, tag = 'scoped memory for tpu_custom_call.1']
    #allocation4 [shape = 'u8[8192]{0}', space=vmem, size = 0x2000, scoped, tag = 'output window, operand 1']
    #allocation5 [shape = 's32[2]{0}', space=sflag, size = 0x8, scoped, tag = 'scoped memory for tpu_custom_call.1']
    %25 = vsyncpa [#allocation3], 0
    %s26 = scalar_lea.sflag [#allocation3], 1
    %27 = vsyncpa %s26, 0
    %28 = vsyncpa [#allocation5], 0
    %s29 = scalar_lea.sflag [#allocation5], 1
    %30 = vsyncpa %s29, 0
    loop: start=0, step=1, limit=4
    $region2: #{tpu_custom_call.1} parent=1 // loop_pre_header
      _
    $region3: #{tpu_custom_call.1} parent=1 // loop_header
      %s32 = sphi 0, %s36
      %p33 = scmp.ge.s32.totalorder %s32, 4
      %s42 = sphi 0, %s44
      %s45 = sphi 0, %s42
      %s46 = sphi 0, %s45
      %s62 = sphi 0, %s46
      %s68 = sphi 0, %s70
      %s71 = sphi 0, %s68
      %s72 = sphi 0, %s71
      %s88 = sphi 0, %s72
      %s94 = sphi 0, %s96
      %s97 = sphi 0, %s94
      %s98 = sphi 0, %s97
      %s114 = sphi 0, %s98
      %s120 = sphi 0, %s122
      %s123 = sphi 0, %s120
      %s124 = sphi 0, %s123
      %s140 = sphi 0, %s124
      %s144 = sphi 0, %s144
      %s146 = sphi 0, %s144
      %s147 = sphi 0, %s146
      %s161 = sphi 0, %s147
      %s165 = sphi 0, %s165
      %s167 = sphi 0, %s165
      %s168 = sphi 0, %s167
      %s182 = sphi 0, %s168
      %s186 = sphi 0, %s186
      %s188 = sphi 0, %s186
      %s189 = sphi 0, %s188
      %s203 = sphi 0, %s189
      %s207 = sphi 0, %s207
      %s209 = sphi 0, %s207
      %s210 = sphi 0, %s209
      %s224 = sphi 0, %s210
      %s228 = sphi 0, %s228
      %s230 = sphi 0, %s228
      %s231 = sphi 0, %s230
      %s245 = sphi 0, %s231
      %s249 = sphi 0, %s249
      %s251 = sphi 0, %s249
      %s252 = sphi 0, %s251
      %s266 = sphi 0, %s252
      %s270 = sphi 0, %s270
      %s272 = sphi 0, %s270
      %s273 = sphi 0, %s272
      %s287 = sphi 0, %s273
      %s291 = sphi 0, %s291
      %s293 = sphi 0, %s291
      %s294 = sphi 0, %s293
      %s308 = sphi 0, %s294
      %s312 = sphi 0, %s312
      %s314 = sphi 0, %s312
      %s315 = sphi 0, %s314
      %s329 = sphi 0, %s315
      %s333 = sphi 0, %s333
      %s335 = sphi 0, %s333
      %s336 = sphi 0, %s335
      %s350 = sphi 0, %s336
      %s354 = sphi 0, %s354
      %s356 = sphi 0, %s354
      %s357 = sphi 0, %s356
      %s371 = sphi 0, %s357
      %s375 = sphi 0, %s375
      %s377 = sphi 0, %s375
      %s378 = sphi 0, %s377
      %s392 = sphi 0, %s378
      %s396 = sphi 0, %s396
      %s398 = sphi 0, %s396
      %s399 = sphi 0, %s398
      %s413 = sphi 0, %s399
      %s417 = sphi 0, %s417
      %s419 = sphi 0, %s417
      %s420 = sphi 0, %s419
      %s434 = sphi 0, %s420
      %s440 = sphi 0, %s442
      %s443 = sphi 0, %s440
      %s444 = sphi 0, %s443
      %s460 = sphi 0, %s444
      %s466 = sphi 0, %s468
      %s469 = sphi 0, %s466
      %s470 = sphi 0, %s469
      %s486 = sphi 0, %s470
    $region4: #{tpu_custom_call.1} parent=1 // loop_header_branch
      %35 = sbr.rel (%p33) target = $region8
    $region5: #{tpu_custom_call.1} parent=1 // loop_body
      %s37 = ssub.s32 %s32, 1
      %s38 = ssub.s32 %s32, 2
      %s39 = sadd.s32 %s32, 1
      %s40 = ssub.s32 %s32, %s39
      %p41 = scmp.eq.s32.totalorder %s40, 0
      %s43 = sadd.s32 %s42, 1
      %s44 = scalar_select %p41, %s42, %s43
      %p47 = pneg %p41
      %p48 = scmp.eq.s32.totalorder %s32, 1
      %p49 = por %p47, %p48
      %p50 = scmp.ne.s32.totalorder %s42, %s45
      %p51 = scmp.eq.s32.totalorder %s32, 0
      %p52 = por %p50, %p51
      %p53 = scmp.ne.s32.totalorder %s42, %s45
      %p54 = scmp.eq.s32.totalorder %s37, 1
      %p55 = por %p53, %p54
      %p56 = scmp.ne.s32.totalorder %s45, %s46
      %p57 = scmp.eq.s32.totalorder %s37, 0
      %p58 = por %p56, %p57
      %p59 = scmp.ne.s32.totalorder %s45, %s46
      %p60 = scmp.eq.s32.totalorder %s38, 1
      %p61 = por %p59, %p60
      %p63 = scmp.ne.s32.totalorder %s46, %s62
      %p64 = scmp.eq.s32.totalorder %s38, 0
      %p65 = por %p63, %p64
      %s66 = ssub.s32 %s32, %s39
      %p67 = scmp.eq.s32.totalorder %s66, 0
      %s69 = sadd.s32 %s68, 1
      %s70 = scalar_select %p67, %s68, %s69
      %p73 = pneg %p67
      %p74 = scmp.eq.s32.totalorder %s32, 1
      %p75 = por %p73, %p74
      %p76 = scmp.ne.s32.totalorder %s68, %s71
      %p77 = scmp.eq.s32.totalorder %s32, 0
      %p78 = por %p76, %p77
      %p79 = scmp.ne.s32.totalorder %s68, %s71
      %p80 = scmp.eq.s32.totalorder %s37, 1
      %p81 = por %p79, %p80
      %p82 = scmp.ne.s32.totalorder %s71, %s72
      %p83 = scmp.eq.s32.totalorder %s37, 0
      %p84 = por %p82, %p83
      %p85 = scmp.ne.s32.totalorder %s71, %s72
      %p86 = scmp.eq.s32.totalorder %s38, 1
      %p87 = por %p85, %p86
      %p89 = scmp.ne.s32.totalorder %s72, %s88
      %p90 = scmp.eq.s32.totalorder %s38, 0
      %p91 = por %p89, %p90
      %s92 = ssub.s32 %s32, %s39
      %p93 = scmp.eq.s32.totalorder %s92, 0
      %s95 = sadd.s32 %s94, 1
      %s96 = scalar_select %p93, %s94, %s95
      %p99 = pneg %p93
      %p100 = scmp.eq.s32.totalorder %s32, 1
      %p101 = por %p99, %p100
      %p102 = scmp.ne.s32.totalorder %s94, %s97
      %p103 = scmp.eq.s32.totalorder %s32, 0
      %p104 = por %p102, %p103
      %p105 = scmp.ne.s32.totalorder %s94, %s97
      %p106 = scmp.eq.s32.totalorder %s37, 1
      %p107 = por %p105, %p106
      %p108 = scmp.ne.s32.totalorder %s97, %s98
      %p109 = scmp.eq.s32.totalorder %s37, 0
      %p110 = por %p108, %p109
      %p111 = scmp.ne.s32.totalorder %s97, %s98
      %p112 = scmp.eq.s32.totalorder %s38, 1
      %p113 = por %p111, %p112
      %p115 = scmp.ne.s32.totalorder %s98, %s114
      %p116 = scmp.eq.s32.totalorder %s38, 0
      %p117 = por %p115, %p116
      %s118 = ssub.s32 %s32, %s39
      %p119 = scmp.eq.s32.totalorder %s118, 0
      %s121 = sadd.s32 %s120, 1
      %s122 = scalar_select %p119, %s120, %s121
      %p125 = pneg %p119
      %p126 = scmp.eq.s32.totalorder %s32, 1
      %p127 = por %p125, %p126
      %p128 = scmp.ne.s32.totalorder %s120, %s123
      %p129 = scmp.eq.s32.totalorder %s32, 0
      %p130 = por %p128, %p129
      %p131 = scmp.ne.s32.totalorder %s120, %s123
      %p132 = scmp.eq.s32.totalorder %s37, 1
      %p133 = por %p131, %p132
      %p134 = scmp.ne.s32.totalorder %s123, %s124
      %p135 = scmp.eq.s32.totalorder %s37, 0
      %p136 = por %p134, %p135
      %p137 = scmp.ne.s32.totalorder %s123, %s124
      %p138 = scmp.eq.s32.totalorder %s38, 1
      %p139 = por %p137, %p138
      %p141 = scmp.ne.s32.totalorder %s124, %s140
      %p142 = scmp.eq.s32.totalorder %s38, 0
      %p143 = por %p141, %p142
      %s145 = sadd.s32 %s144, 1
      %p148 = scmp.eq.s32.totalorder %s32, 1
      %p149 = scmp.ne.s32.totalorder %s144, %s146
      %p150 = scmp.eq.s32.totalorder %s32, 0
      %p151 = por %p149, %p150
      %p152 = scmp.ne.s32.totalorder %s144, %s146
      %p153 = scmp.eq.s32.totalorder %s37, 1
      %p154 = por %p152, %p153
      %p155 = scmp.ne.s32.totalorder %s146, %s147
      %p156 = scmp.eq.s32.totalorder %s37, 0
      %p157 = por %p155, %p156
      %p158 = scmp.ne.s32.totalorder %s146, %s147
      %p159 = scmp.eq.s32.totalorder %s38, 1
      %p160 = por %p158, %p159
      %p162 = scmp.ne.s32.totalorder %s147, %s161
      %p163 = scmp.eq.s32.totalorder %s38, 0
      %p164 = por %p162, %p163
      %s166 = sadd.s32 %s165, 1
      %p169 = scmp.eq.s32.totalorder %s32, 1
      %p170 = scmp.ne.s32.totalorder %s165, %s167
      %p171 = scmp.eq.s32.totalorder %s32, 0
      %p172 = por %p170, %p171
      %p173 = scmp.ne.s32.totalorder %s165, %s167
      %p174 = scmp.eq.s32.totalorder %s37, 1
      %p175 = por %p173, %p174
      %p176 = scmp.ne.s32.totalorder %s167, %s168
      %p177 = scmp.eq.s32.totalorder %s37, 0
      %p178 = por %p176, %p177
      %p179 = scmp.ne.s32.totalorder %s167, %s168
      %p180 = scmp.eq.s32.totalorder %s38, 1
      %p181 = por %p179, %p180
      %p183 = scmp.ne.s32.totalorder %s168, %s182
      %p184 = scmp.eq.s32.totalorder %s38, 0
      %p185 = por %p183, %p184
      %s187 = sadd.s32 %s186, 1
      %p190 = scmp.eq.s32.totalorder %s32, 1
      %p191 = scmp.ne.s32.totalorder %s186, %s188
      %p192 = scmp.eq.s32.totalorder %s32, 0
      %p193 = por %p191, %p192
      %p194 = scmp.ne.s32.totalorder %s186, %s188
      %p195 = scmp.eq.s32.totalorder %s37, 1
      %p196 = por %p194, %p195
      %p197 = scmp.ne.s32.totalorder %s188, %s189
      %p198 = scmp.eq.s32.totalorder %s37, 0
      %p199 = por %p197, %p198
      %p200 = scmp.ne.s32.totalorder %s188, %s189
      %p201 = scmp.eq.s32.totalorder %s38, 1
      %p202 = por %p200, %p201
      %p204 = scmp.ne.s32.totalorder %s189, %s203
      %p205 = scmp.eq.s32.totalorder %s38, 0
      %p206 = por %p204, %p205
      %s208 = sadd.s32 %s207, 1
      %p211 = scmp.eq.s32.totalorder %s32, 1
      %p212 = scmp.ne.s32.totalorder %s207, %s209
      %p213 = scmp.eq.s32.totalorder %s32, 0
      %p214 = por %p212, %p213
      %p215 = scmp.ne.s32.totalorder %s207, %s209
      %p216 = scmp.eq.s32.totalorder %s37, 1
      %p217 = por %p215, %p216
      %p218 = scmp.ne.s32.totalorder %s209, %s210
      %p219 = scmp.eq.s32.totalorder %s37, 0
      %p220 = por %p218, %p219
      %p221 = scmp.ne.s32.totalorder %s209, %s210
      %p222 = scmp.eq.s32.totalorder %s38, 1
      %p223 = por %p221, %p222
      %p225 = scmp.ne.s32.totalorder %s210, %s224
      %p226 = scmp.eq.s32.totalorder %s38, 0
      %p227 = por %p225, %p226
      %s229 = sadd.s32 %s228, 1
      %p232 = scmp.eq.s32.totalorder %s32, 1
      %p233 = scmp.ne.s32.totalorder %s228, %s230
      %p234 = scmp.eq.s32.totalorder %s32, 0
      %p235 = por %p233, %p234
      %p236 = scmp.ne.s32.totalorder %s228, %s230
      %p237 = scmp.eq.s32.totalorder %s37, 1
      %p238 = por %p236, %p237
      %p239 = scmp.ne.s32.totalorder %s230, %s231
      %p240 = scmp.eq.s32.totalorder %s37, 0
      %p241 = por %p239, %p240
      %p242 = scmp.ne.s32.totalorder %s230, %s231
      %p243 = scmp.eq.s32.totalorder %s38, 1
      %p244 = por %p242, %p243
      %p246 = scmp.ne.s32.totalorder %s231, %s245
      %p247 = scmp.eq.s32.totalorder %s38, 0
      %p248 = por %p246, %p247
      %s250 = sadd.s32 %s249, 1
      %p253 = scmp.eq.s32.totalorder %s32, 1
      %p254 = scmp.ne.s32.totalorder %s249, %s251
      %p255 = scmp.eq.s32.totalorder %s32, 0
      %p256 = por %p254, %p255
      %p257 = scmp.ne.s32.totalorder %s249, %s251
      %p258 = scmp.eq.s32.totalorder %s37, 1
      %p259 = por %p257, %p258
      %p260 = scmp.ne.s32.totalorder %s251, %s252
      %p261 = scmp.eq.s32.totalorder %s37, 0
      %p262 = por %p260, %p261
      %p263 = scmp.ne.s32.totalorder %s251, %s252
      %p264 = scmp.eq.s32.totalorder %s38, 1
      %p265 = por %p263, %p264
      %p267 = scmp.ne.s32.totalorder %s252, %s266
      %p268 = scmp.eq.s32.totalorder %s38, 0
      %p269 = por %p267, %p268
      %s271 = sadd.s32 %s270, 1
      %p274 = scmp.eq.s32.totalorder %s32, 1
      %p275 = scmp.ne.s32.totalorder %s270, %s272
      %p276 = scmp.eq.s32.totalorder %s32, 0
      %p277 = por %p275, %p276
      %p278 = scmp.ne.s32.totalorder %s270, %s272
      %p279 = scmp.eq.s32.totalorder %s37, 1
      %p280 = por %p278, %p279
      %p281 = scmp.ne.s32.totalorder %s272, %s273
      %p282 = scmp.eq.s32.totalorder %s37, 0
      %p283 = por %p281, %p282
      %p284 = scmp.ne.s32.totalorder %s272, %s273
      %p285 = scmp.eq.s32.totalorder %s38, 1
      %p286 = por %p284, %p285
      %p288 = scmp.ne.s32.totalorder %s273, %s287
      %p289 = scmp.eq.s32.totalorder %s38, 0
      %p290 = por %p288, %p289
      %s292 = sadd.s32 %s291, 1
      %p295 = scmp.eq.s32.totalorder %s32, 1
      %p296 = scmp.ne.s32.totalorder %s291, %s293
      %p297 = scmp.eq.s32.totalorder %s32, 0
      %p298 = por %p296, %p297
      %p299 = scmp.ne.s32.totalorder %s291, %s293
      %p300 = scmp.eq.s32.totalorder %s37, 1
      %p301 = por %p299, %p300
      %p302 = scmp.ne.s32.totalorder %s293, %s294
      %p303 = scmp.eq.s32.totalorder %s37, 0
      %p304 = por %p302, %p303
      %p305 = scmp.ne.s32.totalorder %s293, %s294
      %p306 = scmp.eq.s32.totalorder %s38, 1
      %p307 = por %p305, %p306
      %p309 = scmp.ne.s32.totalorder %s294, %s308
      %p310 = scmp.eq.s32.totalorder %s38, 0
      %p311 = por %p309, %p310
      %s313 = sadd.s32 %s312, 1
      %p316 = scmp.eq.s32.totalorder %s32, 1
      %p317 = scmp.ne.s32.totalorder %s312, %s314
      %p318 = scmp.eq.s32.totalorder %s32, 0
      %p319 = por %p317, %p318
      %p320 = scmp.ne.s32.totalorder %s312, %s314
      %p321 = scmp.eq.s32.totalorder %s37, 1
      %p322 = por %p320, %p321
      %p323 = scmp.ne.s32.totalorder %s314, %s315
      %p324 = scmp.eq.s32.totalorder %s37, 0
      %p325 = por %p323, %p324
      %p326 = scmp.ne.s32.totalorder %s314, %s315
      %p327 = scmp.eq.s32.totalorder %s38, 1
      %p328 = por %p326, %p327
      %p330 = scmp.ne.s32.totalorder %s315, %s329
      %p331 = scmp.eq.s32.totalorder %s38, 0
      %p332 = por %p330, %p331
      %s334 = sadd.s32 %s333, 1
      %p337 = scmp.eq.s32.totalorder %s32, 1
      %p338 = scmp.ne.s32.totalorder %s333, %s335
      %p339 = scmp.eq.s32.totalorder %s32, 0
      %p340 = por %p338, %p339
      %p341 = scmp.ne.s32.totalorder %s333, %s335
      %p342 = scmp.eq.s32.totalorder %s37, 1
      %p343 = por %p341, %p342
      %p344 = scmp.ne.s32.totalorder %s335, %s336
      %p345 = scmp.eq.s32.totalorder %s37, 0
      %p346 = por %p344, %p345
      %p347 = scmp.ne.s32.totalorder %s335, %s336
      %p348 = scmp.eq.s32.totalorder %s38, 1
      %p349 = por %p347, %p348
      %p351 = scmp.ne.s32.totalorder %s336, %s350
      %p352 = scmp.eq.s32.totalorder %s38, 0
      %p353 = por %p351, %p352
      %s355 = sadd.s32 %s354, 1
      %p358 = scmp.eq.s32.totalorder %s32, 1
      %p359 = scmp.ne.s32.totalorder %s354, %s356
      %p360 = scmp.eq.s32.totalorder %s32, 0
      %p361 = por %p359, %p360
      %p362 = scmp.ne.s32.totalorder %s354, %s356
      %p363 = scmp.eq.s32.totalorder %s37, 1
      %p364 = por %p362, %p363
      %p365 = scmp.ne.s32.totalorder %s356, %s357
      %p366 = scmp.eq.s32.totalorder %s37, 0
      %p367 = por %p365, %p366
      %p368 = scmp.ne.s32.totalorder %s356, %s357
      %p369 = scmp.eq.s32.totalorder %s38, 1
      %p370 = por %p368, %p369
      %p372 = scmp.ne.s32.totalorder %s357, %s371
      %p373 = scmp.eq.s32.totalorder %s38, 0
      %p374 = por %p372, %p373
      %s376 = sadd.s32 %s375, 1
      %p379 = scmp.eq.s32.totalorder %s32, 1
      %p380 = scmp.ne.s32.totalorder %s375, %s377
      %p381 = scmp.eq.s32.totalorder %s32, 0
      %p382 = por %p380, %p381
      %p383 = scmp.ne.s32.totalorder %s375, %s377
      %p384 = scmp.eq.s32.totalorder %s37, 1
      %p385 = por %p383, %p384
      %p386 = scmp.ne.s32.totalorder %s377, %s378
      %p387 = scmp.eq.s32.totalorder %s37, 0
      %p388 = por %p386, %p387
      %p389 = scmp.ne.s32.totalorder %s377, %s378
      %p390 = scmp.eq.s32.totalorder %s38, 1
      %p391 = por %p389, %p390
      %p393 = scmp.ne.s32.totalorder %s378, %s392
      %p394 = scmp.eq.s32.totalorder %s38, 0
      %p395 = por %p393, %p394
      %s397 = sadd.s32 %s396, 1
      %p400 = scmp.eq.s32.totalorder %s32, 1
      %p401 = scmp.ne.s32.totalorder %s396, %s398
      %p402 = scmp.eq.s32.totalorder %s32, 0
      %p403 = por %p401, %p402
      %p404 = scmp.ne.s32.totalorder %s396, %s398
      %p405 = scmp.eq.s32.totalorder %s37, 1
      %p406 = por %p404, %p405
      %p407 = scmp.ne.s32.totalorder %s398, %s399
      %p408 = scmp.eq.s32.totalorder %s37, 0
      %p409 = por %p407, %p408
      %p410 = scmp.ne.s32.totalorder %s398, %s399
      %p411 = scmp.eq.s32.totalorder %s38, 1
      %p412 = por %p410, %p411
      %p414 = scmp.ne.s32.totalorder %s399, %s413
      %p415 = scmp.eq.s32.totalorder %s38, 0
      %p416 = por %p414, %p415
      %s418 = sadd.s32 %s417, 1
      %p421 = scmp.eq.s32.totalorder %s32, 1
      %p422 = scmp.ne.s32.totalorder %s417, %s419
      %p423 = scmp.eq.s32.totalorder %s32, 0
      %p424 = por %p422, %p423
      %p425 = scmp.ne.s32.totalorder %s417, %s419
      %p426 = scmp.eq.s32.totalorder %s37, 1
      %p427 = por %p425, %p426
      %p428 = scmp.ne.s32.totalorder %s419, %s420
      %p429 = scmp.eq.s32.totalorder %s37, 0
      %p430 = por %p428, %p429
      %p431 = scmp.ne.s32.totalorder %s419, %s420
      %p432 = scmp.eq.s32.totalorder %s38, 1
      %p433 = por %p431, %p432
      %p435 = scmp.ne.s32.totalorder %s420, %s434
      %p436 = scmp.eq.s32.totalorder %s38, 0
      %p437 = por %p435, %p436
      %s438 = ssub.s32 %s32, %s39
      %p439 = scmp.eq.s32.totalorder %s438, 0
      %s441 = sadd.s32 %s440, 1
      %s442 = scalar_select %p439, %s440, %s441
      %p445 = pneg %p439
      %p446 = scmp.eq.s32.totalorder %s32, 1
      %p447 = por %p445, %p446
      %p448 = scmp.ne.s32.totalorder %s440, %s443
      %p449 = scmp.eq.s32.totalorder %s32, 0
      %p450 = por %p448, %p449
      %p451 = scmp.ne.s32.totalorder %s440, %s443
      %p452 = scmp.eq.s32.totalorder %s37, 1
      %p453 = por %p451, %p452
      %p454 = scmp.ne.s32.totalorder %s443, %s444
      %p455 = scmp.eq.s32.totalorder %s37, 0
      %p456 = por %p454, %p455
      %p457 = scmp.ne.s32.totalorder %s443, %s444
      %p458 = scmp.eq.s32.totalorder %s38, 1
      %p459 = por %p457, %p458
      %p461 = scmp.ne.s32.totalorder %s444, %s460
      %p462 = scmp.eq.s32.totalorder %s38, 0
      %p463 = por %p461, %p462
      %s464 = ssub.s32 %s32, %s39
      %p465 = scmp.eq.s32.totalorder %s464, 0
      %s467 = sadd.s32 %s466, 1
      %s468 = scalar_select %p465, %s466, %s467
      %p471 = pneg %p465
      %p472 = scmp.eq.s32.totalorder %s32, 1
      %p473 = por %p471, %p472
      %p474 = scmp.ne.s32.totalorder %s466, %s469
      %p475 = scmp.eq.s32.totalorder %s32, 0
      %p476 = por %p474, %p475
      %p477 = scmp.ne.s32.totalorder %s466, %s469
      %p478 = scmp.eq.s32.totalorder %s37, 1
      %p479 = por %p477, %p478
      %p480 = scmp.ne.s32.totalorder %s469, %s470
      %p481 = scmp.eq.s32.totalorder %s37, 0
      %p482 = por %p480, %p481
      %p483 = scmp.ne.s32.totalorder %s469, %s470
      %p484 = scmp.eq.s32.totalorder %s38, 1
      %p485 = por %p483, %p484
      %p487 = scmp.ne.s32.totalorder %s470, %s486
      %p488 = scmp.eq.s32.totalorder %s38, 0
      %p489 = por %p487, %p488
      %p490 = scmp.le.s32.totalorder 1, %s32
      %p491 = scmp.lt.s32.totalorder %s32, 3
      %p492 = pnand %p490, %p491
      %p493 = pneg %p492
      // Predicated region
      $region9: #{tpu_custom_call.1} parent=5 // pred_check
        _
      $region10: #{tpu_custom_call.1} parent=5 // pred_check_branch
        %495 = sbr.rel (%p492) target = $region12
      $region11: #{tpu_custom_call.1} parent=5 // pred_region
        %s496 = ssub.s32 %s32, 1
        // Predicated region
        $region13: #{tpu_custom_call.1} parent=11 // pred_check
          %p497 = pneg %p157
        $region14: #{tpu_custom_call.1} parent=11 // pred_check_branch
          %499 = sbr.rel (%p497) target = $region16
        $region15: #{tpu_custom_call.1} parent=11 // pred_region
          _
        $region16: #{tpu_custom_call.1} parent=11 // pred_fallthru
          _
        // Predicated region
        $region17: #{tpu_custom_call.1} parent=11 // pred_check
          %p500 = pneg %p178
        $region18: #{tpu_custom_call.1} parent=11 // pred_check_branch
          %502 = sbr.rel (%p500) target = $region20
        $region19: #{tpu_custom_call.1} parent=11 // pred_region
          _
        $region20: #{tpu_custom_call.1} parent=11 // pred_fallthru
          _
        // Predicated region
        $region21: #{tpu_custom_call.1} parent=11 // pred_check
          %p503 = pneg %p199
        $region22: #{tpu_custom_call.1} parent=11 // pred_check_branch
          %505 = sbr.rel (%p503) target = $region24
        $region23: #{tpu_custom_call.1} parent=11 // pred_region
          _
        $region24: #{tpu_custom_call.1} parent=11 // pred_fallthru
          _
        // Predicated region
        $region25: #{tpu_custom_call.1} parent=11 // pred_check
          %p506 = pneg %p220
        $region26: #{tpu_custom_call.1} parent=11 // pred_check_branch
          %508 = sbr.rel (%p506) target = $region28
        $region27: #{tpu_custom_call.1} parent=11 // pred_region
          _
        $region28: #{tpu_custom_call.1} parent=11 // pred_fallthru
          _
        // Predicated region
        $region29: #{tpu_custom_call.1} parent=11 // pred_check
          %p509 = pneg %p241
        $region30: #{tpu_custom_call.1} parent=11 // pred_check_branch
          %511 = sbr.rel (%p509) target = $region32
        $region31: #{tpu_custom_call.1} parent=11 // pred_region
          _
        $region32: #{tpu_custom_call.1} parent=11 // pred_fallthru
          _
        // Predicated region
        $region33: #{tpu_custom_call.1} parent=11 // pred_check
          %p512 = pneg %p262
        $region34: #{tpu_custom_call.1} parent=11 // pred_check_branch
          %514 = sbr.rel (%p512) target = $region36
        $region35: #{tpu_custom_call.1} parent=11 // pred_region
          _
        $region36: #{tpu_custom_call.1} parent=11 // pred_fallthru
          _
        // Predicated region
        $region37: #{tpu_custom_call.1} parent=11 // pred_check
          %p515 = pneg %p283
        $region38: #{tpu_custom_call.1} parent=11 // pred_check_branch
          %517 = sbr.rel (%p515) target = $region40
        $region39: #{tpu_custom_call.1} parent=11 // pred_region
          _
        $region40: #{tpu_custom_call.1} parent=11 // pred_fallthru
          _
        // Predicated region
        $region41: #{tpu_custom_call.1} parent=11 // pred_check
          %p518 = pneg %p304
        $region42: #{tpu_custom_call.1} parent=11 // pred_check_branch
          %520 = sbr.rel (%p518) target = $region44
        $region43: #{tpu_custom_call.1} parent=11 // pred_region
          _
        $region44: #{tpu_custom_call.1} parent=11 // pred_fallthru
          _
        // Predicated region
        $region45: #{tpu_custom_call.1} parent=11 // pred_check
          %p521 = pneg %p325
        $region46: #{tpu_custom_call.1} parent=11 // pred_check_branch
          %523 = sbr.rel (%p521) target = $region48
        $region47: #{tpu_custom_call.1} parent=11 // pred_region
          _
        $region48: #{tpu_custom_call.1} parent=11 // pred_fallthru
          _
        // Predicated region
        $region49: #{tpu_custom_call.1} parent=11 // pred_check
          %p524 = pneg %p346
        $region50: #{tpu_custom_call.1} parent=11 // pred_check_branch
          %526 = sbr.rel (%p524) target = $region52
        $region51: #{tpu_custom_call.1} parent=11 // pred_region
          _
        $region52: #{tpu_custom_call.1} parent=11 // pred_fallthru
          _
        // Predicated region
        $region53: #{tpu_custom_call.1} parent=11 // pred_check
          %p527 = pneg %p367
        $region54: #{tpu_custom_call.1} parent=11 // pred_check_branch
          %529 = sbr.rel (%p527) target = $region56
        $region55: #{tpu_custom_call.1} parent=11 // pred_region
          _
        $region56: #{tpu_custom_call.1} parent=11 // pred_fallthru
          _
        // Predicated region
        $region57: #{tpu_custom_call.1} parent=11 // pred_check
          %p530 = pneg %p388
        $region58: #{tpu_custom_call.1} parent=11 // pred_check_branch
          %532 = sbr.rel (%p530) target = $region60
        $region59: #{tpu_custom_call.1} parent=11 // pred_region
          _
        $region60: #{tpu_custom_call.1} parent=11 // pred_fallthru
          _
        // Predicated region
        $region61: #{tpu_custom_call.1} parent=11 // pred_check
          %p533 = pneg %p409
        $region62: #{tpu_custom_call.1} parent=11 // pred_check_branch
          %535 = sbr.rel (%p533) target = $region64
        $region63: #{tpu_custom_call.1} parent=11 // pred_region
          _
        $region64: #{tpu_custom_call.1} parent=11 // pred_fallthru
          _
        // Predicated region
        $region65: #{tpu_custom_call.1} parent=11 // pred_check
          %p536 = pneg %p430
        $region66: #{tpu_custom_call.1} parent=11 // pred_check_branch
          %538 = sbr.rel (%p536) target = $region68
        $region67: #{tpu_custom_call.1} parent=11 // pred_region
          _
        $region68: #{tpu_custom_call.1} parent=11 // pred_fallthru
          _
      $region12: #{tpu_custom_call.1} parent=5 // pred_fallthru
        _
      %p539 = scmp.lt.s32.totalorder %s32, 2
      // Predicated region
      $region69: #{tpu_custom_call.1} parent=5 // pred_check
        %p540 = pneg %p539
      $region70: #{tpu_custom_call.1} parent=5 // pred_check_branch
        %542 = sbr.rel (%p540) target = $region72
      $region71: #{tpu_custom_call.1} parent=5 // pred_region
        // Predicated region
        $region73: #{tpu_custom_call.1} parent=71 // pred_check
          %p543 = pneg %p52
        $region74: #{tpu_custom_call.1} parent=71 // pred_check_branch
          %545 = sbr.rel (%p543) target = $region76
        $region75: #{tpu_custom_call.1} parent=71 // pred_region
          %p546 = scmp.lt.s32.totalorder %s32, 1
          %s547 = scalar_select %p546, %s32, 1
          %s548 = smul.addr %s547, 8
          %s549 = scalar_lea.vmem %s0, %s548
        $region76: #{tpu_custom_call.1} parent=71 // pred_fallthru
          _
        // Predicated region
        $region77: #{tpu_custom_call.1} parent=71 // pred_check
          %p550 = pneg %p78
        $region78: #{tpu_custom_call.1} parent=71 // pred_check_branch
          %552 = sbr.rel (%p550) target = $region80
        $region79: #{tpu_custom_call.1} parent=71 // pred_region
          %s553 = smul.u32 16, %s32
          %p554 = scmp.lt.s32.totalorder %s553, 31
          %s555 = scalar_select %p554, %s553, 31
          %s556 = smul.addr %s555, 8
          %s557 = scalar_lea.vmem %s1, %s556
          %s558 = smul.u32 16, %s32
        $region80: #{tpu_custom_call.1} parent=71 // pred_fallthru
          _
        // Predicated region
        $region81: #{tpu_custom_call.1} parent=71 // pred_check
          %p559 = pneg %p104
        $region82: #{tpu_custom_call.1} parent=71 // pred_check_branch
          %561 = sbr.rel (%p559) target = $region84
        $region83: #{tpu_custom_call.1} parent=71 // pred_region
          %p562 = scmp.lt.s32.totalorder %s32, 1
          %s563 = scalar_select %p562, %s32, 1
          %s564 = smul.addr %s563, 8
          %s565 = scalar_lea.vmem %s2, %s564
        $region84: #{tpu_custom_call.1} parent=71 // pred_fallthru
          _
        // Predicated region
        $region85: #{tpu_custom_call.1} parent=71 // pred_check
          %p566 = pneg %p130
        $region86: #{tpu_custom_call.1} parent=71 // pred_check_branch
          %568 = sbr.rel (%p566) target = $region88
        $region87: #{tpu_custom_call.1} parent=71 // pred_region
          %s569 = smul.u32 16, %s32
          %p570 = scmp.lt.s32.totalorder %s569, 31
          %s571 = scalar_select %p570, %s569, 31
          %s572 = smul.addr %s571, 8
          %s573 = scalar_lea.vmem %s3, %s572
          %s574 = smul.u32 16, %s32
        $region88: #{tpu_custom_call.1} parent=71 // pred_fallthru
          _
      $region72: #{tpu_custom_call.1} parent=5 // pred_fallthru
        _
      %p575 = scmp.le.s32.totalorder 1, %s32
      %p576 = scmp.lt.s32.totalorder %s32, 3
      %p577 = pnand %p575, %p576
      %p578 = pneg %p577
      // Predicated region
      $region89: #{tpu_custom_call.1} parent=5 // pred_check
        _
      $region90: #{tpu_custom_call.1} parent=5 // pred_check_branch
        %580 = sbr.rel (%p577) target = $region92
      $region91: #{tpu_custom_call.1} parent=5 // pred_region
        %s581 = ssub.s32 %s32, 1
        %p582 = scmp.lt.s32.totalorder %s37, 1
        %s583 = scalar_select %p582, %s37, 1
        %s584 = smul.addr %s583, 8
        %s585 = scalar_lea.vmem %s0, %s584
        %p586 = pneg %p58
        %p587 = pneg %p55
        %s588 = smul.u32 16, %s37
        %p589 = scmp.lt.s32.totalorder %s588, 31
        %s590 = scalar_select %p589, %s588, 31
        %s591 = smul.addr %s590, 8
        %s592 = scalar_lea.vmem %s1, %s591
        %p593 = pneg %p84
        %p594 = pneg %p81
        %p595 = scmp.lt.s32.totalorder %s37, 1
        %s596 = scalar_select %p595, %s37, 1
        %s597 = smul.addr %s596, 8
        %s598 = scalar_lea.vmem %s2, %s597
        %p599 = pneg %p110
        %p600 = pneg %p107
        %s601 = smul.u32 16, %s37
        %p602 = scmp.lt.s32.totalorder %s601, 31
        %s603 = scalar_select %p602, %s601, 31
        %s604 = smul.addr %s603, 8
        %s605 = scalar_lea.vmem %s3, %s604
        %p606 = pneg %p136
        %p607 = pneg %p133
        %p608 = pneg %p157
        %p609 = pneg %p154
        %p610 = pneg %p178
        %p611 = pneg %p175
        %p612 = pneg %p199
        %p613 = pneg %p196
        %p614 = pneg %p220
        %p615 = pneg %p217
        %p616 = pneg %p241
        %p617 = pneg %p238
        %p618 = pneg %p262
        %p619 = pneg %p259
        %p620 = pneg %p283
        %p621 = pneg %p280
        %p622 = pneg %p304
        %p623 = pneg %p301
        %p624 = pneg %p325
        %p625 = pneg %p322
        %p626 = pneg %p346
        %p627 = pneg %p343
        %p628 = pneg %p367
        %p629 = pneg %p364
        %p630 = pneg %p388
        %p631 = pneg %p385
        %p632 = pneg %p409
        %p633 = pneg %p406
        %p634 = pneg %p430
        %p635 = pneg %p427
        %p636 = pneg %p456
        %p637 = pneg %p453
        %s638 = sand.u32 %s443, 1
        %s639 = scalar_lea.sflag [#allocation3], %s638
        %s640 = sand.u32 %s443, 1
        %s641 = smul.addr %s640, 8
        %s642 = scalar_lea.vmem [#allocation2], %s641
        %p643 = pneg %p482
        %p644 = pneg %p479
        %s645 = sand.u32 %s469, 1
        %s646 = scalar_lea.sflag [#allocation5], %s645
        %s647 = sand.u32 %s469, 1
        %s648 = smul.addr %s647, 8
        %s649 = scalar_lea.vmem [#allocation4], %s648
        %p650 = scmp.lt.s32.totalorder %s37, 1
        %s651 = scalar_select %p650, %s37, 1
        %s652 = smul.addr %s651, 8
        %s653 = scalar_lea.vmem %s0, %s652
        %s654 = smul.u32 16, %s37
        %p655 = scmp.lt.s32.totalorder %s654, 31
        %s656 = scalar_select %p655, %s654, 31
        %s657 = smul.addr %s656, 8
        %s658 = scalar_lea.vmem %s1, %s657
        %s659 = smul.u32 16, %s37
        %p660 = scmp.lt.s32.totalorder %s37, 1
        %s661 = scalar_select %p660, %s37, 1
        %s662 = smul.addr %s661, 8
        %s663 = scalar_lea.vmem %s2, %s662
        %s664 = smul.u32 16, %s37
        %p665 = scmp.lt.s32.totalorder %s664, 31
        %s666 = scalar_select %p665, %s664, 31
        %s667 = smul.addr %s666, 8
        %s668 = scalar_lea.vmem %s3, %s667
        %s669 = smul.u32 16, %s37
        %v670 = vld [vmem:[%s653] sm:$0xff]
        %v671 = vld [vmem:[%s663] sm:$0xff]
        %v672 = vld [vmem:[%s658] sm:$0xff]
        %v673 = vld [vmem:[%s658 + $0x8] sm:$0xff]
        %v674 = vld [vmem:[%s658 + $0x10] sm:$0xff]
        %v675 = vld [vmem:[%s658 + $0x18] sm:$0xff]
        %v676 = vld [vmem:[%s658 + $0x20] sm:$0xff]
        %v677 = vld [vmem:[%s658 + $0x28] sm:$0xff]
        %v678 = vld [vmem:[%s658 + $0x30] sm:$0xff]
        %v679 = vld [vmem:[%s658 + $0x38] sm:$0xff]
        %v680 = vld [vmem:[%s658 + $0x40] sm:$0xff]
        %v681 = vld [vmem:[%s658 + $0x48] sm:$0xff]
        %v682 = vld [vmem:[%s658 + $0x50] sm:$0xff]
        %v683 = vld [vmem:[%s658 + $0x58] sm:$0xff]
        %v684 = vld [vmem:[%s658 + $0x60] sm:$0xff]
        %v685 = vld [vmem:[%s658 + $0x68] sm:$0xff]
        %v686 = vld [vmem:[%s658 + $0x70] sm:$0xff]
        %v687 = vld [vmem:[%s658 + $0x78] sm:$0xff]
        %v688 = vld [vmem:[%s668] sm:$0xff]
        %v689 = vld [vmem:[%s668 + $0x8] sm:$0xff]
        %v690 = vld [vmem:[%s668 + $0x10] sm:$0xff]
        %v691 = vld [vmem:[%s668 + $0x18] sm:$0xff]
        %v692 = vld [vmem:[%s668 + $0x20] sm:$0xff]
        %v693 = vld [vmem:[%s668 + $0x28] sm:$0xff]
        %v694 = vld [vmem:[%s668 + $0x30] sm:$0xff]
        %v695 = vld [vmem:[%s668 + $0x38] sm:$0xff]
        %v696 = vld [vmem:[%s668 + $0x40] sm:$0xff]
        %v697 = vld [vmem:[%s668 + $0x48] sm:$0xff]
        %v698 = vld [vmem:[%s668 + $0x50] sm:$0xff]
        %v699 = vld [vmem:[%s668 + $0x58] sm:$0xff]
        %v700 = vld [vmem:[%s668 + $0x60] sm:$0xff]
        %v701 = vld [vmem:[%s668 + $0x68] sm:$0xff]
        %v702 = vld [vmem:[%s668 + $0x70] sm:$0xff]
        %v703 = vld [vmem:[%s668 + $0x78] sm:$0xff]
        %v704 = vld [vmem:[%s12] sm:$0x1]
        %v705 = vld [vmem:[%s13] sm:$0x1]
        %vm706 = vcmask 261120
        %v707 = vsel %vm706, %v670, 0.0
        %708 = vadd.xlane.f32.xlu0 %v707
        %v709 = vpop.xlane.xlu0 %708
        %v710 = vrcp.pop 32.0
        %v711 = vmul.f32 %v709, %v710
        %v712 = vsub.f32 %v670, %v711
        %v713 = vmul.f32 %v712, %v712
        %v714 = vsel %vm706, %v713, 0.0
        %715 = vadd.xlane.f32.xlu0 %v714
        %v716 = vpop.xlane.xlu0 %715
        %v717 = vmul.f32 %v716, %v710
        %v718 = vadd.f32 %v717, 1e-05
        %v719 = vrsqrt.pop %v718
        %v720 = vmul.f32 %v712, %v719
        %v722 = vlaneseq
        %v723 = vshrl.u32 %v722, 7
        %v724 = vsub.s32 0, %v723
        %v725 = vrot.slane %v704, %v724
        %v727 = vmul.f32 %v720, %v725
        %v729 = vlaneseq
        %v730 = vshrl.u32 %v729, 7
        %v731 = vsub.s32 0, %v730
        %v732 = vrot.slane %v705, %v731
        %v734 = vadd.f32 %v727, %v732
        %v735 = vld [vmem:[%s5] sm:$0x7]
        %v736 = vadd.f32 %v734, %v671
        %v737 = vadd.f32 %v672, %v688
        %v738 = vadd.f32 %v673, %v689
        %v739 = vadd.f32 %v674, %v690
        %v740 = vadd.f32 %v675, %v691
        %v741 = vadd.f32 %v676, %v692
        %v742 = vadd.f32 %v677, %v693
        %v743 = vadd.f32 %v678, %v694
        %v744 = vadd.f32 %v679, %v695
        %v745 = vadd.f32 %v680, %v696
        %v746 = vadd.f32 %v681, %v697
        %v747 = vadd.f32 %v682, %v698
        %v748 = vadd.f32 %v683, %v699
        %v749 = vadd.f32 %v684, %v700
        %v750 = vadd.f32 %v685, %v701
        %v751 = vadd.f32 %v686, %v702
        %v752 = vadd.f32 %v687, %v703
        %v753 = vld [vmem:[%s4] sm:$0xff]
        %v754 = vld [vmem:[%s4 + $0x8] sm:$0xff]
        %v755 = vld [vmem:[%s4 + $0x10] sm:$0xff]
        %v756 = vld [vmem:[%s4 + $0x18] sm:$0xff]
        %v757 = vlaneseq
        %v758 = vshrl.u32 %v757, 7
        %v759 = vsub.s32 0, %v758
        %v760 = vrot.slane %v735, %v759
        %v762 = vsel %vm706, %v736, 0
        %764 = vmatprep.subr.mxu0 0.0
        %765 = vmatpush1.msra.mxu0 0.0
        %766 = vmatprep.subr.mxu0 0.0
        %767 = vmatpush1.msra.mxu0 0.0
        %768 = vmatprep.subr.mxu0 0.0
        %769 = vmatpush1.msra.mxu0 0.0
        %770 = vmatprep.subr.mxu0 0.0
        %771 = vmatpush1.msra.mxu0 0.0
        %772 = vmatprep.subr.mxu0 0.0
        %773 = vmatpush1.msra.mxu0 0.0
        %774 = vmatprep.subr.mxu0 0.0
        %775 = vmatpush1.msra.mxu0 0.0
        %776 = vmatprep.subr.mxu0 0.0
        %777 = vmatpush1.msra.mxu0 0.0
        %778 = vmatprep.subr.mxu0 0.0
        %779 = vmatpush1.msra.mxu0 0.0
        %780 = vmatprep.subr.mxu0 0.0
        %781 = vmatpush1.msra.mxu0 0.0
        %782 = vmatprep.subr.mxu0 0.0
        %783 = vmatpush1.msra.mxu0 0.0
        %784 = vmatprep.subr.mxu0 0.0
        %785 = vmatpush1.msra.mxu0 0.0
        %786 = vmatprep.subr.mxu0 0.0
        %787 = vmatpush1.msra.mxu0 0.0
        %788 = vmatprep.subr.mxu0 0.0
        %789 = vmatpush1.msra.mxu0 %v756
        %790 = vmatprep.subr.mxu0 0.0
        %791 = vmatpush1.msra.mxu0 %v755
        %792 = vmatprep.subr.mxu0 0.0
        %793 = vmatpush1.msra.mxu0 %v754
        %794 = vmatprep.subr.mxu0 0.0
        %795 = vmatpush1.msra.mxu0 %v753
        %796 = vmatprep.subr.mxu0 0.0
        %797 = vmatpush2.msra.mxu0 0.0
        %798 = vmatprep.subr.mxu0 0.0
        %799 = vmatpush2.msra.mxu0 0.0
        %800 = vmatprep.subr.mxu0 0.0
        %801 = vmatpush2.msra.mxu0 0.0
        %802 = vmatprep.subr.mxu0 0.0
        %803 = vmatpush2.msra.mxu0 0.0
        %804 = vmatprep.subr.mxu0 0.0
        %805 = vmatpush2.msra.mxu0 0.0
        %806 = vmatprep.subr.mxu0 0.0
        %807 = vmatpush2.msra.mxu0 0.0
        %808 = vmatprep.subr.mxu0 0.0
        %809 = vmatpush2.msra.mxu0 0.0
        %810 = vmatprep.subr.mxu0 0.0
        %811 = vmatpush2.msra.mxu0 0.0
        %812 = vmatprep.subr.mxu0 0.0
        %813 = vmatpush2.msra.mxu0 0.0
        %814 = vmatprep.subr.mxu0 0.0
        %815 = vmatpush2.msra.mxu0 0.0
        %816 = vmatprep.subr.mxu0 0.0
        %817 = vmatpush2.msra.mxu0 0.0
        %818 = vmatprep.subr.mxu0 0.0
        %819 = vmatpush2.msra.mxu0 0.0
        %820 = vmatprep.subr.mxu0 0.0
        %821 = vmatpush2.msra.mxu0 0.0
        %822 = vmatprep.subr.mxu0 0.0
        %823 = vmatpush2.msra.mxu0 0.0
        %824 = vmatprep.subr.mxu0 0.0
        %825 = vmatpush2.msra.mxu0 0.0
        %826 = vmatprep.subr.mxu0 0.0
        %827 = vmatpush2.msra.mxu0 0.0
        %828 = vmatprep.mubr.f32.mxu0 0.0
        %829 = vmatmul.mubr.f32.gmra.mxu0 %v762
        %v830 = vpop.f32.mrf.mxu0
        %v831 = vadd.f32 %v760, %v830
        %v832 = vpop.f32.mrf.mxu0
        %833 = vdwg.mxu0
        %v834 = vmul.f32 %v831, 0.35355338
        %s835 = scalar_lea.vmem %s4, 32
        %v836 = vld [vmem:[%s835] sm:$0xff]
        %v837 = vld [vmem:[%s835 + $0x8] sm:$0xff]
        %v838 = vld [vmem:[%s835 + $0x10] sm:$0xff]
        %v839 = vld [vmem:[%s835 + $0x18] sm:$0xff]
        %v840 = vlaneseq
        %v841 = vshrl.u32 %v840, 7
        %v842 = vsub.s32 1, %v841
        %v843 = vrot.slane %v735, %v842
        %v845 = vsel %vm706, %v737, 0
        %v848 = vsel %vm706, %v738, 0
        %v851 = vsel %vm706, %v739, 0
        %v854 = vsel %vm706, %v740, 0
        %v857 = vsel %vm706, %v741, 0
        %v860 = vsel %vm706, %v742, 0
        %v863 = vsel %vm706, %v743, 0
        %v866 = vsel %vm706, %v744, 0
        %v869 = vsel %vm706, %v745, 0
        %v872 = vsel %vm706, %v746, 0
        %v875 = vsel %vm706, %v747, 0
        %v878 = vsel %vm706, %v748, 0
        %v881 = vsel %vm706, %v749, 0
        %v884 = vsel %vm706, %v750, 0
        %v887 = vsel %vm706, %v751, 0
        %v890 = vsel %vm706, %v752, 0
        %892 = vmatprep.subr.mxu0 0.0
        %893 = vmatpush1.msra.mxu0 0.0
        %894 = vmatprep.subr.mxu0 0.0
        %895 = vmatpush1.msra.mxu0 0.0
        %896 = vmatprep.subr.mxu0 0.0
        %897 = vmatpush1.msra.mxu0 0.0
        %898 = vmatprep.subr.mxu0 0.0
        %899 = vmatpush1.msra.mxu0 0.0
        %900 = vmatprep.subr.mxu0 0.0
        %901 = vmatpush1.msra.mxu0 0.0
        %902 = vmatprep.subr.mxu0 0.0
        %903 = vmatpush1.msra.mxu0 0.0
        %904 = vmatprep.subr.mxu0 0.0
        %905 = vmatpush1.msra.mxu0 0.0
        %906 = vmatprep.subr.mxu0 0.0
        %907 = vmatpush1.msra.mxu0 0.0
        %908 = vmatprep.subr.mxu0 0.0
        %909 = vmatpush1.msra.mxu0 0.0
        %910 = vmatprep.subr.mxu0 0.0
        %911 = vmatpush1.msra.mxu0 0.0
        %912 = vmatprep.subr.mxu0 0.0
        %913 = vmatpush1.msra.mxu0 0.0
        %914 = vmatprep.subr.mxu0 0.0
        %915 = vmatpush1.msra.mxu0 0.0
        %916 = vmatprep.subr.mxu0 0.0
        %917 = vmatpush1.msra.mxu0 %v839
        %918 = vmatprep.subr.mxu0 0.0
        %919 = vmatpush1.msra.mxu0 %v838
        %920 = vmatprep.subr.mxu0 0.0
        %921 = vmatpush1.msra.mxu0 %v837
        %922 = vmatprep.subr.mxu0 0.0
        %923 = vmatpush1.msra.mxu0 %v836
        %924 = vmatprep.subr.mxu0 0.0
        %925 = vmatpush2.msra.mxu0 0.0
        %926 = vmatprep.subr.mxu0 0.0
        %927 = vmatpush2.msra.mxu0 0.0
        %928 = vmatprep.subr.mxu0 0.0
        %929 = vmatpush2.msra.mxu0 0.0
        %930 = vmatprep.subr.mxu0 0.0
        %931 = vmatpush2.msra.mxu0 0.0
        %932 = vmatprep.subr.mxu0 0.0
        %933 = vmatpush2.msra.mxu0 0.0
        %934 = vmatprep.subr.mxu0 0.0
        %935 = vmatpush2.msra.mxu0 0.0
        %936 = vmatprep.subr.mxu0 0.0
        %937 = vmatpush2.msra.mxu0 0.0
        %938 = vmatprep.subr.mxu0 0.0
        %939 = vmatpush2.msra.mxu0 0.0
        %940 = vmatprep.subr.mxu0 0.0
        %941 = vmatpush2.msra.mxu0 0.0
        %942 = vmatprep.subr.mxu0 0.0
        %943 = vmatpush2.msra.mxu0 0.0
        %944 = vmatprep.subr.mxu0 0.0
        %945 = vmatpush2.msra.mxu0 0.0
        %946 = vmatprep.subr.mxu0 0.0
        %947 = vmatpush2.msra.mxu0 0.0
        %948 = vmatprep.subr.mxu0 0.0
        %949 = vmatpush2.msra.mxu0 0.0
        %950 = vmatprep.subr.mxu0 0.0
        %951 = vmatpush2.msra.mxu0 0.0
        %952 = vmatprep.subr.mxu0 0.0
        %953 = vmatpush2.msra.mxu0 0.0
        %954 = vmatprep.subr.mxu0 0.0
        %955 = vmatpush2.msra.mxu0 0.0
        %956 = vmatprep.mubr.f32.mxu0 0.0
        %957 = vmatmul.mubr.f32.gmra.mxu0 %v845
        %v958 = vpop.f32.mrf.mxu0
        %v959 = vadd.f32 %v843, %v958
        %v960 = vpop.f32.mrf.mxu0
        %961 = vmatprep.mubr.f32.mxu0 0.0
        %962 = vmatmul.mubr.f32.gmra.mxu0 %v848
        %v963 = vpop.f32.mrf.mxu0
        %v964 = vadd.f32 %v843, %v963
        %v965 = vpop.f32.mrf.mxu0
        %966 = vmatprep.mubr.f32.mxu0 0.0
        %967 = vmatmul.mubr.f32.gmra.mxu0 %v851
        %v968 = vpop.f32.mrf.mxu0
        %v969 = vadd.f32 %v843, %v968
        %v970 = vpop.f32.mrf.mxu0
        %971 = vmatprep.mubr.f32.mxu0 0.0
        %972 = vmatmul.mubr.f32.gmra.mxu0 %v854
        %v973 = vpop.f32.mrf.mxu0
        %v974 = vadd.f32 %v843, %v973
        %v975 = vpop.f32.mrf.mxu0
        %976 = vmatprep.mubr.f32.mxu0 0.0
        %977 = vmatmul.mubr.f32.gmra.mxu0 %v857
        %v978 = vpop.f32.mrf.mxu0
        %v979 = vadd.f32 %v843, %v978
        %v980 = vpop.f32.mrf.mxu0
        %981 = vmatprep.mubr.f32.mxu0 0.0
        %982 = vmatmul.mubr.f32.gmra.mxu0 %v860
        %v983 = vpop.f32.mrf.mxu0
        %v984 = vadd.f32 %v843, %v983
        %v985 = vpop.f32.mrf.mxu0
        %986 = vmatprep.mubr.f32.mxu0 0.0
        %987 = vmatmul.mubr.f32.gmra.mxu0 %v863
        %v988 = vpop.f32.mrf.mxu0
        %v989 = vadd.f32 %v843, %v988
        %v990 = vpop.f32.mrf.mxu0
        %991 = vmatprep.mubr.f32.mxu0 0.0
        %992 = vmatmul.mubr.f32.gmra.mxu0 %v866
        %v993 = vpop.f32.mrf.mxu0
        %v994 = vadd.f32 %v843, %v993
        %v995 = vpop.f32.mrf.mxu0
        %996 = vmatprep.mubr.f32.mxu0 0.0
        %997 = vmatmul.mubr.f32.gmra.mxu0 %v869
        %v998 = vpop.f32.mrf.mxu0
        %v999 = vadd.f32 %v843, %v998
        %v1000 = vpop.f32.mrf.mxu0
        %1001 = vmatprep.mubr.f32.mxu0 0.0
        %1002 = vmatmul.mubr.f32.gmra.mxu0 %v872
        %v1003 = vpop.f32.mrf.mxu0
        %v1004 = vadd.f32 %v843, %v1003
        %v1005 = vpop.f32.mrf.mxu0
        %1006 = vmatprep.mubr.f32.mxu0 0.0
        %1007 = vmatmul.mubr.f32.gmra.mxu0 %v875
        %v1008 = vpop.f32.mrf.mxu0
        %v1009 = vadd.f32 %v843, %v1008
        %v1010 = vpop.f32.mrf.mxu0
        %1011 = vmatprep.mubr.f32.mxu0 0.0
        %1012 = vmatmul.mubr.f32.gmra.mxu0 %v878
        %v1013 = vpop.f32.mrf.mxu0
        %v1014 = vadd.f32 %v843, %v1013
        %v1015 = vpop.f32.mrf.mxu0
        %1016 = vmatprep.mubr.f32.mxu0 0.0
        %1017 = vmatmul.mubr.f32.gmra.mxu0 %v881
        %v1018 = vpop.f32.mrf.mxu0
        %v1019 = vadd.f32 %v843, %v1018
        %v1020 = vpop.f32.mrf.mxu0
        %1021 = vmatprep.mubr.f32.mxu0 0.0
        %1022 = vmatmul.mubr.f32.gmra.mxu0 %v884
        %v1023 = vpop.f32.mrf.mxu0
        %v1024 = vadd.f32 %v843, %v1023
        %v1025 = vpop.f32.mrf.mxu0
        %1026 = vmatprep.mubr.f32.mxu0 0.0
        %1027 = vmatmul.mubr.f32.gmra.mxu0 %v887
        %v1028 = vpop.f32.mrf.mxu0
        %v1029 = vadd.f32 %v843, %v1028
        %v1030 = vpop.f32.mrf.mxu0
        %1031 = vmatprep.mubr.f32.mxu0 0.0
        %1032 = vmatmul.mubr.f32.gmra.mxu0 %v890
        %v1033 = vpop.f32.mrf.mxu0
        %v1034 = vadd.f32 %v843, %v1033
        %v1035 = vpop.f32.mrf.mxu0
        %1036 = vdwg.mxu0
        %s1037 = scalar_lea.vmem %s4, 64
        %v1038 = vld [vmem:[%s1037] sm:$0xff]
        %v1039 = vld [vmem:[%s1037 + $0x8] sm:$0xff]
        %v1040 = vld [vmem:[%s1037 + $0x10] sm:$0xff]
        %v1041 = vld [vmem:[%s1037 + $0x18] sm:$0xff]
        %v1042 = vlaneseq
        %v1043 = vshrl.u32 %v1042, 7
        %v1044 = vsub.s32 2, %v1043
        %v1045 = vrot.slane %v735, %v1044
        %v1047 = vsel %vm706, %v672, 0
        %v1050 = vsel %vm706, %v673, 0
        %v1053 = vsel %vm706, %v674, 0
        %v1056 = vsel %vm706, %v675, 0
        %v1059 = vsel %vm706, %v676, 0
        %v1062 = vsel %vm706, %v677, 0
        %v1065 = vsel %vm706, %v678, 0
        %v1068 = vsel %vm706, %v679, 0
        %v1071 = vsel %vm706, %v680, 0
        %v1074 = vsel %vm706, %v681, 0
        %v1077 = vsel %vm706, %v682, 0
        %v1080 = vsel %vm706, %v683, 0
        %v1083 = vsel %vm706, %v684, 0
        %v1086 = vsel %vm706, %v685, 0
        %v1089 = vsel %vm706, %v686, 0
        %v1092 = vsel %vm706, %v687, 0
        %1094 = vmatprep.subr.mxu0 0.0
        %1095 = vmatpush1.msra.mxu0 0.0
        %1096 = vmatprep.subr.mxu0 0.0
        %1097 = vmatpush1.msra.mxu0 0.0
        %1098 = vmatprep.subr.mxu0 0.0
        %1099 = vmatpush1.msra.mxu0 0.0
        %1100 = vmatprep.subr.mxu0 0.0
        %1101 = vmatpush1.msra.mxu0 0.0
        %1102 = vmatprep.subr.mxu0 0.0
        %1103 = vmatpush1.msra.mxu0 0.0
        %1104 = vmatprep.subr.mxu0 0.0
        %1105 = vmatpush1.msra.mxu0 0.0
        %1106 = vmatprep.subr.mxu0 0.0
        %1107 = vmatpush1.msra.mxu0 0.0
        %1108 = vmatprep.subr.mxu0 0.0
        %1109 = vmatpush1.msra.mxu0 0.0
        %1110 = vmatprep.subr.mxu0 0.0
        %1111 = vmatpush1.msra.mxu0 0.0
        %1112 = vmatprep.subr.mxu0 0.0
        %1113 = vmatpush1.msra.mxu0 0.0
        %1114 = vmatprep.subr.mxu0 0.0
        %1115 = vmatpush1.msra.mxu0 0.0
        %1116 = vmatprep.subr.mxu0 0.0
        %1117 = vmatpush1.msra.mxu0 0.0
        %1118 = vmatprep.subr.mxu0 0.0
        %1119 = vmatpush1.msra.mxu0 %v1041
        %1120 = vmatprep.subr.mxu0 0.0
        %1121 = vmatpush1.msra.mxu0 %v1040
        %1122 = vmatprep.subr.mxu0 0.0
        %1123 = vmatpush1.msra.mxu0 %v1039
        %1124 = vmatprep.subr.mxu0 0.0
        %1125 = vmatpush1.msra.mxu0 %v1038
        %1126 = vmatprep.subr.mxu0 0.0
        %1127 = vmatpush2.msra.mxu0 0.0
        %1128 = vmatprep.subr.mxu0 0.0
        %1129 = vmatpush2.msra.mxu0 0.0
        %1130 = vmatprep.subr.mxu0 0.0
        %1131 = vmatpush2.msra.mxu0 0.0
        %1132 = vmatprep.subr.mxu0 0.0
        %1133 = vmatpush2.msra.mxu0 0.0
        %1134 = vmatprep.subr.mxu0 0.0
        %1135 = vmatpush2.msra.mxu0 0.0
        %1136 = vmatprep.subr.mxu0 0.0
        %1137 = vmatpush2.msra.mxu0 0.0
        %1138 = vmatprep.subr.mxu0 0.0
        %1139 = vmatpush2.msra.mxu0 0.0
        %1140 = vmatprep.subr.mxu0 0.0
        %1141 = vmatpush2.msra.mxu0 0.0
        %1142 = vmatprep.subr.mxu0 0.0
        %1143 = vmatpush2.msra.mxu0 0.0
        %1144 = vmatprep.subr.mxu0 0.0
        %1145 = vmatpush2.msra.mxu0 0.0
        %1146 = vmatprep.subr.mxu0 0.0
        %1147 = vmatpush2.msra.mxu0 0.0
        %1148 = vmatprep.subr.mxu0 0.0
        %1149 = vmatpush2.msra.mxu0 0.0
        %1150 = vmatprep.subr.mxu0 0.0
        %1151 = vmatpush2.msra.mxu0 0.0
        %1152 = vmatprep.subr.mxu0 0.0
        %1153 = vmatpush2.msra.mxu0 0.0
        %1154 = vmatprep.subr.mxu0 0.0
        %1155 = vmatpush2.msra.mxu0 0.0
        %1156 = vmatprep.subr.mxu0 0.0
        %1157 = vmatpush2.msra.mxu0 0.0
        %1158 = vmatprep.mubr.f32.mxu0 0.0
        %1159 = vmatmul.mubr.f32.gmra.mxu0 %v1047
        %v1160 = vpop.f32.mrf.mxu0
        %v1161 = vadd.f32 %v1045, %v1160
        %v1162 = vpop.f32.mrf.mxu0
        %1163 = vmatprep.mubr.f32.mxu0 0.0
        %1164 = vmatmul.mubr.f32.gmra.mxu0 %v1050
        %v1165 = vpop.f32.mrf.mxu0
        %v1166 = vadd.f32 %v1045, %v1165
        %v1167 = vpop.f32.mrf.mxu0
        %1168 = vmatprep.mubr.f32.mxu0 0.0
        %1169 = vmatmul.mubr.f32.gmra.mxu0 %v1053
        %v1170 = vpop.f32.mrf.mxu0
        %v1171 = vadd.f32 %v1045, %v1170
        %v1172 = vpop.f32.mrf.mxu0
        %1173 = vmatprep.mubr.f32.mxu0 0.0
        %1174 = vmatmul.mubr.f32.gmra.mxu0 %v1056
        %v1175 = vpop.f32.mrf.mxu0
        %v1176 = vadd.f32 %v1045, %v1175
        %v1177 = vpop.f32.mrf.mxu0
        %1178 = vmatprep.mubr.f32.mxu0 0.0
        %1179 = vmatmul.mubr.f32.gmra.mxu0 %v1059
        %v1180 = vpop.f32.mrf.mxu0
        %v1181 = vadd.f32 %v1045, %v1180
        %v1182 = vpop.f32.mrf.mxu0
        %1183 = vmatprep.mubr.f32.mxu0 0.0
        %1184 = vmatmul.mubr.f32.gmra.mxu0 %v1062
        %v1185 = vpop.f32.mrf.mxu0
        %v1186 = vadd.f32 %v1045, %v1185
        %v1187 = vpop.f32.mrf.mxu0
        %1188 = vmatprep.mubr.f32.mxu0 0.0
        %1189 = vmatmul.mubr.f32.gmra.mxu0 %v1065
        %v1190 = vpop.f32.mrf.mxu0
        %v1191 = vadd.f32 %v1045, %v1190
        %v1192 = vpop.f32.mrf.mxu0
        %1193 = vmatprep.mubr.f32.mxu0 0.0
        %1194 = vmatmul.mubr.f32.gmra.mxu0 %v1068
        %v1195 = vpop.f32.mrf.mxu0
        %v1196 = vadd.f32 %v1045, %v1195
        %v1197 = vpop.f32.mrf.mxu0
        %1198 = vmatprep.mubr.f32.mxu0 0.0
        %1199 = vmatmul.mubr.f32.gmra.mxu0 %v1071
        %v1200 = vpop.f32.mrf.mxu0
        %v1201 = vadd.f32 %v1045, %v1200
        %v1202 = vpop.f32.mrf.mxu0
        %1203 = vmatprep.mubr.f32.mxu0 0.0
        %1204 = vmatmul.mubr.f32.gmra.mxu0 %v1074
        %v1205 = vpop.f32.mrf.mxu0
        %v1206 = vadd.f32 %v1045, %v1205
        %v1207 = vpop.f32.mrf.mxu0
        %1208 = vmatprep.mubr.f32.mxu0 0.0
        %1209 = vmatmul.mubr.f32.gmra.mxu0 %v1077
        %v1210 = vpop.f32.mrf.mxu0
        %v1211 = vadd.f32 %v1045, %v1210
        %v1212 = vpop.f32.mrf.mxu0
        %1213 = vmatprep.mubr.f32.mxu0 0.0
        %1214 = vmatmul.mubr.f32.gmra.mxu0 %v1080
        %v1215 = vpop.f32.mrf.mxu0
        %v1216 = vadd.f32 %v1045, %v1215
        %v1217 = vpop.f32.mrf.mxu0
        %1218 = vmatprep.mubr.f32.mxu0 0.0
        %1219 = vmatmul.mubr.f32.gmra.mxu0 %v1083
        %v1220 = vpop.f32.mrf.mxu0
        %v1221 = vadd.f32 %v1045, %v1220
        %v1222 = vpop.f32.mrf.mxu0
        %1223 = vmatprep.mubr.f32.mxu0 0.0
        %1224 = vmatmul.mubr.f32.gmra.mxu0 %v1086
        %v1225 = vpop.f32.mrf.mxu0
        %v1226 = vadd.f32 %v1045, %v1225
        %v1227 = vpop.f32.mrf.mxu0
        %1228 = vmatprep.mubr.f32.mxu0 0.0
        %1229 = vmatmul.mubr.f32.gmra.mxu0 %v1089
        %v1230 = vpop.f32.mrf.mxu0
        %v1231 = vadd.f32 %v1045, %v1230
        %v1232 = vpop.f32.mrf.mxu0
        %1233 = vmatprep.mubr.f32.mxu0 0.0
        %1234 = vmatmul.mubr.f32.gmra.mxu0 %v1092
        %v1235 = vpop.f32.mrf.mxu0
        %v1236 = vadd.f32 %v1045, %v1235
        %v1237 = vpop.f32.mrf.mxu0
        %1238 = vdwg.mxu0
        %v1239 = vlaneseq
        %v1240 = vand.u32 %v1239, 127
        %vm1241 = vcmp.lt.s32.totalorder %v1240, 8
        %v1242 = vsel %vm1241, 1, 0
        %v1243 = vcvt.s32.f32 %v1242
        %vm1244 = vcmask 64512
        %v1246 = vsel %vm1244, %v834, 0
        %v1249 = vsel %vm1244, %v959, 0
        %v1252 = vsel %vm1244, %v964, 0
        %v1255 = vsel %vm1244, %v969, 0
        %v1258 = vsel %vm1244, %v974, 0
        %v1261 = vsel %vm1244, %v979, 0
        %v1264 = vsel %vm1244, %v984, 0
        %v1267 = vsel %vm1244, %v989, 0
        %v1270 = vsel %vm1244, %v994, 0
        %v1273 = vsel %vm1244, %v999, 0
        %v1276 = vsel %vm1244, %v1004, 0
        %v1279 = vsel %vm1244, %v1009, 0
        %v1282 = vsel %vm1244, %v1014, 0
        %v1285 = vsel %vm1244, %v1019, 0
        %v1288 = vsel %vm1244, %v1024, 0
        %v1291 = vsel %vm1244, %v1029, 0
        %v1294 = vsel %vm1244, %v1034, 0
        %1296 = vmatprep.subr.mxu0 0.0
        %1297 = vmatpush1.xpose.msra.mxu0 %v1294
        %1298 = vmatprep.subr.mxu0 0.0
        %1299 = vmatpush1.xpose.msra.mxu0 %v1291
        %1300 = vmatprep.subr.mxu0 0.0
        %1301 = vmatpush1.xpose.msra.mxu0 %v1288
        %1302 = vmatprep.subr.mxu0 0.0
        %1303 = vmatpush1.xpose.msra.mxu0 %v1285
        %1304 = vmatprep.subr.mxu0 0.0
        %1305 = vmatpush1.xpose.msra.mxu0 %v1282
        %1306 = vmatprep.subr.mxu0 0.0
        %1307 = vmatpush1.xpose.msra.mxu0 %v1279
        %1308 = vmatprep.subr.mxu0 0.0
        %1309 = vmatpush1.xpose.msra.mxu0 %v1276
        %1310 = vmatprep.subr.mxu0 0.0
        %1311 = vmatpush1.xpose.msra.mxu0 %v1273
        %1312 = vmatprep.subr.mxu0 0.0
        %1313 = vmatpush1.xpose.msra.mxu0 %v1270
        %1314 = vmatprep.subr.mxu0 0.0
        %1315 = vmatpush1.xpose.msra.mxu0 %v1267
        %1316 = vmatprep.subr.mxu0 0.0
        %1317 = vmatpush1.xpose.msra.mxu0 %v1264
        %1318 = vmatprep.subr.mxu0 0.0
        %1319 = vmatpush1.xpose.msra.mxu0 %v1261
        %1320 = vmatprep.subr.mxu0 0.0
        %1321 = vmatpush1.xpose.msra.mxu0 %v1258
        %1322 = vmatprep.subr.mxu0 0.0
        %1323 = vmatpush1.xpose.msra.mxu0 %v1255
        %1324 = vmatprep.subr.mxu0 0.0
        %1325 = vmatpush1.xpose.msra.mxu0 %v1252
        %1326 = vmatprep.subr.mxu0 0.0
        %1327 = vmatpush1.xpose.msra.mxu0 %v1249
        %1328 = vmatprep.subr.mxu0 0.0
        %1329 = vmatpush2.xpose.msra.mxu0 0.0
        %1330 = vmatprep.subr.mxu0 0.0
        %1331 = vmatpush2.xpose.msra.mxu0 0.0
        %1332 = vmatprep.subr.mxu0 0.0
        %1333 = vmatpush2.xpose.msra.mxu0 0.0
        %1334 = vmatprep.subr.mxu0 0.0
        %1335 = vmatpush2.xpose.msra.mxu0 0.0
        %1336 = vmatprep.subr.mxu0 0.0
        %1337 = vmatpush2.xpose.msra.mxu0 0.0
        %1338 = vmatprep.subr.mxu0 0.0
        %1339 = vmatpush2.xpose.msra.mxu0 0.0
        %1340 = vmatprep.subr.mxu0 0.0
        %1341 = vmatpush2.xpose.msra.mxu0 0.0
        %1342 = vmatprep.subr.mxu0 0.0
        %1343 = vmatpush2.xpose.msra.mxu0 0.0
        %1344 = vmatprep.subr.mxu0 0.0
        %1345 = vmatpush2.xpose.msra.mxu0 0.0
        %1346 = vmatprep.subr.mxu0 0.0
        %1347 = vmatpush2.xpose.msra.mxu0 0.0
        %1348 = vmatprep.subr.mxu0 0.0
        %1349 = vmatpush2.xpose.msra.mxu0 0.0
        %1350 = vmatprep.subr.mxu0 0.0
        %1351 = vmatpush2.xpose.msra.mxu0 0.0
        %1352 = vmatprep.subr.mxu0 0.0
        %1353 = vmatpush2.xpose.msra.mxu0 0.0
        %1354 = vmatprep.subr.mxu0 0.0
        %1355 = vmatpush2.xpose.msra.mxu0 0.0
        %1356 = vmatprep.subr.mxu0 0.0
        %1357 = vmatpush2.xpose.msra.mxu0 0.0
        %1358 = vmatprep.subr.mxu0 0.0
        %1359 = vmatpush2.xpose.msra.mxu0 0.0
        %1360 = vmatprep.mubr.f32.mxu0 0.0
        %1361 = vmatmul.mubr.f32.gmra.mxu0 %v1246
        %v1362 = vpop.f32.mrf.mxu0
        %v1363 = vadd.f32 0.0, %v1362
        %v1364 = vpop.f32.mrf.mxu0
        %1365 = vdwg.mxu0
        %1366 = vmax.xlane.f32.xlu0 %v1363
        %v1367 = vpop.xlane.xlu0 %1366
        %v1368 = vsub.f32 %v1363, %v1367
        %v1369 = vmul.f32 %v1368, 1.442695
        %v1370 = vpow.pop %v1369
        %v1371 = vmul.f32 %v1370, %v1243
        %1372 = vadd.xlane.f32.xlu0 %v1371
        %v1373 = vpop.xlane.xlu0 %1372
        %v1374 = vrcp.pop %v1373
        %v1375 = vmul.f32 %v1371, %v1374
        %1376 = vmatprep.subr.mxu0 0.0
        %1377 = vmatpush1.msra.mxu0 %v1236
        %1378 = vmatprep.subr.mxu0 0.0
        %1379 = vmatpush1.msra.mxu0 %v1231
        %1380 = vmatprep.subr.mxu0 0.0
        %1381 = vmatpush1.msra.mxu0 %v1226
        %1382 = vmatprep.subr.mxu0 0.0
        %1383 = vmatpush1.msra.mxu0 %v1221
        %1384 = vmatprep.subr.mxu0 0.0
        %1385 = vmatpush1.msra.mxu0 %v1216
        %1386 = vmatprep.subr.mxu0 0.0
        %1387 = vmatpush1.msra.mxu0 %v1211
        %1388 = vmatprep.subr.mxu0 0.0
        %1389 = vmatpush1.msra.mxu0 %v1206
        %1390 = vmatprep.subr.mxu0 0.0
        %1391 = vmatpush1.msra.mxu0 %v1201
        %1392 = vmatprep.subr.mxu0 0.0
        %1393 = vmatpush1.msra.mxu0 %v1196
        %1394 = vmatprep.subr.mxu0 0.0
        %1395 = vmatpush1.msra.mxu0 %v1191
        %1396 = vmatprep.subr.mxu0 0.0
        %1397 = vmatpush1.msra.mxu0 %v1186
        %1398 = vmatprep.subr.mxu0 0.0
        %1399 = vmatpush1.msra.mxu0 %v1181
        %1400 = vmatprep.subr.mxu0 0.0
        %1401 = vmatpush1.msra.mxu0 %v1176
        %1402 = vmatprep.subr.mxu0 0.0
        %1403 = vmatpush1.msra.mxu0 %v1171
        %1404 = vmatprep.subr.mxu0 0.0
        %1405 = vmatpush1.msra.mxu0 %v1166
        %1406 = vmatprep.subr.mxu0 0.0
        %1407 = vmatpush1.msra.mxu0 %v1161
        %1408 = vmatprep.subr.mxu0 0.0
        %1409 = vmatpush2.msra.mxu0 0.0
        %1410 = vmatprep.subr.mxu0 0.0
        %1411 = vmatpush2.msra.mxu0 0.0
        %1412 = vmatprep.subr.mxu0 0.0
        %1413 = vmatpush2.msra.mxu0 0.0
        %1414 = vmatprep.subr.mxu0 0.0
        %1415 = vmatpush2.msra.mxu0 0.0
        %1416 = vmatprep.subr.mxu0 0.0
        %1417 = vmatpush2.msra.mxu0 0.0
        %1418 = vmatprep.subr.mxu0 0.0
        %1419 = vmatpush2.msra.mxu0 0.0
        %1420 = vmatprep.subr.mxu0 0.0
        %1421 = vmatpush2.msra.mxu0 0.0
        %1422 = vmatprep.subr.mxu0 0.0
        %1423 = vmatpush2.msra.mxu0 0.0
        %1424 = vmatprep.subr.mxu0 0.0
        %1425 = vmatpush2.msra.mxu0 0.0
        %1426 = vmatprep.subr.mxu0 0.0
        %1427 = vmatpush2.msra.mxu0 0.0
        %1428 = vmatprep.subr.mxu0 0.0
        %1429 = vmatpush2.msra.mxu0 0.0
        %1430 = vmatprep.subr.mxu0 0.0
        %1431 = vmatpush2.msra.mxu0 0.0
        %1432 = vmatprep.subr.mxu0 0.0
        %1433 = vmatpush2.msra.mxu0 0.0
        %1434 = vmatprep.subr.mxu0 0.0
        %1435 = vmatpush2.msra.mxu0 0.0
        %1436 = vmatprep.subr.mxu0 0.0
        %1437 = vmatpush2.msra.mxu0 0.0
        %1438 = vmatprep.subr.mxu0 0.0
        %1439 = vmatpush2.msra.mxu0 0.0
        %1440 = vmatprep.mubr.f32.mxu0 0.0
        %1441 = vmatmul.mubr.f32.gmra.mxu0 %v1375
        %v1442 = vpop.f32.mrf.mxu0
        %v1443 = vadd.f32 0.0, %v1442
        %v1444 = vpop.f32.mrf.mxu0
        %1445 = vdwg.mxu0
        %1446 = vrot.lane.b32.xlu0 %v834, 120
        %v1447 = vpop.permute.xlu0 %1446
        %1448 = vrot.lane.b32.xlu0 %v959, 120
        %v1449 = vpop.permute.xlu0 %1448
        %1450 = vrot.lane.b32.xlu0 %v964, 120
        %v1451 = vpop.permute.xlu0 %1450
        %1452 = vrot.lane.b32.xlu0 %v969, 120
        %v1453 = vpop.permute.xlu0 %1452
        %1454 = vrot.lane.b32.xlu0 %v974, 120
        %v1455 = vpop.permute.xlu0 %1454
        %1456 = vrot.lane.b32.xlu0 %v979, 120
        %v1457 = vpop.permute.xlu0 %1456
        %1458 = vrot.lane.b32.xlu0 %v984, 120
        %v1459 = vpop.permute.xlu0 %1458
        %1460 = vrot.lane.b32.xlu0 %v989, 120
        %v1461 = vpop.permute.xlu0 %1460
        %1462 = vrot.lane.b32.xlu0 %v994, 120
        %v1463 = vpop.permute.xlu0 %1462
        %1464 = vrot.lane.b32.xlu0 %v999, 120
        %v1465 = vpop.permute.xlu0 %1464
        %1466 = vrot.lane.b32.xlu0 %v1004, 120
        %v1467 = vpop.permute.xlu0 %1466
        %1468 = vrot.lane.b32.xlu0 %v1009, 120
        %v1469 = vpop.permute.xlu0 %1468
        %1470 = vrot.lane.b32.xlu0 %v1014, 120
        %v1471 = vpop.permute.xlu0 %1470
        %1472 = vrot.lane.b32.xlu0 %v1019, 120
        %v1473 = vpop.permute.xlu0 %1472
        %1474 = vrot.lane.b32.xlu0 %v1024, 120
        %v1475 = vpop.permute.xlu0 %1474
        %1476 = vrot.lane.b32.xlu0 %v1029, 120
        %v1477 = vpop.permute.xlu0 %1476
        %1478 = vrot.lane.b32.xlu0 %v1034, 120
        %v1479 = vpop.permute.xlu0 %1478
        %v1480 = vsel %vm1244, %v1447, 0
        %v1482 = vsel %vm1244, %v1449, 0
        %v1484 = vsel %vm1244, %v1451, 0
        %v1486 = vsel %vm1244, %v1453, 0
        %v1488 = vsel %vm1244, %v1455, 0
        %v1490 = vsel %vm1244, %v1457, 0
        %v1492 = vsel %vm1244, %v1459, 0
        %v1494 = vsel %vm1244, %v1461, 0
        %v1496 = vsel %vm1244, %v1463, 0
        %v1498 = vsel %vm1244, %v1465, 0
        %v1500 = vsel %vm1244, %v1467, 0
        %v1502 = vsel %vm1244, %v1469, 0
        %v1504 = vsel %vm1244, %v1471, 0
        %v1506 = vsel %vm1244, %v1473, 0
        %v1508 = vsel %vm1244, %v1475, 0
        %v1510 = vsel %vm1244, %v1477, 0
        %v1512 = vsel %vm1244, %v1479, 0
        %1514 = vmatprep.subr.mxu0 0.0
        %1515 = vmatpush1.xpose.msra.mxu0 %v1512
        %1516 = vmatprep.subr.mxu0 0.0
        %1517 = vmatpush1.xpose.msra.mxu0 %v1510
        %1518 = vmatprep.subr.mxu0 0.0
        %1519 = vmatpush1.xpose.msra.mxu0 %v1508
        %1520 = vmatprep.subr.mxu0 0.0
        %1521 = vmatpush1.xpose.msra.mxu0 %v1506
        %1522 = vmatprep.subr.mxu0 0.0
        %1523 = vmatpush1.xpose.msra.mxu0 %v1504
        %1524 = vmatprep.subr.mxu0 0.0
        %1525 = vmatpush1.xpose.msra.mxu0 %v1502
        %1526 = vmatprep.subr.mxu0 0.0
        %1527 = vmatpush1.xpose.msra.mxu0 %v1500
        %1528 = vmatprep.subr.mxu0 0.0
        %1529 = vmatpush1.xpose.msra.mxu0 %v1498
        %1530 = vmatprep.subr.mxu0 0.0
        %1531 = vmatpush1.xpose.msra.mxu0 %v1496
        %1532 = vmatprep.subr.mxu0 0.0
        %1533 = vmatpush1.xpose.msra.mxu0 %v1494
        %1534 = vmatprep.subr.mxu0 0.0
        %1535 = vmatpush1.xpose.msra.mxu0 %v1492
        %1536 = vmatprep.subr.mxu0 0.0
        %1537 = vmatpush1.xpose.msra.mxu0 %v1490
        %1538 = vmatprep.subr.mxu0 0.0
        %1539 = vmatpush1.xpose.msra.mxu0 %v1488
        %1540 = vmatprep.subr.mxu0 0.0
        %1541 = vmatpush1.xpose.msra.mxu0 %v1486
        %1542 = vmatprep.subr.mxu0 0.0
        %1543 = vmatpush1.xpose.msra.mxu0 %v1484
        %1544 = vmatprep.subr.mxu0 0.0
        %1545 = vmatpush1.xpose.msra.mxu0 %v1482
        %1546 = vmatprep.subr.mxu0 0.0
        %1547 = vmatpush2.xpose.msra.mxu0 0.0
        %1548 = vmatprep.subr.mxu0 0.0
        %1549 = vmatpush2.xpose.msra.mxu0 0.0
        %1550 = vmatprep.subr.mxu0 0.0
        %1551 = vmatpush2.xpose.msra.mxu0 0.0
        %1552 = vmatprep.subr.mxu0 0.0
        %1553 = vmatpush2.xpose.msra.mxu0 0.0
        %1554 = vmatprep.subr.mxu0 0.0
        %1555 = vmatpush2.xpose.msra.mxu0 0.0
        %1556 = vmatprep.subr.mxu0 0.0
        %1557 = vmatpush2.xpose.msra.mxu0 0.0
        %1558 = vmatprep.subr.mxu0 0.0
        %1559 = vmatpush2.xpose.msra.mxu0 0.0
        %1560 = vmatprep.subr.mxu0 0.0
        %1561 = vmatpush2.xpose.msra.mxu0 0.0
        %1562 = vmatprep.subr.mxu0 0.0
        %1563 = vmatpush2.xpose.msra.mxu0 0.0
        %1564 = vmatprep.subr.mxu0 0.0
        %1565 = vmatpush2.xpose.msra.mxu0 0.0
        %1566 = vmatprep.subr.mxu0 0.0
        %1567 = vmatpush2.xpose.msra.mxu0 0.0
        %1568 = vmatprep.subr.mxu0 0.0
        %1569 = vmatpush2.xpose.msra.mxu0 0.0
        %1570 = vmatprep.subr.mxu0 0.0
        %1571 = vmatpush2.xpose.msra.mxu0 0.0
        %1572 = vmatprep.subr.mxu0 0.0
        %1573 = vmatpush2.xpose.msra.mxu0 0.0
        %1574 = vmatprep.subr.mxu0 0.0
        %1575 = vmatpush2.xpose.msra.mxu0 0.0
        %1576 = vmatprep.subr.mxu0 0.0
        %1577 = vmatpush2.xpose.msra.mxu0 0.0
        %1578 = vmatprep.mubr.f32.mxu0 0.0
        %1579 = vmatmul.mubr.f32.gmra.mxu0 %v1480
        %v1580 = vpop.f32.mrf.mxu0
        %v1581 = vadd.f32 0.0, %v1580
        %v1582 = vpop.f32.mrf.mxu0
        %1583 = vdwg.mxu0
        %1584 = vmax.xlane.f32.xlu0 %v1581
        %v1585 = vpop.xlane.xlu0 %1584
        %v1586 = vsub.f32 %v1581, %v1585
        %v1587 = vmul.f32 %v1586, 1.442695
        %v1588 = vpow.pop %v1587
        %v1589 = vmul.f32 %v1588, %v1243
        %1590 = vadd.xlane.f32.xlu0 %v1589
        %v1591 = vpop.xlane.xlu0 %1590
        %v1592 = vrcp.pop %v1591
        %v1593 = vmul.f32 %v1589, %v1592
        %v1594 = vadd.f32 %v1375, %v1593
        %1611 = vrot.lane.b32.xlu0 %v1161, 120
        %v1612 = vpop.permute.xlu0 %1611
        %1613 = vrot.lane.b32.xlu0 %v1166, 120
        %v1614 = vpop.permute.xlu0 %1613
        %1615 = vrot.lane.b32.xlu0 %v1171, 120
        %v1616 = vpop.permute.xlu0 %1615
        %1617 = vrot.lane.b32.xlu0 %v1176, 120
        %v1618 = vpop.permute.xlu0 %1617
        %1619 = vrot.lane.b32.xlu0 %v1181, 120
        %v1620 = vpop.permute.xlu0 %1619
        %1621 = vrot.lane.b32.xlu0 %v1186, 120
        %v1622 = vpop.permute.xlu0 %1621
        %1623 = vrot.lane.b32.xlu0 %v1191, 120
        %v1624 = vpop.permute.xlu0 %1623
        %1625 = vrot.lane.b32.xlu0 %v1196, 120
        %v1626 = vpop.permute.xlu0 %1625
        %1627 = vrot.lane.b32.xlu0 %v1201, 120
        %v1628 = vpop.permute.xlu0 %1627
        %1629 = vrot.lane.b32.xlu0 %v1206, 120
        %v1630 = vpop.permute.xlu0 %1629
        %1631 = vrot.lane.b32.xlu0 %v1211, 120
        %v1632 = vpop.permute.xlu0 %1631
        %1633 = vrot.lane.b32.xlu0 %v1216, 120
        %v1634 = vpop.permute.xlu0 %1633
        %1635 = vrot.lane.b32.xlu0 %v1221, 120
        %v1636 = vpop.permute.xlu0 %1635
        %1637 = vrot.lane.b32.xlu0 %v1226, 120
        %v1638 = vpop.permute.xlu0 %1637
        %1639 = vrot.lane.b32.xlu0 %v1231, 120
        %v1640 = vpop.permute.xlu0 %1639
        %1641 = vrot.lane.b32.xlu0 %v1236, 120
        %v1642 = vpop.permute.xlu0 %1641
        %1659 = vmatprep.subr.mxu0 0.0
        %1660 = vmatpush1.msra.mxu0 %v1642
        %1661 = vmatprep.subr.mxu0 0.0
        %1662 = vmatpush1.msra.mxu0 %v1640
        %1663 = vmatprep.subr.mxu0 0.0
        %1664 = vmatpush1.msra.mxu0 %v1638
        %1665 = vmatprep.subr.mxu0 0.0
        %1666 = vmatpush1.msra.mxu0 %v1636
        %1667 = vmatprep.subr.mxu0 0.0
        %1668 = vmatpush1.msra.mxu0 %v1634
        %1669 = vmatprep.subr.mxu0 0.0
        %1670 = vmatpush1.msra.mxu0 %v1632
        %1671 = vmatprep.subr.mxu0 0.0
        %1672 = vmatpush1.msra.mxu0 %v1630
        %1673 = vmatprep.subr.mxu0 0.0
        %1674 = vmatpush1.msra.mxu0 %v1628
        %1675 = vmatprep.subr.mxu0 0.0
        %1676 = vmatpush1.msra.mxu0 %v1626
        %1677 = vmatprep.subr.mxu0 0.0
        %1678 = vmatpush1.msra.mxu0 %v1624
        %1679 = vmatprep.subr.mxu0 0.0
        %1680 = vmatpush1.msra.mxu0 %v1622
        %1681 = vmatprep.subr.mxu0 0.0
        %1682 = vmatpush1.msra.mxu0 %v1620
        %1683 = vmatprep.subr.mxu0 0.0
        %1684 = vmatpush1.msra.mxu0 %v1618
        %1685 = vmatprep.subr.mxu0 0.0
        %1686 = vmatpush1.msra.mxu0 %v1616
        %1687 = vmatprep.subr.mxu0 0.0
        %1688 = vmatpush1.msra.mxu0 %v1614
        %1689 = vmatprep.subr.mxu0 0.0
        %1690 = vmatpush1.msra.mxu0 %v1612
        %1691 = vmatprep.subr.mxu0 0.0
        %1692 = vmatpush2.msra.mxu0 0.0
        %1693 = vmatprep.subr.mxu0 0.0
        %1694 = vmatpush2.msra.mxu0 0.0
        %1695 = vmatprep.subr.mxu0 0.0
        %1696 = vmatpush2.msra.mxu0 0.0
        %1697 = vmatprep.subr.mxu0 0.0
        %1698 = vmatpush2.msra.mxu0 0.0
        %1699 = vmatprep.subr.mxu0 0.0
        %1700 = vmatpush2.msra.mxu0 0.0
        %1701 = vmatprep.subr.mxu0 0.0
        %1702 = vmatpush2.msra.mxu0 0.0
        %1703 = vmatprep.subr.mxu0 0.0
        %1704 = vmatpush2.msra.mxu0 0.0
        %1705 = vmatprep.subr.mxu0 0.0
        %1706 = vmatpush2.msra.mxu0 0.0
        %1707 = vmatprep.subr.mxu0 0.0
        %1708 = vmatpush2.msra.mxu0 0.0
        %1709 = vmatprep.subr.mxu0 0.0
        %1710 = vmatpush2.msra.mxu0 0.0
        %1711 = vmatprep.subr.mxu0 0.0
        %1712 = vmatpush2.msra.mxu0 0.0
        %1713 = vmatprep.subr.mxu0 0.0
        %1714 = vmatpush2.msra.mxu0 0.0
        %1715 = vmatprep.subr.mxu0 0.0
        %1716 = vmatpush2.msra.mxu0 0.0
        %1717 = vmatprep.subr.mxu0 0.0
        %1718 = vmatpush2.msra.mxu0 0.0
        %1719 = vmatprep.subr.mxu0 0.0
        %1720 = vmatpush2.msra.mxu0 0.0
        %1721 = vmatprep.subr.mxu0 0.0
        %1722 = vmatpush2.msra.mxu0 0.0
        %1723 = vmatprep.mubr.f32.mxu0 0.0
        %1724 = vmatmul.mubr.f32.gmra.mxu0 %v1593
        %v1725 = vpop.f32.mrf.mxu0
        %v1726 = vadd.f32 0.0, %v1725
        %v1727 = vpop.f32.mrf.mxu0
        %1728 = vdwg.mxu0
        %1729 = vrot.lane.b32.xlu0 %v834, 112
        %v1730 = vpop.permute.xlu0 %1729
        %1731 = vrot.lane.b32.xlu0 %v959, 112
        %v1732 = vpop.permute.xlu0 %1731
        %1733 = vrot.lane.b32.xlu0 %v964, 112
        %v1734 = vpop.permute.xlu0 %1733
        %1735 = vrot.lane.b32.xlu0 %v969, 112
        %v1736 = vpop.permute.xlu0 %1735
        %1737 = vrot.lane.b32.xlu0 %v974, 112
        %v1738 = vpop.permute.xlu0 %1737
        %1739 = vrot.lane.b32.xlu0 %v979, 112
        %v1740 = vpop.permute.xlu0 %1739
        %1741 = vrot.lane.b32.xlu0 %v984, 112
        %v1742 = vpop.permute.xlu0 %1741
        %1743 = vrot.lane.b32.xlu0 %v989, 112
        %v1744 = vpop.permute.xlu0 %1743
        %1745 = vrot.lane.b32.xlu0 %v994, 112
        %v1746 = vpop.permute.xlu0 %1745
        %1747 = vrot.lane.b32.xlu0 %v999, 112
        %v1748 = vpop.permute.xlu0 %1747
        %1749 = vrot.lane.b32.xlu0 %v1004, 112
        %v1750 = vpop.permute.xlu0 %1749
        %1751 = vrot.lane.b32.xlu0 %v1009, 112
        %v1752 = vpop.permute.xlu0 %1751
        %1753 = vrot.lane.b32.xlu0 %v1014, 112
        %v1754 = vpop.permute.xlu0 %1753
        %1755 = vrot.lane.b32.xlu0 %v1019, 112
        %v1756 = vpop.permute.xlu0 %1755
        %1757 = vrot.lane.b32.xlu0 %v1024, 112
        %v1758 = vpop.permute.xlu0 %1757
        %1759 = vrot.lane.b32.xlu0 %v1029, 112
        %v1760 = vpop.permute.xlu0 %1759
        %1761 = vrot.lane.b32.xlu0 %v1034, 112
        %v1762 = vpop.permute.xlu0 %1761
        %v1763 = vsel %vm1244, %v1730, 0
        %v1765 = vsel %vm1244, %v1732, 0
        %v1767 = vsel %vm1244, %v1734, 0
        %v1769 = vsel %vm1244, %v1736, 0
        %v1771 = vsel %vm1244, %v1738, 0
        %v1773 = vsel %vm1244, %v1740, 0
        %v1775 = vsel %vm1244, %v1742, 0
        %v1777 = vsel %vm1244, %v1744, 0
        %v1779 = vsel %vm1244, %v1746, 0
        %v1781 = vsel %vm1244, %v1748, 0
        %v1783 = vsel %vm1244, %v1750, 0
        %v1785 = vsel %vm1244, %v1752, 0
        %v1787 = vsel %vm1244, %v1754, 0
        %v1789 = vsel %vm1244, %v1756, 0
        %v1791 = vsel %vm1244, %v1758, 0
        %v1793 = vsel %vm1244, %v1760, 0
        %v1795 = vsel %vm1244, %v1762, 0
        %1797 = vmatprep.subr.mxu0 0.0
        %1798 = vmatpush1.xpose.msra.mxu0 %v1795
        %1799 = vmatprep.subr.mxu0 0.0
        %1800 = vmatpush1.xpose.msra.mxu0 %v1793
        %1801 = vmatprep.subr.mxu0 0.0
        %1802 = vmatpush1.xpose.msra.mxu0 %v1791
        %1803 = vmatprep.subr.mxu0 0.0
        %1804 = vmatpush1.xpose.msra.mxu0 %v1789
        %1805 = vmatprep.subr.mxu0 0.0
        %1806 = vmatpush1.xpose.msra.mxu0 %v1787
        %1807 = vmatprep.subr.mxu0 0.0
        %1808 = vmatpush1.xpose.msra.mxu0 %v1785
        %1809 = vmatprep.subr.mxu0 0.0
        %1810 = vmatpush1.xpose.msra.mxu0 %v1783
        %1811 = vmatprep.subr.mxu0 0.0
        %1812 = vmatpush1.xpose.msra.mxu0 %v1781
        %1813 = vmatprep.subr.mxu0 0.0
        %1814 = vmatpush1.xpose.msra.mxu0 %v1779
        %1815 = vmatprep.subr.mxu0 0.0
        %1816 = vmatpush1.xpose.msra.mxu0 %v1777
        %1817 = vmatprep.subr.mxu0 0.0
        %1818 = vmatpush1.xpose.msra.mxu0 %v1775
        %1819 = vmatprep.subr.mxu0 0.0
        %1820 = vmatpush1.xpose.msra.mxu0 %v1773
        %1821 = vmatprep.subr.mxu0 0.0
        %1822 = vmatpush1.xpose.msra.mxu0 %v1771
        %1823 = vmatprep.subr.mxu0 0.0
        %1824 = vmatpush1.xpose.msra.mxu0 %v1769
        %1825 = vmatprep.subr.mxu0 0.0
        %1826 = vmatpush1.xpose.msra.mxu0 %v1767
        %1827 = vmatprep.subr.mxu0 0.0
        %1828 = vmatpush1.xpose.msra.mxu0 %v1765
        %1829 = vmatprep.subr.mxu0 0.0
        %1830 = vmatpush2.xpose.msra.mxu0 0.0
        %1831 = vmatprep.subr.mxu0 0.0
        %1832 = vmatpush2.xpose.msra.mxu0 0.0
        %1833 = vmatprep.subr.mxu0 0.0
        %1834 = vmatpush2.xpose.msra.mxu0 0.0
        %1835 = vmatprep.subr.mxu0 0.0
        %1836 = vmatpush2.xpose.msra.mxu0 0.0
        %1837 = vmatprep.subr.mxu0 0.0
        %1838 = vmatpush2.xpose.msra.mxu0 0.0
        %1839 = vmatprep.subr.mxu0 0.0
        %1840 = vmatpush2.xpose.msra.mxu0 0.0
        %1841 = vmatprep.subr.mxu0 0.0
        %1842 = vmatpush2.xpose.msra.mxu0 0.0
        %1843 = vmatprep.subr.mxu0 0.0
        %1844 = vmatpush2.xpose.msra.mxu0 0.0
        %1845 = vmatprep.subr.mxu0 0.0
        %1846 = vmatpush2.xpose.msra.mxu0 0.0
        %1847 = vmatprep.subr.mxu0 0.0
        %1848 = vmatpush2.xpose.msra.mxu0 0.0
        %1849 = vmatprep.subr.mxu0 0.0
        %1850 = vmatpush2.xpose.msra.mxu0 0.0
        %1851 = vmatprep.subr.mxu0 0.0
        %1852 = vmatpush2.xpose.msra.mxu0 0.0
        %1853 = vmatprep.subr.mxu0 0.0
        %1854 = vmatpush2.xpose.msra.mxu0 0.0
        %1855 = vmatprep.subr.mxu0 0.0
        %1856 = vmatpush2.xpose.msra.mxu0 0.0
        %1857 = vmatprep.subr.mxu0 0.0
        %1858 = vmatpush2.xpose.msra.mxu0 0.0
        %1859 = vmatprep.subr.mxu0 0.0
        %1860 = vmatpush2.xpose.msra.mxu0 0.0
        %1861 = vmatprep.mubr.f32.mxu0 0.0
        %1862 = vmatmul.mubr.f32.gmra.mxu0 %v1763
        %v1863 = vpop.f32.mrf.mxu0
        %v1864 = vadd.f32 0.0, %v1863
        %v1865 = vpop.f32.mrf.mxu0
        %1866 = vdwg.mxu0
        %1867 = vmax.xlane.f32.xlu0 %v1864
        %v1868 = vpop.xlane.xlu0 %1867
        %v1869 = vsub.f32 %v1864, %v1868
        %v1870 = vmul.f32 %v1869, 1.442695
        %v1871 = vpow.pop %v1870
        %v1872 = vmul.f32 %v1871, %v1243
        %1873 = vadd.xlane.f32.xlu0 %v1872
        %v1874 = vpop.xlane.xlu0 %1873
        %v1875 = vrcp.pop %v1874
        %v1876 = vmul.f32 %v1872, %v1875
        %v1877 = vadd.f32 %v1594, %v1876
        %1878 = vrot.lane.b32.xlu0 %v1161, 112
        %v1879 = vpop.permute.xlu0 %1878
        %1880 = vrot.lane.b32.xlu0 %v1166, 112
        %v1881 = vpop.permute.xlu0 %1880
        %1882 = vrot.lane.b32.xlu0 %v1171, 112
        %v1883 = vpop.permute.xlu0 %1882
        %1884 = vrot.lane.b32.xlu0 %v1176, 112
        %v1885 = vpop.permute.xlu0 %1884
        %1886 = vrot.lane.b32.xlu0 %v1181, 112
        %v1887 = vpop.permute.xlu0 %1886
        %1888 = vrot.lane.b32.xlu0 %v1186, 112
        %v1889 = vpop.permute.xlu0 %1888
        %1890 = vrot.lane.b32.xlu0 %v1191, 112
        %v1891 = vpop.permute.xlu0 %1890
        %1892 = vrot.lane.b32.xlu0 %v1196, 112
        %v1893 = vpop.permute.xlu0 %1892
        %1894 = vrot.lane.b32.xlu0 %v1201, 112
        %v1895 = vpop.permute.xlu0 %1894
        %1896 = vrot.lane.b32.xlu0 %v1206, 112
        %v1897 = vpop.permute.xlu0 %1896
        %1898 = vrot.lane.b32.xlu0 %v1211, 112
        %v1899 = vpop.permute.xlu0 %1898
        %1900 = vrot.lane.b32.xlu0 %v1216, 112
        %v1901 = vpop.permute.xlu0 %1900
        %1902 = vrot.lane.b32.xlu0 %v1221, 112
        %v1903 = vpop.permute.xlu0 %1902
        %1904 = vrot.lane.b32.xlu0 %v1226, 112
        %v1905 = vpop.permute.xlu0 %1904
        %1906 = vrot.lane.b32.xlu0 %v1231, 112
        %v1907 = vpop.permute.xlu0 %1906
        %1908 = vrot.lane.b32.xlu0 %v1236, 112
        %v1909 = vpop.permute.xlu0 %1908
        %1926 = vmatprep.subr.mxu0 0.0
        %1927 = vmatpush1.msra.mxu0 %v1909
        %1928 = vmatprep.subr.mxu0 0.0
        %1929 = vmatpush1.msra.mxu0 %v1907
        %1930 = vmatprep.subr.mxu0 0.0
        %1931 = vmatpush1.msra.mxu0 %v1905
        %1932 = vmatprep.subr.mxu0 0.0
        %1933 = vmatpush1.msra.mxu0 %v1903
        %1934 = vmatprep.subr.mxu0 0.0
        %1935 = vmatpush1.msra.mxu0 %v1901
        %1936 = vmatprep.subr.mxu0 0.0
        %1937 = vmatpush1.msra.mxu0 %v1899
        %1938 = vmatprep.subr.mxu0 0.0
        %1939 = vmatpush1.msra.mxu0 %v1897
        %1940 = vmatprep.subr.mxu0 0.0
        %1941 = vmatpush1.msra.mxu0 %v1895
        %1942 = vmatprep.subr.mxu0 0.0
        %1943 = vmatpush1.msra.mxu0 %v1893
        %1944 = vmatprep.subr.mxu0 0.0
        %1945 = vmatpush1.msra.mxu0 %v1891
        %1946 = vmatprep.subr.mxu0 0.0
        %1947 = vmatpush1.msra.mxu0 %v1889
        %1948 = vmatprep.subr.mxu0 0.0
        %1949 = vmatpush1.msra.mxu0 %v1887
        %1950 = vmatprep.subr.mxu0 0.0
        %1951 = vmatpush1.msra.mxu0 %v1885
        %1952 = vmatprep.subr.mxu0 0.0
        %1953 = vmatpush1.msra.mxu0 %v1883
        %1954 = vmatprep.subr.mxu0 0.0
        %1955 = vmatpush1.msra.mxu0 %v1881
        %1956 = vmatprep.subr.mxu0 0.0
        %1957 = vmatpush1.msra.mxu0 %v1879
        %1958 = vmatprep.subr.mxu0 0.0
        %1959 = vmatpush2.msra.mxu0 0.0
        %1960 = vmatprep.subr.mxu0 0.0
        %1961 = vmatpush2.msra.mxu0 0.0
        %1962 = vmatprep.subr.mxu0 0.0
        %1963 = vmatpush2.msra.mxu0 0.0
        %1964 = vmatprep.subr.mxu0 0.0
        %1965 = vmatpush2.msra.mxu0 0.0
        %1966 = vmatprep.subr.mxu0 0.0
        %1967 = vmatpush2.msra.mxu0 0.0
        %1968 = vmatprep.subr.mxu0 0.0
        %1969 = vmatpush2.msra.mxu0 0.0
        %1970 = vmatprep.subr.mxu0 0.0
        %1971 = vmatpush2.msra.mxu0 0.0
        %1972 = vmatprep.subr.mxu0 0.0
        %1973 = vmatpush2.msra.mxu0 0.0
        %1974 = vmatprep.subr.mxu0 0.0
        %1975 = vmatpush2.msra.mxu0 0.0
        %1976 = vmatprep.subr.mxu0 0.0
        %1977 = vmatpush2.msra.mxu0 0.0
        %1978 = vmatprep.subr.mxu0 0.0
        %1979 = vmatpush2.msra.mxu0 0.0
        %1980 = vmatprep.subr.mxu0 0.0
        %1981 = vmatpush2.msra.mxu0 0.0
        %1982 = vmatprep.subr.mxu0 0.0
        %1983 = vmatpush2.msra.mxu0 0.0
        %1984 = vmatprep.subr.mxu0 0.0
        %1985 = vmatpush2.msra.mxu0 0.0
        %1986 = vmatprep.subr.mxu0 0.0
        %1987 = vmatpush2.msra.mxu0 0.0
        %1988 = vmatprep.subr.mxu0 0.0
        %1989 = vmatpush2.msra.mxu0 0.0
        %1990 = vmatprep.mubr.f32.mxu0 0.0
        %1991 = vmatmul.mubr.f32.gmra.mxu0 %v1876
        %v1992 = vpop.f32.mrf.mxu0
        %v1993 = vadd.f32 0.0, %v1992
        %v1994 = vpop.f32.mrf.mxu0
        %1995 = vdwg.mxu0
        %1996 = vrot.lane.b32.xlu0 %v834, 104
        %v1997 = vpop.permute.xlu0 %1996
        %1998 = vrot.lane.b32.xlu0 %v959, 104
        %v1999 = vpop.permute.xlu0 %1998
        %2000 = vrot.lane.b32.xlu0 %v964, 104
        %v2001 = vpop.permute.xlu0 %2000
        %2002 = vrot.lane.b32.xlu0 %v969, 104
        %v2003 = vpop.permute.xlu0 %2002
        %2004 = vrot.lane.b32.xlu0 %v974, 104
        %v2005 = vpop.permute.xlu0 %2004
        %2006 = vrot.lane.b32.xlu0 %v979, 104
        %v2007 = vpop.permute.xlu0 %2006
        %2008 = vrot.lane.b32.xlu0 %v984, 104
        %v2009 = vpop.permute.xlu0 %2008
        %2010 = vrot.lane.b32.xlu0 %v989, 104
        %v2011 = vpop.permute.xlu0 %2010
        %2012 = vrot.lane.b32.xlu0 %v994, 104
        %v2013 = vpop.permute.xlu0 %2012
        %2014 = vrot.lane.b32.xlu0 %v999, 104
        %v2015 = vpop.permute.xlu0 %2014
        %2016 = vrot.lane.b32.xlu0 %v1004, 104
        %v2017 = vpop.permute.xlu0 %2016
        %2018 = vrot.lane.b32.xlu0 %v1009, 104
        %v2019 = vpop.permute.xlu0 %2018
        %2020 = vrot.lane.b32.xlu0 %v1014, 104
        %v2021 = vpop.permute.xlu0 %2020
        %2022 = vrot.lane.b32.xlu0 %v1019, 104
        %v2023 = vpop.permute.xlu0 %2022
        %2024 = vrot.lane.b32.xlu0 %v1024, 104
        %v2025 = vpop.permute.xlu0 %2024
        %2026 = vrot.lane.b32.xlu0 %v1029, 104
        %v2027 = vpop.permute.xlu0 %2026
        %2028 = vrot.lane.b32.xlu0 %v1034, 104
        %v2029 = vpop.permute.xlu0 %2028
        %v2030 = vsel %vm1244, %v1997, 0
        %v2032 = vsel %vm1244, %v1999, 0
        %v2034 = vsel %vm1244, %v2001, 0
        %v2036 = vsel %vm1244, %v2003, 0
        %v2038 = vsel %vm1244, %v2005, 0
        %v2040 = vsel %vm1244, %v2007, 0
        %v2042 = vsel %vm1244, %v2009, 0
        %v2044 = vsel %vm1244, %v2011, 0
        %v2046 = vsel %vm1244, %v2013, 0
        %v2048 = vsel %vm1244, %v2015, 0
        %v2050 = vsel %vm1244, %v2017, 0
        %v2052 = vsel %vm1244, %v2019, 0
        %v2054 = vsel %vm1244, %v2021, 0
        %v2056 = vsel %vm1244, %v2023, 0
        %v2058 = vsel %vm1244, %v2025, 0
        %v2060 = vsel %vm1244, %v2027, 0
        %v2062 = vsel %vm1244, %v2029, 0
        %2064 = vmatprep.subr.mxu0 0.0
        %2065 = vmatpush1.xpose.msra.mxu0 %v2062
        %2066 = vmatprep.subr.mxu0 0.0
        %2067 = vmatpush1.xpose.msra.mxu0 %v2060
        %2068 = vmatprep.subr.mxu0 0.0
        %2069 = vmatpush1.xpose.msra.mxu0 %v2058
        %2070 = vmatprep.subr.mxu0 0.0
        %2071 = vmatpush1.xpose.msra.mxu0 %v2056
        %2072 = vmatprep.subr.mxu0 0.0
        %2073 = vmatpush1.xpose.msra.mxu0 %v2054
        %2074 = vmatprep.subr.mxu0 0.0
        %2075 = vmatpush1.xpose.msra.mxu0 %v2052
        %2076 = vmatprep.subr.mxu0 0.0
        %2077 = vmatpush1.xpose.msra.mxu0 %v2050
        %2078 = vmatprep.subr.mxu0 0.0
        %2079 = vmatpush1.xpose.msra.mxu0 %v2048
        %2080 = vmatprep.subr.mxu0 0.0
        %2081 = vmatpush1.xpose.msra.mxu0 %v2046
        %2082 = vmatprep.subr.mxu0 0.0
        %2083 = vmatpush1.xpose.msra.mxu0 %v2044
        %2084 = vmatprep.subr.mxu0 0.0
        %2085 = vmatpush1.xpose.msra.mxu0 %v2042
        %2086 = vmatprep.subr.mxu0 0.0
        %2087 = vmatpush1.xpose.msra.mxu0 %v2040
        %2088 = vmatprep.subr.mxu0 0.0
        %2089 = vmatpush1.xpose.msra.mxu0 %v2038
        %2090 = vmatprep.subr.mxu0 0.0
        %2091 = vmatpush1.xpose.msra.mxu0 %v2036
        %2092 = vmatprep.subr.mxu0 0.0
        %2093 = vmatpush1.xpose.msra.mxu0 %v2034
        %2094 = vmatprep.subr.mxu0 0.0
        %2095 = vmatpush1.xpose.msra.mxu0 %v2032
        %2096 = vmatprep.subr.mxu0 0.0
        %2097 = vmatpush2.xpose.msra.mxu0 0.0
        %2098 = vmatprep.subr.mxu0 0.0
        %2099 = vmatpush2.xpose.msra.mxu0 0.0
        %2100 = vmatprep.subr.mxu0 0.0
        %2101 = vmatpush2.xpose.msra.mxu0 0.0
        %2102 = vmatprep.subr.mxu0 0.0
        %2103 = vmatpush2.xpose.msra.mxu0 0.0
        %2104 = vmatprep.subr.mxu0 0.0
        %2105 = vmatpush2.xpose.msra.mxu0 0.0
        %2106 = vmatprep.subr.mxu0 0.0
        %2107 = vmatpush2.xpose.msra.mxu0 0.0
        %2108 = vmatprep.subr.mxu0 0.0
        %2109 = vmatpush2.xpose.msra.mxu0 0.0
        %2110 = vmatprep.subr.mxu0 0.0
        %2111 = vmatpush2.xpose.msra.mxu0 0.0
        %2112 = vmatprep.subr.mxu0 0.0
        %2113 = vmatpush2.xpose.msra.mxu0 0.0
        %2114 = vmatprep.subr.mxu0 0.0
        %2115 = vmatpush2.xpose.msra.mxu0 0.0
        %2116 = vmatprep.subr.mxu0 0.0
        %2117 = vmatpush2.xpose.msra.mxu0 0.0
        %2118 = vmatprep.subr.mxu0 0.0
        %2119 = vmatpush2.xpose.msra.mxu0 0.0
        %2120 = vmatprep.subr.mxu0 0.0
        %2121 = vmatpush2.xpose.msra.mxu0 0.0
        %2122 = vmatprep.subr.mxu0 0.0
        %2123 = vmatpush2.xpose.msra.mxu0 0.0
        %2124 = vmatprep.subr.mxu0 0.0
        %2125 = vmatpush2.xpose.msra.mxu0 0.0
        %2126 = vmatprep.subr.mxu0 0.0
        %2127 = vmatpush2.xpose.msra.mxu0 0.0
        %2128 = vmatprep.mubr.f32.mxu0 0.0
        %2129 = vmatmul.mubr.f32.gmra.mxu0 %v2030
        %v2130 = vpop.f32.mrf.mxu0
        %v2131 = vadd.f32 0.0, %v2130
        %v2132 = vpop.f32.mrf.mxu0
        %2133 = vdwg.mxu0
        %2134 = vmax.xlane.f32.xlu0 %v2131
        %v2135 = vpop.xlane.xlu0 %2134
        %v2136 = vsub.f32 %v2131, %v2135
        %v2137 = vmul.f32 %v2136, 1.442695
        %v2138 = vpow.pop %v2137
        %v2139 = vmul.f32 %v2138, %v1243
        %2140 = vadd.xlane.f32.xlu0 %v2139
        %v2141 = vpop.xlane.xlu0 %2140
        %v2142 = vrcp.pop %v2141
        %v2143 = vmul.f32 %v2139, %v2142
        %v2144 = vadd.f32 %v1877, %v2143
        %2145 = vrot.lane.b32.xlu0 %v1161, 104
        %v2146 = vpop.permute.xlu0 %2145
        %2147 = vrot.lane.b32.xlu0 %v1166, 104
        %v2148 = vpop.permute.xlu0 %2147
        %2149 = vrot.lane.b32.xlu0 %v1171, 104
        %v2150 = vpop.permute.xlu0 %2149
        %2151 = vrot.lane.b32.xlu0 %v1176, 104
        %v2152 = vpop.permute.xlu0 %2151
        %2153 = vrot.lane.b32.xlu0 %v1181, 104
        %v2154 = vpop.permute.xlu0 %2153
        %2155 = vrot.lane.b32.xlu0 %v1186, 104
        %v2156 = vpop.permute.xlu0 %2155
        %2157 = vrot.lane.b32.xlu0 %v1191, 104
        %v2158 = vpop.permute.xlu0 %2157
        %2159 = vrot.lane.b32.xlu0 %v1196, 104
        %v2160 = vpop.permute.xlu0 %2159
        %2161 = vrot.lane.b32.xlu0 %v1201, 104
        %v2162 = vpop.permute.xlu0 %2161
        %2163 = vrot.lane.b32.xlu0 %v1206, 104
        %v2164 = vpop.permute.xlu0 %2163
        %2165 = vrot.lane.b32.xlu0 %v1211, 104
        %v2166 = vpop.permute.xlu0 %2165
        %2167 = vrot.lane.b32.xlu0 %v1216, 104
        %v2168 = vpop.permute.xlu0 %2167
        %2169 = vrot.lane.b32.xlu0 %v1221, 104
        %v2170 = vpop.permute.xlu0 %2169
        %2171 = vrot.lane.b32.xlu0 %v1226, 104
        %v2172 = vpop.permute.xlu0 %2171
        %2173 = vrot.lane.b32.xlu0 %v1231, 104
        %v2174 = vpop.permute.xlu0 %2173
        %2175 = vrot.lane.b32.xlu0 %v1236, 104
        %v2176 = vpop.permute.xlu0 %2175
        %2193 = vmatprep.subr.mxu0 0.0
        %2194 = vmatpush1.msra.mxu0 %v2176
        %2195 = vmatprep.subr.mxu0 0.0
        %2196 = vmatpush1.msra.mxu0 %v2174
        %2197 = vmatprep.subr.mxu0 0.0
        %2198 = vmatpush1.msra.mxu0 %v2172
        %2199 = vmatprep.subr.mxu0 0.0
        %2200 = vmatpush1.msra.mxu0 %v2170
        %2201 = vmatprep.subr.mxu0 0.0
        %2202 = vmatpush1.msra.mxu0 %v2168
        %2203 = vmatprep.subr.mxu0 0.0
        %2204 = vmatpush1.msra.mxu0 %v2166
        %2205 = vmatprep.subr.mxu0 0.0
        %2206 = vmatpush1.msra.mxu0 %v2164
        %2207 = vmatprep.subr.mxu0 0.0
        %2208 = vmatpush1.msra.mxu0 %v2162
        %2209 = vmatprep.subr.mxu0 0.0
        %2210 = vmatpush1.msra.mxu0 %v2160
        %2211 = vmatprep.subr.mxu0 0.0
        %2212 = vmatpush1.msra.mxu0 %v2158
        %2213 = vmatprep.subr.mxu0 0.0
        %2214 = vmatpush1.msra.mxu0 %v2156
        %2215 = vmatprep.subr.mxu0 0.0
        %2216 = vmatpush1.msra.mxu0 %v2154
        %2217 = vmatprep.subr.mxu0 0.0
        %2218 = vmatpush1.msra.mxu0 %v2152
        %2219 = vmatprep.subr.mxu0 0.0
        %2220 = vmatpush1.msra.mxu0 %v2150
        %2221 = vmatprep.subr.mxu0 0.0
        %2222 = vmatpush1.msra.mxu0 %v2148
        %2223 = vmatprep.subr.mxu0 0.0
        %2224 = vmatpush1.msra.mxu0 %v2146
        %2225 = vmatprep.subr.mxu0 0.0
        %2226 = vmatpush2.msra.mxu0 0.0
        %2227 = vmatprep.subr.mxu0 0.0
        %2228 = vmatpush2.msra.mxu0 0.0
        %2229 = vmatprep.subr.mxu0 0.0
        %2230 = vmatpush2.msra.mxu0 0.0
        %2231 = vmatprep.subr.mxu0 0.0
        %2232 = vmatpush2.msra.mxu0 0.0
        %2233 = vmatprep.subr.mxu0 0.0
        %2234 = vmatpush2.msra.mxu0 0.0
        %2235 = vmatprep.subr.mxu0 0.0
        %2236 = vmatpush2.msra.mxu0 0.0
        %2237 = vmatprep.subr.mxu0 0.0
        %2238 = vmatpush2.msra.mxu0 0.0
        %2239 = vmatprep.subr.mxu0 0.0
        %2240 = vmatpush2.msra.mxu0 0.0
        %2241 = vmatprep.subr.mxu0 0.0
        %2242 = vmatpush2.msra.mxu0 0.0
        %2243 = vmatprep.subr.mxu0 0.0
        %2244 = vmatpush2.msra.mxu0 0.0
        %2245 = vmatprep.subr.mxu0 0.0
        %2246 = vmatpush2.msra.mxu0 0.0
        %2247 = vmatprep.subr.mxu0 0.0
        %2248 = vmatpush2.msra.mxu0 0.0
        %2249 = vmatprep.subr.mxu0 0.0
        %2250 = vmatpush2.msra.mxu0 0.0
        %2251 = vmatprep.subr.mxu0 0.0
        %2252 = vmatpush2.msra.mxu0 0.0
        %2253 = vmatprep.subr.mxu0 0.0
        %2254 = vmatpush2.msra.mxu0 0.0
        %2255 = vmatprep.subr.mxu0 0.0
        %2256 = vmatpush2.msra.mxu0 0.0
        %2257 = vmatprep.mubr.f32.mxu0 0.0
        %2258 = vmatmul.mubr.f32.gmra.mxu0 %v2143
        %v2259 = vpop.f32.mrf.mxu0
        %v2260 = vadd.f32 0.0, %v2259
        %v2261 = vpop.f32.mrf.mxu0
        %2262 = vdwg.mxu0
        %v2263 = vmul.f32 %v2144, 0.25
        %2264 = vst [vmem:[%s649] sm:$0xff] %v2263
        %2266 = vrot.lane.b32.xlu0 %v1726, 8
        %v2267 = vpop.permute.xlu0 %2266
        %2270 = vrot.lane.b32.xlu0 %v1993, 16
        %v2271 = vpop.permute.xlu0 %2270
        %2274 = vrot.lane.b32.xlu0 %v2260, 24
        %v2275 = vpop.permute.xlu0 %2274
        %v2277 = vsel %vm1244, %v1443, %v2267
        %vm2278 = vcmask 130048
        %v2279 = vsel %vm2278, %v2277, %v2271
        %vm2280 = vcmask 195584
        %v2281 = vsel %vm2280, %v2279, %v2275
        %v2282 = vld [vmem:[%s6] sm:$0xff]
        %v2283 = vld [vmem:[%s6 + $0x8] sm:$0xff]
        %v2284 = vld [vmem:[%s6 + $0x10] sm:$0xff]
        %v2285 = vld [vmem:[%s6 + $0x18] sm:$0xff]
        %v2286 = vld [vmem:[%s7] sm:$0x1]
        %v2288 = vlaneseq
        %v2289 = vshrl.u32 %v2288, 7
        %v2290 = vsub.s32 0, %v2289
        %v2291 = vrot.slane %v2286, %v2290
        %v2294 = vsel %vm706, %v2281, 0
        %2296 = vmatprep.subr.mxu0 0.0
        %2297 = vmatpush1.msra.mxu0 0.0
        %2298 = vmatprep.subr.mxu0 0.0
        %2299 = vmatpush1.msra.mxu0 0.0
        %2300 = vmatprep.subr.mxu0 0.0
        %2301 = vmatpush1.msra.mxu0 0.0
        %2302 = vmatprep.subr.mxu0 0.0
        %2303 = vmatpush1.msra.mxu0 0.0
        %2304 = vmatprep.subr.mxu0 0.0
        %2305 = vmatpush1.msra.mxu0 0.0
        %2306 = vmatprep.subr.mxu0 0.0
        %2307 = vmatpush1.msra.mxu0 0.0
        %2308 = vmatprep.subr.mxu0 0.0
        %2309 = vmatpush1.msra.mxu0 0.0
        %2310 = vmatprep.subr.mxu0 0.0
        %2311 = vmatpush1.msra.mxu0 0.0
        %2312 = vmatprep.subr.mxu0 0.0
        %2313 = vmatpush1.msra.mxu0 0.0
        %2314 = vmatprep.subr.mxu0 0.0
        %2315 = vmatpush1.msra.mxu0 0.0
        %2316 = vmatprep.subr.mxu0 0.0
        %2317 = vmatpush1.msra.mxu0 0.0
        %2318 = vmatprep.subr.mxu0 0.0
        %2319 = vmatpush1.msra.mxu0 0.0
        %2320 = vmatprep.subr.mxu0 0.0
        %2321 = vmatpush1.msra.mxu0 %v2285
        %2322 = vmatprep.subr.mxu0 0.0
        %2323 = vmatpush1.msra.mxu0 %v2284
        %2324 = vmatprep.subr.mxu0 0.0
        %2325 = vmatpush1.msra.mxu0 %v2283
        %2326 = vmatprep.subr.mxu0 0.0
        %2327 = vmatpush1.msra.mxu0 %v2282
        %2328 = vmatprep.subr.mxu0 0.0
        %2329 = vmatpush2.msra.mxu0 0.0
        %2330 = vmatprep.subr.mxu0 0.0
        %2331 = vmatpush2.msra.mxu0 0.0
        %2332 = vmatprep.subr.mxu0 0.0
        %2333 = vmatpush2.msra.mxu0 0.0
        %2334 = vmatprep.subr.mxu0 0.0
        %2335 = vmatpush2.msra.mxu0 0.0
        %2336 = vmatprep.subr.mxu0 0.0
        %2337 = vmatpush2.msra.mxu0 0.0
        %2338 = vmatprep.subr.mxu0 0.0
        %2339 = vmatpush2.msra.mxu0 0.0
        %2340 = vmatprep.subr.mxu0 0.0
        %2341 = vmatpush2.msra.mxu0 0.0
        %2342 = vmatprep.subr.mxu0 0.0
        %2343 = vmatpush2.msra.mxu0 0.0
        %2344 = vmatprep.subr.mxu0 0.0
        %2345 = vmatpush2.msra.mxu0 0.0
        %2346 = vmatprep.subr.mxu0 0.0
        %2347 = vmatpush2.msra.mxu0 0.0
        %2348 = vmatprep.subr.mxu0 0.0
        %2349 = vmatpush2.msra.mxu0 0.0
        %2350 = vmatprep.subr.mxu0 0.0
        %2351 = vmatpush2.msra.mxu0 0.0
        %2352 = vmatprep.subr.mxu0 0.0
        %2353 = vmatpush2.msra.mxu0 0.0
        %2354 = vmatprep.subr.mxu0 0.0
        %2355 = vmatpush2.msra.mxu0 0.0
        %2356 = vmatprep.subr.mxu0 0.0
        %2357 = vmatpush2.msra.mxu0 0.0
        %2358 = vmatprep.subr.mxu0 0.0
        %2359 = vmatpush2.msra.mxu0 0.0
        %2360 = vmatprep.mubr.f32.mxu0 0.0
        %2361 = vmatmul.mubr.f32.gmra.mxu0 %v2294
        %v2362 = vpop.f32.mrf.mxu0
        %v2363 = vadd.f32 %v2291, %v2362
        %v2364 = vpop.f32.mrf.mxu0
        %2365 = vdwg.mxu0
        %v2366 = vadd.f32 %v734, %v2363
        %v2367 = vld [vmem:[%s14] sm:$0x1]
        %v2368 = vld [vmem:[%s15] sm:$0x1]
        %v2369 = vsel %vm706, %v2366, 0.0
        %2370 = vadd.xlane.f32.xlu0 %v2369
        %v2371 = vpop.xlane.xlu0 %2370
        %v2372 = vmul.f32 %v2371, %v710
        %v2373 = vsub.f32 %v2366, %v2372
        %v2374 = vmul.f32 %v2373, %v2373
        %v2375 = vsel %vm706, %v2374, 0.0
        %2376 = vadd.xlane.f32.xlu0 %v2375
        %v2377 = vpop.xlane.xlu0 %2376
        %v2378 = vmul.f32 %v2377, %v710
        %v2379 = vadd.f32 %v2378, 1e-05
        %v2380 = vrsqrt.pop %v2379
        %v2381 = vmul.f32 %v2373, %v2380
        %v2383 = vlaneseq
        %v2384 = vshrl.u32 %v2383, 7
        %v2385 = vsub.s32 0, %v2384
        %v2386 = vrot.slane %v2367, %v2385
        %v2388 = vmul.f32 %v2381, %v2386
        %v2390 = vlaneseq
        %v2391 = vshrl.u32 %v2390, 7
        %v2392 = vsub.s32 0, %v2391
        %v2393 = vrot.slane %v2368, %v2392
        %v2395 = vadd.f32 %v2388, %v2393
        %v2396 = vld [vmem:[%s8] sm:$0xff]
        %v2397 = vld [vmem:[%s8 + $0x8] sm:$0xff]
        %v2398 = vld [vmem:[%s8 + $0x10] sm:$0xff]
        %v2399 = vld [vmem:[%s8 + $0x18] sm:$0xff]
        %v2400 = vld [vmem:[%s9] sm:$0x1]
        %v2402 = vlaneseq
        %v2403 = vshrl.u32 %v2402, 7
        %v2404 = vsub.s32 0, %v2403
        %v2405 = vrot.slane %v2400, %v2404
        %v2408 = vsel %vm706, %v2395, 0
        %2410 = vmatprep.subr.mxu0 0.0
        %2411 = vmatpush1.msra.mxu0 0.0
        %2412 = vmatprep.subr.mxu0 0.0
        %2413 = vmatpush1.msra.mxu0 0.0
        %2414 = vmatprep.subr.mxu0 0.0
        %2415 = vmatpush1.msra.mxu0 0.0
        %2416 = vmatprep.subr.mxu0 0.0
        %2417 = vmatpush1.msra.mxu0 0.0
        %2418 = vmatprep.subr.mxu0 0.0
        %2419 = vmatpush1.msra.mxu0 0.0
        %2420 = vmatprep.subr.mxu0 0.0
        %2421 = vmatpush1.msra.mxu0 0.0
        %2422 = vmatprep.subr.mxu0 0.0
        %2423 = vmatpush1.msra.mxu0 0.0
        %2424 = vmatprep.subr.mxu0 0.0
        %2425 = vmatpush1.msra.mxu0 0.0
        %2426 = vmatprep.subr.mxu0 0.0
        %2427 = vmatpush1.msra.mxu0 0.0
        %2428 = vmatprep.subr.mxu0 0.0
        %2429 = vmatpush1.msra.mxu0 0.0
        %2430 = vmatprep.subr.mxu0 0.0
        %2431 = vmatpush1.msra.mxu0 0.0
        %2432 = vmatprep.subr.mxu0 0.0
        %2433 = vmatpush1.msra.mxu0 0.0
        %2434 = vmatprep.subr.mxu0 0.0
        %2435 = vmatpush1.msra.mxu0 %v2399
        %2436 = vmatprep.subr.mxu0 0.0
        %2437 = vmatpush1.msra.mxu0 %v2398
        %2438 = vmatprep.subr.mxu0 0.0
        %2439 = vmatpush1.msra.mxu0 %v2397
        %2440 = vmatprep.subr.mxu0 0.0
        %2441 = vmatpush1.msra.mxu0 %v2396
        %2442 = vmatprep.subr.mxu0 0.0
        %2443 = vmatpush2.msra.mxu0 0.0
        %2444 = vmatprep.subr.mxu0 0.0
        %2445 = vmatpush2.msra.mxu0 0.0
        %2446 = vmatprep.subr.mxu0 0.0
        %2447 = vmatpush2.msra.mxu0 0.0
        %2448 = vmatprep.subr.mxu0 0.0
        %2449 = vmatpush2.msra.mxu0 0.0
        %2450 = vmatprep.subr.mxu0 0.0
        %2451 = vmatpush2.msra.mxu0 0.0
        %2452 = vmatprep.subr.mxu0 0.0
        %2453 = vmatpush2.msra.mxu0 0.0
        %2454 = vmatprep.subr.mxu0 0.0
        %2455 = vmatpush2.msra.mxu0 0.0
        %2456 = vmatprep.subr.mxu0 0.0
        %2457 = vmatpush2.msra.mxu0 0.0
        %2458 = vmatprep.subr.mxu0 0.0
        %2459 = vmatpush2.msra.mxu0 0.0
        %2460 = vmatprep.subr.mxu0 0.0
        %2461 = vmatpush2.msra.mxu0 0.0
        %2462 = vmatprep.subr.mxu0 0.0
        %2463 = vmatpush2.msra.mxu0 0.0
        %2464 = vmatprep.subr.mxu0 0.0
        %2465 = vmatpush2.msra.mxu0 0.0
        %2466 = vmatprep.subr.mxu0 0.0
        %2467 = vmatpush2.msra.mxu0 0.0
        %2468 = vmatprep.subr.mxu0 0.0
        %2469 = vmatpush2.msra.mxu0 0.0
        %2470 = vmatprep.subr.mxu0 0.0
        %2471 = vmatpush2.msra.mxu0 0.0
        %2472 = vmatprep.subr.mxu0 0.0
        %2473 = vmatpush2.msra.mxu0 0.0
        %2474 = vmatprep.mubr.f32.mxu0 0.0
        %2475 = vmatmul.mubr.f32.gmra.mxu0 %v2408
        %v2476 = vpop.f32.mrf.mxu0
        %v2477 = vadd.f32 %v2405, %v2476
        %v2478 = vpop.f32.mrf.mxu0
        %2479 = vdwg.mxu0
        %v2480 = vmax.f32 %v2477, 0.0
        %v2481 = vld [vmem:[%s10] sm:$0xff]
        %v2482 = vld [vmem:[%s10 + $0x8] sm:$0xff]
        %v2483 = vld [vmem:[%s10 + $0x10] sm:$0xff]
        %v2484 = vld [vmem:[%s10 + $0x18] sm:$0xff]
        %v2485 = vld [vmem:[%s10 + $0x20] sm:$0xff]
        %v2486 = vld [vmem:[%s10 + $0x28] sm:$0xff]
        %v2487 = vld [vmem:[%s10 + $0x30] sm:$0xff]
        %v2488 = vld [vmem:[%s10 + $0x38] sm:$0xff]
        %v2489 = vld [vmem:[%s11] sm:$0x1]
        %v2491 = vlaneseq
        %v2492 = vshrl.u32 %v2491, 7
        %v2493 = vsub.s32 0, %v2492
        %v2494 = vrot.slane %v2489, %v2493
        %vm2496 = vcmask 523264
        %v2498 = vsel %vm2496, %v2480, 0
        %2500 = vmatprep.subr.mxu0 0.0
        %2501 = vmatpush1.msra.mxu0 0.0
        %2502 = vmatprep.subr.mxu0 0.0
        %2503 = vmatpush1.msra.mxu0 0.0
        %2504 = vmatprep.subr.mxu0 0.0
        %2505 = vmatpush1.msra.mxu0 0.0
        %2506 = vmatprep.subr.mxu0 0.0
        %2507 = vmatpush1.msra.mxu0 0.0
        %2508 = vmatprep.subr.mxu0 0.0
        %2509 = vmatpush1.msra.mxu0 0.0
        %2510 = vmatprep.subr.mxu0 0.0
        %2511 = vmatpush1.msra.mxu0 0.0
        %2512 = vmatprep.subr.mxu0 0.0
        %2513 = vmatpush1.msra.mxu0 0.0
        %2514 = vmatprep.subr.mxu0 0.0
        %2515 = vmatpush1.msra.mxu0 0.0
        %2516 = vmatprep.subr.mxu0 0.0
        %2517 = vmatpush1.msra.mxu0 %v2488
        %2518 = vmatprep.subr.mxu0 0.0
        %2519 = vmatpush1.msra.mxu0 %v2487
        %2520 = vmatprep.subr.mxu0 0.0
        %2521 = vmatpush1.msra.mxu0 %v2486
        %2522 = vmatprep.subr.mxu0 0.0
        %2523 = vmatpush1.msra.mxu0 %v2485
        %2524 = vmatprep.subr.mxu0 0.0
        %2525 = vmatpush1.msra.mxu0 %v2484
        %2526 = vmatprep.subr.mxu0 0.0
        %2527 = vmatpush1.msra.mxu0 %v2483
        %2528 = vmatprep.subr.mxu0 0.0
        %2529 = vmatpush1.msra.mxu0 %v2482
        %2530 = vmatprep.subr.mxu0 0.0
        %2531 = vmatpush1.msra.mxu0 %v2481
        %2532 = vmatprep.subr.mxu0 0.0
        %2533 = vmatpush2.msra.mxu0 0.0
        %2534 = vmatprep.subr.mxu0 0.0
        %2535 = vmatpush2.msra.mxu0 0.0
        %2536 = vmatprep.subr.mxu0 0.0
        %2537 = vmatpush2.msra.mxu0 0.0
        %2538 = vmatprep.subr.mxu0 0.0
        %2539 = vmatpush2.msra.mxu0 0.0
        %2540 = vmatprep.subr.mxu0 0.0
        %2541 = vmatpush2.msra.mxu0 0.0
        %2542 = vmatprep.subr.mxu0 0.0
        %2543 = vmatpush2.msra.mxu0 0.0
        %2544 = vmatprep.subr.mxu0 0.0
        %2545 = vmatpush2.msra.mxu0 0.0
        %2546 = vmatprep.subr.mxu0 0.0
        %2547 = vmatpush2.msra.mxu0 0.0
        %2548 = vmatprep.subr.mxu0 0.0
        %2549 = vmatpush2.msra.mxu0 0.0
        %2550 = vmatprep.subr.mxu0 0.0
        %2551 = vmatpush2.msra.mxu0 0.0
        %2552 = vmatprep.subr.mxu0 0.0
        %2553 = vmatpush2.msra.mxu0 0.0
        %2554 = vmatprep.subr.mxu0 0.0
        %2555 = vmatpush2.msra.mxu0 0.0
        %2556 = vmatprep.subr.mxu0 0.0
        %2557 = vmatpush2.msra.mxu0 0.0
        %2558 = vmatprep.subr.mxu0 0.0
        %2559 = vmatpush2.msra.mxu0 0.0
        %2560 = vmatprep.subr.mxu0 0.0
        %2561 = vmatpush2.msra.mxu0 0.0
        %2562 = vmatprep.subr.mxu0 0.0
        %2563 = vmatpush2.msra.mxu0 0.0
        %2564 = vmatprep.mubr.f32.mxu0 0.0
        %2565 = vmatmul.mubr.f32.gmra.mxu0 %v2498
        %v2566 = vpop.f32.mrf.mxu0
        %v2567 = vadd.f32 %v2494, %v2566
        %v2568 = vpop.f32.mrf.mxu0
        %2569 = vdwg.mxu0
        %v2570 = vadd.f32 %v2395, %v2567
        %v2571 = vld [vmem:[%s16] sm:$0x1]
        %v2572 = vld [vmem:[%s17] sm:$0x1]
        %v2573 = vsel %vm706, %v2570, 0.0
        %2574 = vadd.xlane.f32.xlu0 %v2573
        %v2575 = vpop.xlane.xlu0 %2574
        %v2576 = vmul.f32 %v2575, %v710
        %v2577 = vsub.f32 %v2570, %v2576
        %v2578 = vmul.f32 %v2577, %v2577
        %v2579 = vsel %vm706, %v2578, 0.0
        %2580 = vadd.xlane.f32.xlu0 %v2579
        %v2581 = vpop.xlane.xlu0 %2580
        %v2582 = vmul.f32 %v2581, %v710
        %v2583 = vadd.f32 %v2582, 1e-05
        %v2584 = vrsqrt.pop %v2583
        %v2585 = vmul.f32 %v2577, %v2584
        %v2587 = vlaneseq
        %v2588 = vshrl.u32 %v2587, 7
        %v2589 = vsub.s32 0, %v2588
        %v2590 = vrot.slane %v2571, %v2589
        %v2592 = vmul.f32 %v2585, %v2590
        %v2594 = vlaneseq
        %v2595 = vshrl.u32 %v2594, 7
        %v2596 = vsub.s32 0, %v2595
        %v2597 = vrot.slane %v2572, %v2596
        %v2599 = vadd.f32 %v2592, %v2597
        %2600 = vst.msk [vmem:[%s642] sm:$0xff] %vm706, %v2599
        %s2601 = sand.u32 %s443, 1
        %s2602 = scalar_lea.sflag [#allocation3], %s2601
        %s2603 = sand.u32 %s443, 1
        %s2604 = smul.addr %s2603, 8
        %s2605 = scalar_lea.vmem [#allocation2], %s2604
        %s2606 = sand.u32 %s469, 1
        %s2607 = scalar_lea.sflag [#allocation5], %s2606
        %s2608 = sand.u32 %s469, 1
        %s2609 = smul.addr %s2608, 8
        %s2610 = scalar_lea.vmem [#allocation4], %s2609
        // Predicated region
        $region93: #{tpu_custom_call.1} parent=91 // pred_check
          %p2611 = pneg %p453
        $region94: #{tpu_custom_call.1} parent=91 // pred_check_branch
          %2613 = sbr.rel (%p2611) target = $region96
        $region95: #{tpu_custom_call.1} parent=91 // pred_region
          %s2615 = ssub.s32 128, 128
          %2616 = vsyncadd %s2602, %s2615
          %s2617 = smul.addr %s37, 128
          %s2618 = scalar_lea.hbm %s18, %s2617
          %s2620 = sshll.u32 %s2605, 4
          %s2621 = int_to_ptr.vmem [resolvable:$true] %s2620
          %2623 = dma.vmem_to_hbm [thread:$0]  %s2621, 128, %s2618, %s2602
        $region96: #{tpu_custom_call.1} parent=91 // pred_fallthru
          _
        // Predicated region
        $region97: #{tpu_custom_call.1} parent=91 // pred_check
          %p2624 = pneg %p479
        $region98: #{tpu_custom_call.1} parent=91 // pred_check_branch
          %2626 = sbr.rel (%p2624) target = $region100
        $region99: #{tpu_custom_call.1} parent=91 // pred_region
          %s2628 = ssub.s32 128, 128
          %2629 = vsyncadd %s2607, %s2628
          %s2630 = smul.addr %s37, 128
          %s2631 = scalar_lea.hbm %s19, %s2630
          %s2633 = sshll.u32 %s2610, 4
          %s2634 = int_to_ptr.vmem [resolvable:$true] %s2633
          %2636 = dma.vmem_to_hbm [thread:$0]  %s2634, 128, %s2631, %s2607
        $region100: #{tpu_custom_call.1} parent=91 // pred_fallthru
          _
      $region92: #{tpu_custom_call.1} parent=5 // pred_fallthru
        _
      %p2637 = scmp.le.s32.totalorder 2, %s32
      // Predicated region
      $region101: #{tpu_custom_call.1} parent=5 // pred_check
        %p2638 = pneg %p2637
      $region102: #{tpu_custom_call.1} parent=5 // pred_check_branch
        %2640 = sbr.rel (%p2638) target = $region104
      $region103: #{tpu_custom_call.1} parent=5 // pred_region
        %s2641 = ssub.s32 %s32, 2
        // Predicated region
        $region105: #{tpu_custom_call.1} parent=103 // pred_check
          %p2642 = pneg %p459
        $region106: #{tpu_custom_call.1} parent=103 // pred_check_branch
          %2644 = sbr.rel (%p2642) target = $region108
        $region107: #{tpu_custom_call.1} parent=103 // pred_region
          %s2645 = sand.u32 %s444, 1
          %s2646 = scalar_lea.sflag [#allocation3], %s2645
          %s2647 = sand.u32 %s444, 1
          %s2648 = smul.addr %s2647, 8
          %s2649 = scalar_lea.vmem [#allocation2], %s2648
          %2650 = dma.done %s2646, 128
        $region108: #{tpu_custom_call.1} parent=103 // pred_fallthru
          _
        // Predicated region
        $region109: #{tpu_custom_call.1} parent=103 // pred_check
          %p2651 = pneg %p485
        $region110: #{tpu_custom_call.1} parent=103 // pred_check_branch
          %2653 = sbr.rel (%p2651) target = $region112
        $region111: #{tpu_custom_call.1} parent=103 // pred_region
          %s2654 = sand.u32 %s470, 1
          %s2655 = scalar_lea.sflag [#allocation5], %s2654
          %s2656 = sand.u32 %s470, 1
          %s2657 = smul.addr %s2656, 8
          %s2658 = scalar_lea.vmem [#allocation4], %s2657
          %2659 = dma.done %s2655, 128
        $region112: #{tpu_custom_call.1} parent=103 // pred_fallthru
          _
      $region104: #{tpu_custom_call.1} parent=5 // pred_fallthru
        _
    $region6: #{tpu_custom_call.1} parent=1 // loop_footer
      %s36 = sadd.s32 1, %s32
    $region7: #{tpu_custom_call.1} parent=1 // loop_footer_branch
      %31 = sbr.rel target = $region3
    $region8: #{tpu_custom_call.1} parent=1 // loop_exit
      _
    %2660 = vsyncpa [#allocation3], 1
    %s2661 = scalar_lea.sflag [#allocation3], 1
    %2662 = vsyncpa %s2661, 1
    %2663 = vsyncpa [#allocation5], 1
    %s2664 = scalar_lea.sflag [#allocation5], 1
    %2665 = vsyncpa %s2664, 1

// kernel: tpu_custom_call.1
$region0: #{tpu_custom_call.1}
  #allocation0 [shape = 'u32[]', space=smem, size = 0x4, offset = 0x4, fixed_abs, tag = 'smem constant byte address 0x4 - core index']
  #allocation1 [shape = 'u32[144,128]{1,0:T(1,128)}', space=vmem, size = 0x12000, scoped, tag = 'internal scratch']
  %s0 = inlined_call_operand.vmem [shape: f32[16,32], index: 0, kind: input, shape index: {}]
  %s1 = inlined_call_operand.vmem [shape: f32[256,32], index: 1, kind: input, shape index: {}]
  %s2 = inlined_call_operand.vmem [shape: f32[16,32], index: 2, kind: input, shape index: {}]
  %s3 = inlined_call_operand.vmem [shape: f32[256,32], index: 3, kind: input, shape index: {}]
  %s4 = inlined_call_operand.vmem [shape: f32[3,32,32], index: 4, kind: input, shape index: {}]
  %s5 = inlined_call_operand.vmem [shape: f32[3,32], index: 5, kind: input, shape index: {}]
  %s6 = inlined_call_operand.vmem [shape: f32[32,32], index: 6, kind: input, shape index: {}]
  %s7 = inlined_call_operand.vmem [shape: f32[1,32], index: 7, kind: input, shape index: {}]
  %s8 = inlined_call_operand.vmem [shape: f32[32,64], index: 8, kind: input, shape index: {}]
  %s9 = inlined_call_operand.vmem [shape: f32[1,64], index: 9, kind: input, shape index: {}]
  %s10 = inlined_call_operand.vmem [shape: f32[64,32], index: 10, kind: input, shape index: {}]
  %s11 = inlined_call_operand.vmem [shape: f32[1,32], index: 11, kind: input, shape index: {}]
  %s12 = inlined_call_operand.vmem [shape: f32[1,32], index: 12, kind: input, shape index: {}]
  %s13 = inlined_call_operand.vmem [shape: f32[1,32], index: 13, kind: input, shape index: {}]
  %s14 = inlined_call_operand.vmem [shape: f32[1,32], index: 14, kind: input, shape index: {}]
  %s15 = inlined_call_operand.vmem [shape: f32[1,32], index: 15, kind: input, shape index: {}]
  %s16 = inlined_call_operand.vmem [shape: f32[1,32], index: 16, kind: input, shape index: {}]
  %s17 = inlined_call_operand.vmem [shape: f32[1,32], index: 17, kind: input, shape index: {}]
  %s18 = inlined_call_operand.hbm [shape: f32[16,32], index: 18, kind: output, shape index: {0}]
  %s19 = inlined_call_operand.hbm [shape: f32[2,8,128], index: 19, kind: output, shape index: {1}]
  %20 = xla_tuple %s18, %s19
  %s21 = sld [smem:[#allocation0]]
  $region113: #{tpu_custom_call.1} parent=0
    _
  %s23 = ssub.s32 1, %s21
  %s24 = scalar_select 0, %s23, %s21
  $region1: #{tpu_custom_call.1} parent=0
    #allocation2 [shape = 'u8[8192]{0}', space=vmem, size = 0x2000, scoped, tag = 'output window, operand 0']
    #allocation3 [shape = 's32[2]{0}', space=sflag, size = 0x8, scoped, tag = 'scoped memory for tpu_custom_call.1']
    #allocation4 [shape = 'u8[8192]{0}', space=vmem, size = 0x2000, scoped, tag = 'output window, operand 1']
    #allocation5 [shape = 's32[2]{0}', space=sflag, size = 0x8, scoped, tag = 'scoped memory for tpu_custom_call.1']
    %25 = vsyncpa [#allocation3], 0
    %s26 = scalar_lea.sflag [#allocation3], 1
    %27 = vsyncpa %s26, 0
    %28 = vsyncpa [#allocation5], 0
    %s29 = scalar_lea.sflag [#allocation5], 1
    %30 = vsyncpa %s29, 0
    loop: start=0, step=1, limit=4
    $region2: #{tpu_custom_call.1} parent=1 // loop_pre_header
      _
    $region3: #{tpu_custom_call.1} parent=1 // loop_header
      %s32 = sphi 0, %s36
      %p33 = scmp.ge.s32.totalorder %s32, 4
      %s42 = sphi 0, %s44
      %s45 = sphi 0, %s42
      %s46 = sphi 0, %s45
      %s62 = sphi 0, %s46
      %s68 = sphi 0, %s70
      %s71 = sphi 0, %s68
      %s72 = sphi 0, %s71
      %s88 = sphi 0, %s72
      %s94 = sphi 0, %s96
      %s97 = sphi 0, %s94
      %s98 = sphi 0, %s97
      %s114 = sphi 0, %s98
      %s120 = sphi 0, %s122
      %s123 = sphi 0, %s120
      %s124 = sphi 0, %s123
      %s140 = sphi 0, %s124
      %s144 = sphi 0, %s144
      %s146 = sphi 0, %s144
      %s147 = sphi 0, %s146
      %s161 = sphi 0, %s147
      %s165 = sphi 0, %s165
      %s167 = sphi 0, %s165
      %s168 = sphi 0, %s167
      %s182 = sphi 0, %s168
      %s186 = sphi 0, %s186
      %s188 = sphi 0, %s186
      %s189 = sphi 0, %s188
      %s203 = sphi 0, %s189
      %s207 = sphi 0, %s207
      %s209 = sphi 0, %s207
      %s210 = sphi 0, %s209
      %s224 = sphi 0, %s210
      %s228 = sphi 0, %s228
      %s230 = sphi 0, %s228
      %s231 = sphi 0, %s230
      %s245 = sphi 0, %s231
      %s249 = sphi 0, %s249
      %s251 = sphi 0, %s249
      %s252 = sphi 0, %s251
      %s266 = sphi 0, %s252
      %s270 = sphi 0, %s270
      %s272 = sphi 0, %s270
      %s273 = sphi 0, %s272
      %s287 = sphi 0, %s273
      %s291 = sphi 0, %s291
      %s293 = sphi 0, %s291
      %s294 = sphi 0, %s293
      %s308 = sphi 0, %s294
      %s312 = sphi 0, %s312
      %s314 = sphi 0, %s312
      %s315 = sphi 0, %s314
      %s329 = sphi 0, %s315
      %s333 = sphi 0, %s333
      %s335 = sphi 0, %s333
      %s336 = sphi 0, %s335
      %s350 = sphi 0, %s336
      %s354 = sphi 0, %s354
      %s356 = sphi 0, %s354
      %s357 = sphi 0, %s356
      %s371 = sphi 0, %s357
      %s375 = sphi 0, %s375
      %s377 = sphi 0, %s375
      %s378 = sphi 0, %s377
      %s392 = sphi 0, %s378
      %s396 = sphi 0, %s396
      %s398 = sphi 0, %s396
      %s399 = sphi 0, %s398
      %s413 = sphi 0, %s399
      %s417 = sphi 0, %s417
      %s419 = sphi 0, %s417
      %s420 = sphi 0, %s419
      %s434 = sphi 0, %s420
      %s440 = sphi 0, %s442
      %s443 = sphi 0, %s440
      %s444 = sphi 0, %s443
      %s460 = sphi 0, %s444
      %s466 = sphi 0, %s468
      %s469 = sphi 0, %s466
      %s470 = sphi 0, %s469
      %s486 = sphi 0, %s470
    $region4: #{tpu_custom_call.1} parent=1 // loop_header_branch
      %35 = sbr.rel (%p33) target = $region8
    $region5: #{tpu_custom_call.1} parent=1 // loop_body
      %s37 = ssub.s32 %s32, 1
      %s38 = ssub.s32 %s32, 2
      %s39 = sadd.s32 %s32, 1
      %s40 = ssub.s32 %s32, %s39
      %p41 = scmp.eq.s32.totalorder %s40, 0
      %s43 = sadd.s32 %s42, 1
      %s44 = scalar_select %p41, %s42, %s43
      %p47 = pneg %p41
      %p48 = scmp.eq.s32.totalorder %s32, 1
      %p49 = por %p47, %p48
      %p50 = scmp.ne.s32.totalorder %s42, %s45
      %p51 = scmp.eq.s32.totalorder %s32, 0
      %p52 = por %p50, %p51
      %p53 = scmp.ne.s32.totalorder %s42, %s45
      %p54 = scmp.eq.s32.totalorder %s37, 1
      %p55 = por %p53, %p54
      %p56 = scmp.ne.s32.totalorder %s45, %s46
      %p57 = scmp.eq.s32.totalorder %s37, 0
      %p58 = por %p56, %p57
      %p59 = scmp.ne.s32.totalorder %s45, %s46
      %p60 = scmp.eq.s32.totalorder %s38, 1
      %p61 = por %p59, %p60
      %p63 = scmp.ne.s32.totalorder %s46, %s62
      %p64 = scmp.eq.s32.totalorder %s38, 0
      %p65 = por %p63, %p64
      %s66 = ssub.s32 %s32, %s39
      %p67 = scmp.eq.s32.totalorder %s66, 0
      %s69 = sadd.s32 %s68, 1
      %s70 = scalar_select %p67, %s68, %s69
      %p73 = pneg %p67
      %p74 = scmp.eq.s32.totalorder %s32, 1
      %p75 = por %p73, %p74
      %p76 = scmp.ne.s32.totalorder %s68, %s71
      %p77 = scmp.eq.s32.totalorder %s32, 0
      %p78 = por %p76, %p77
      %p79 = scmp.ne.s32.totalorder %s68, %s71
      %p80 = scmp.eq.s32.totalorder %s37, 1
      %p81 = por %p79, %p80
      %p82 = scmp.ne.s32.totalorder %s71, %s72
      %p83 = scmp.eq.s32.totalorder %s37, 0
      %p84 = por %p82, %p83
      %p85 = scmp.ne.s32.totalorder %s71, %s72
      %p86 = scmp.eq.s32.totalorder %s38, 1
      %p87 = por %p85, %p86
      %p89 = scmp.ne.s32.totalorder %s72, %s88
      %p90 = scmp.eq.s32.totalorder %s38, 0
      %p91 = por %p89, %p90
      %s92 = ssub.s32 %s32, %s39
      %p93 = scmp.eq.s32.totalorder %s92, 0
      %s95 = sadd.s32 %s94, 1
      %s96 = scalar_select %p93, %s94, %s95
      %p99 = pneg %p93
      %p100 = scmp.eq.s32.totalorder %s32, 1
      %p101 = por %p99, %p100
      %p102 = scmp.ne.s32.totalorder %s94, %s97
      %p103 = scmp.eq.s32.totalorder %s32, 0
      %p104 = por %p102, %p103
      %p105 = scmp.ne.s32.totalorder %s94, %s97
      %p106 = scmp.eq.s32.totalorder %s37, 1
      %p107 = por %p105, %p106
      %p108 = scmp.ne.s32.totalorder %s97, %s98
      %p109 = scmp.eq.s32.totalorder %s37, 0
      %p110 = por %p108, %p109
      %p111 = scmp.ne.s32.totalorder %s97, %s98
      %p112 = scmp.eq.s32.totalorder %s38, 1
      %p113 = por %p111, %p112
      %p115 = scmp.ne.s32.totalorder %s98, %s114
      %p116 = scmp.eq.s32.totalorder %s38, 0
      %p117 = por %p115, %p116
      %s118 = ssub.s32 %s32, %s39
      %p119 = scmp.eq.s32.totalorder %s118, 0
      %s121 = sadd.s32 %s120, 1
      %s122 = scalar_select %p119, %s120, %s121
      %p125 = pneg %p119
      %p126 = scmp.eq.s32.totalorder %s32, 1
      %p127 = por %p125, %p126
      %p128 = scmp.ne.s32.totalorder %s120, %s123
      %p129 = scmp.eq.s32.totalorder %s32, 0
      %p130 = por %p128, %p129
      %p131 = scmp.ne.s32.totalorder %s120, %s123
      %p132 = scmp.eq.s32.totalorder %s37, 1
      %p133 = por %p131, %p132
      %p134 = scmp.ne.s32.totalorder %s123, %s124
      %p135 = scmp.eq.s32.totalorder %s37, 0
      %p136 = por %p134, %p135
      %p137 = scmp.ne.s32.totalorder %s123, %s124
      %p138 = scmp.eq.s32.totalorder %s38, 1
      %p139 = por %p137, %p138
      %p141 = scmp.ne.s32.totalorder %s124, %s140
      %p142 = scmp.eq.s32.totalorder %s38, 0
      %p143 = por %p141, %p142
      %s145 = sadd.s32 %s144, 1
      %p148 = scmp.eq.s32.totalorder %s32, 1
      %p149 = scmp.ne.s32.totalorder %s144, %s146
      %p150 = scmp.eq.s32.totalorder %s32, 0
      %p151 = por %p149, %p150
      %p152 = scmp.ne.s32.totalorder %s144, %s146
      %p153 = scmp.eq.s32.totalorder %s37, 1
      %p154 = por %p152, %p153
      %p155 = scmp.ne.s32.totalorder %s146, %s147
      %p156 = scmp.eq.s32.totalorder %s37, 0
      %p157 = por %p155, %p156
      %p158 = scmp.ne.s32.totalorder %s146, %s147
      %p159 = scmp.eq.s32.totalorder %s38, 1
      %p160 = por %p158, %p159
      %p162 = scmp.ne.s32.totalorder %s147, %s161
      %p163 = scmp.eq.s32.totalorder %s38, 0
      %p164 = por %p162, %p163
      %s166 = sadd.s32 %s165, 1
      %p169 = scmp.eq.s32.totalorder %s32, 1
      %p170 = scmp.ne.s32.totalorder %s165, %s167
      %p171 = scmp.eq.s32.totalorder %s32, 0
      %p172 = por %p170, %p171
      %p173 = scmp.ne.s32.totalorder %s165, %s167
      %p174 = scmp.eq.s32.totalorder %s37, 1
      %p175 = por %p173, %p174
      %p176 = scmp.ne.s32.totalorder %s167, %s168
      %p177 = scmp.eq.s32.totalorder %s37, 0
      %p178 = por %p176, %p177
      %p179 = scmp.ne.s32.totalorder %s167, %s168
      %p180 = scmp.eq.s32.totalorder %s38, 1
      %p181 = por %p179, %p180
      %p183 = scmp.ne.s32.totalorder %s168, %s182
      %p184 = scmp.eq.s32.totalorder %s38, 0
      %p185 = por %p183, %p184
      %s187 = sadd.s32 %s186, 1
      %p190 = scmp.eq.s32.totalorder %s32, 1
      %p191 = scmp.ne.s32.totalorder %s186, %s188
      %p192 = scmp.eq.s32.totalorder %s32, 0
      %p193 = por %p191, %p192
      %p194 = scmp.ne.s32.totalorder %s186, %s188
      %p195 = scmp.eq.s32.totalorder %s37, 1
      %p196 = por %p194, %p195
      %p197 = scmp.ne.s32.totalorder %s188, %s189
      %p198 = scmp.eq.s32.totalorder %s37, 0
      %p199 = por %p197, %p198
      %p200 = scmp.ne.s32.totalorder %s188, %s189
      %p201 = scmp.eq.s32.totalorder %s38, 1
      %p202 = por %p200, %p201
      %p204 = scmp.ne.s32.totalorder %s189, %s203
      %p205 = scmp.eq.s32.totalorder %s38, 0
      %p206 = por %p204, %p205
      %s208 = sadd.s32 %s207, 1
      %p211 = scmp.eq.s32.totalorder %s32, 1
      %p212 = scmp.ne.s32.totalorder %s207, %s209
      %p213 = scmp.eq.s32.totalorder %s32, 0
      %p214 = por %p212, %p213
      %p215 = scmp.ne.s32.totalorder %s207, %s209
      %p216 = scmp.eq.s32.totalorder %s37, 1
      %p217 = por %p215, %p216
      %p218 = scmp.ne.s32.totalorder %s209, %s210
      %p219 = scmp.eq.s32.totalorder %s37, 0
      %p220 = por %p218, %p219
      %p221 = scmp.ne.s32.totalorder %s209, %s210
      %p222 = scmp.eq.s32.totalorder %s38, 1
      %p223 = por %p221, %p222
      %p225 = scmp.ne.s32.totalorder %s210, %s224
      %p226 = scmp.eq.s32.totalorder %s38, 0
      %p227 = por %p225, %p226
      %s229 = sadd.s32 %s228, 1
      %p232 = scmp.eq.s32.totalorder %s32, 1
      %p233 = scmp.ne.s32.totalorder %s228, %s230
      %p234 = scmp.eq.s32.totalorder %s32, 0
      %p235 = por %p233, %p234
      %p236 = scmp.ne.s32.totalorder %s228, %s230
      %p237 = scmp.eq.s32.totalorder %s37, 1
      %p238 = por %p236, %p237
      %p239 = scmp.ne.s32.totalorder %s230, %s231
      %p240 = scmp.eq.s32.totalorder %s37, 0
      %p241 = por %p239, %p240
      %p242 = scmp.ne.s32.totalorder %s230, %s231
      %p243 = scmp.eq.s32.totalorder %s38, 1
      %p244 = por %p242, %p243
      %p246 = scmp.ne.s32.totalorder %s231, %s245
      %p247 = scmp.eq.s32.totalorder %s38, 0
      %p248 = por %p246, %p247
      %s250 = sadd.s32 %s249, 1
      %p253 = scmp.eq.s32.totalorder %s32, 1
      %p254 = scmp.ne.s32.totalorder %s249, %s251
      %p255 = scmp.eq.s32.totalorder %s32, 0
      %p256 = por %p254, %p255
      %p257 = scmp.ne.s32.totalorder %s249, %s251
      %p258 = scmp.eq.s32.totalorder %s37, 1
      %p259 = por %p257, %p258
      %p260 = scmp.ne.s32.totalorder %s251, %s252
      %p261 = scmp.eq.s32.totalorder %s37, 0
      %p262 = por %p260, %p261
      %p263 = scmp.ne.s32.totalorder %s251, %s252
      %p264 = scmp.eq.s32.totalorder %s38, 1
      %p265 = por %p263, %p264
      %p267 = scmp.ne.s32.totalorder %s252, %s266
      %p268 = scmp.eq.s32.totalorder %s38, 0
      %p269 = por %p267, %p268
      %s271 = sadd.s32 %s270, 1
      %p274 = scmp.eq.s32.totalorder %s32, 1
      %p275 = scmp.ne.s32.totalorder %s270, %s272
      %p276 = scmp.eq.s32.totalorder %s32, 0
      %p277 = por %p275, %p276
      %p278 = scmp.ne.s32.totalorder %s270, %s272
      %p279 = scmp.eq.s32.totalorder %s37, 1
      %p280 = por %p278, %p279
      %p281 = scmp.ne.s32.totalorder %s272, %s273
      %p282 = scmp.eq.s32.totalorder %s37, 0
      %p283 = por %p281, %p282
      %p284 = scmp.ne.s32.totalorder %s272, %s273
      %p285 = scmp.eq.s32.totalorder %s38, 1
      %p286 = por %p284, %p285
      %p288 = scmp.ne.s32.totalorder %s273, %s287
      %p289 = scmp.eq.s32.totalorder %s38, 0
      %p290 = por %p288, %p289
      %s292 = sadd.s32 %s291, 1
      %p295 = scmp.eq.s32.totalorder %s32, 1
      %p296 = scmp.ne.s32.totalorder %s291, %s293
      %p297 = scmp.eq.s32.totalorder %s32, 0
      %p298 = por %p296, %p297
      %p299 = scmp.ne.s32.totalorder %s291, %s293
      %p300 = scmp.eq.s32.totalorder %s37, 1
      %p301 = por %p299, %p300
      %p302 = scmp.ne.s32.totalorder %s293, %s294
      %p303 = scmp.eq.s32.totalorder %s37, 0
      %p304 = por %p302, %p303
      %p305 = scmp.ne.s32.totalorder %s293, %s294
      %p306 = scmp.eq.s32.totalorder %s38, 1
      %p307 = por %p305, %p306
      %p309 = scmp.ne.s32.totalorder %s294, %s308
      %p310 = scmp.eq.s32.totalorder %s38, 0
      %p311 = por %p309, %p310
      %s313 = sadd.s32 %s312, 1
      %p316 = scmp.eq.s32.totalorder %s32, 1
      %p317 = scmp.ne.s32.totalorder %s312, %s314
      %p318 = scmp.eq.s32.totalorder %s32, 0
      %p319 = por %p317, %p318
      %p320 = scmp.ne.s32.totalorder %s312, %s314
      %p321 = scmp.eq.s32.totalorder %s37, 1
      %p322 = por %p320, %p321
      %p323 = scmp.ne.s32.totalorder %s314, %s315
      %p324 = scmp.eq.s32.totalorder %s37, 0
      %p325 = por %p323, %p324
      %p326 = scmp.ne.s32.totalorder %s314, %s315
      %p327 = scmp.eq.s32.totalorder %s38, 1
      %p328 = por %p326, %p327
      %p330 = scmp.ne.s32.totalorder %s315, %s329
      %p331 = scmp.eq.s32.totalorder %s38, 0
      %p332 = por %p330, %p331
      %s334 = sadd.s32 %s333, 1
      %p337 = scmp.eq.s32.totalorder %s32, 1
      %p338 = scmp.ne.s32.totalorder %s333, %s335
      %p339 = scmp.eq.s32.totalorder %s32, 0
      %p340 = por %p338, %p339
      %p341 = scmp.ne.s32.totalorder %s333, %s335
      %p342 = scmp.eq.s32.totalorder %s37, 1
      %p343 = por %p341, %p342
      %p344 = scmp.ne.s32.totalorder %s335, %s336
      %p345 = scmp.eq.s32.totalorder %s37, 0
      %p346 = por %p344, %p345
      %p347 = scmp.ne.s32.totalorder %s335, %s336
      %p348 = scmp.eq.s32.totalorder %s38, 1
      %p349 = por %p347, %p348
      %p351 = scmp.ne.s32.totalorder %s336, %s350
      %p352 = scmp.eq.s32.totalorder %s38, 0
      %p353 = por %p351, %p352
      %s355 = sadd.s32 %s354, 1
      %p358 = scmp.eq.s32.totalorder %s32, 1
      %p359 = scmp.ne.s32.totalorder %s354, %s356
      %p360 = scmp.eq.s32.totalorder %s32, 0
      %p361 = por %p359, %p360
      %p362 = scmp.ne.s32.totalorder %s354, %s356
      %p363 = scmp.eq.s32.totalorder %s37, 1
      %p364 = por %p362, %p363
      %p365 = scmp.ne.s32.totalorder %s356, %s357
      %p366 = scmp.eq.s32.totalorder %s37, 0
      %p367 = por %p365, %p366
      %p368 = scmp.ne.s32.totalorder %s356, %s357
      %p369 = scmp.eq.s32.totalorder %s38, 1
      %p370 = por %p368, %p369
      %p372 = scmp.ne.s32.totalorder %s357, %s371
      %p373 = scmp.eq.s32.totalorder %s38, 0
      %p374 = por %p372, %p373
      %s376 = sadd.s32 %s375, 1
      %p379 = scmp.eq.s32.totalorder %s32, 1
      %p380 = scmp.ne.s32.totalorder %s375, %s377
      %p381 = scmp.eq.s32.totalorder %s32, 0
      %p382 = por %p380, %p381
      %p383 = scmp.ne.s32.totalorder %s375, %s377
      %p384 = scmp.eq.s32.totalorder %s37, 1
      %p385 = por %p383, %p384
      %p386 = scmp.ne.s32.totalorder %s377, %s378
      %p387 = scmp.eq.s32.totalorder %s37, 0
      %p388 = por %p386, %p387
      %p389 = scmp.ne.s32.totalorder %s377, %s378
      %p390 = scmp.eq.s32.totalorder %s38, 1
      %p391 = por %p389, %p390
      %p393 = scmp.ne.s32.totalorder %s378, %s392
      %p394 = scmp.eq.s32.totalorder %s38, 0
      %p395 = por %p393, %p394
      %s397 = sadd.s32 %s396, 1
      %p400 = scmp.eq.s32.totalorder %s32, 1
      %p401 = scmp.ne.s32.totalorder %s396, %s398
      %p402 = scmp.eq.s32.totalorder %s32, 0
      %p403 = por %p401, %p402
      %p404 = scmp.ne.s32.totalorder %s396, %s398
      %p405 = scmp.eq.s32.totalorder %s37, 1
      %p406 = por %p404, %p405
      %p407 = scmp.ne.s32.totalorder %s398, %s399
      %p408 = scmp.eq.s32.totalorder %s37, 0
      %p409 = por %p407, %p408
      %p410 = scmp.ne.s32.totalorder %s398, %s399
      %p411 = scmp.eq.s32.totalorder %s38, 1
      %p412 = por %p410, %p411
      %p414 = scmp.ne.s32.totalorder %s399, %s413
      %p415 = scmp.eq.s32.totalorder %s38, 0
      %p416 = por %p414, %p415
      %s418 = sadd.s32 %s417, 1
      %p421 = scmp.eq.s32.totalorder %s32, 1
      %p422 = scmp.ne.s32.totalorder %s417, %s419
      %p423 = scmp.eq.s32.totalorder %s32, 0
      %p424 = por %p422, %p423
      %p425 = scmp.ne.s32.totalorder %s417, %s419
      %p426 = scmp.eq.s32.totalorder %s37, 1
      %p427 = por %p425, %p426
      %p428 = scmp.ne.s32.totalorder %s419, %s420
      %p429 = scmp.eq.s32.totalorder %s37, 0
      %p430 = por %p428, %p429
      %p431 = scmp.ne.s32.totalorder %s419, %s420
      %p432 = scmp.eq.s32.totalorder %s38, 1
      %p433 = por %p431, %p432
      %p435 = scmp.ne.s32.totalorder %s420, %s434
      %p436 = scmp.eq.s32.totalorder %s38, 0
      %p437 = por %p435, %p436
      %s438 = ssub.s32 %s32, %s39
      %p439 = scmp.eq.s32.totalorder %s438, 0
      %s441 = sadd.s32 %s440, 1
      %s442 = scalar_select %p439, %s440, %s441
      %p445 = pneg %p439
      %p446 = scmp.eq.s32.totalorder %s32, 1
      %p447 = por %p445, %p446
      %p448 = scmp.ne.s32.totalorder %s440, %s443
      %p449 = scmp.eq.s32.totalorder %s32, 0
      %p450 = por %p448, %p449
      %p451 = scmp.ne.s32.totalorder %s440, %s443
      %p452 = scmp.eq.s32.totalorder %s37, 1
      %p453 = por %p451, %p452
      %p454 = scmp.ne.s32.totalorder %s443, %s444
      %p455 = scmp.eq.s32.totalorder %s37, 0
      %p456 = por %p454, %p455
      %p457 = scmp.ne.s32.totalorder %s443, %s444
      %p458 = scmp.eq.s32.totalorder %s38, 1
      %p459 = por %p457, %p458
      %p461 = scmp.ne.s32.totalorder %s444, %s460
      %p462 = scmp.eq.s32.totalorder %s38, 0
      %p463 = por %p461, %p462
      %s464 = ssub.s32 %s32, %s39
      %p465 = scmp.eq.s32.totalorder %s464, 0
      %s467 = sadd.s32 %s466, 1
      %s468 = scalar_select %p465, %s466, %s467
      %p471 = pneg %p465
      %p472 = scmp.eq.s32.totalorder %s32, 1
      %p473 = por %p471, %p472
      %p474 = scmp.ne.s32.totalorder %s466, %s469
      %p475 = scmp.eq.s32.totalorder %s32, 0
      %p476 = por %p474, %p475
      %p477 = scmp.ne.s32.totalorder %s466, %s469
      %p478 = scmp.eq.s32.totalorder %s37, 1
      %p479 = por %p477, %p478
      %p480 = scmp.ne.s32.totalorder %s469, %s470
      %p481 = scmp.eq.s32.totalorder %s37, 0
      %p482 = por %p480, %p481
      %p483 = scmp.ne.s32.totalorder %s469, %s470
      %p484 = scmp.eq.s32.totalorder %s38, 1
      %p485 = por %p483, %p484
      %p487 = scmp.ne.s32.totalorder %s470, %s486
      %p488 = scmp.eq.s32.totalorder %s38, 0
      %p489 = por %p487, %p488
      %p490 = scmp.le.s32.totalorder 1, %s32
      %p491 = scmp.lt.s32.totalorder %s32, 3
      %p492 = pnand %p490, %p491
      %p493 = pneg %p492
      // Predicated region
      $region9: #{tpu_custom_call.1} parent=5 // pred_check
        _
      $region10: #{tpu_custom_call.1} parent=5 // pred_check_branch
        %495 = sbr.rel (%p492) target = $region12
      $region11: #{tpu_custom_call.1} parent=5 // pred_region
        %s496 = ssub.s32 %s32, 1
        // Predicated region
        $region13: #{tpu_custom_call.1} parent=11 // pred_check
          %p497 = pneg %p157
        $region14: #{tpu_custom_call.1} parent=11 // pred_check_branch
          %499 = sbr.rel (%p497) target = $region16
        $region15: #{tpu_custom_call.1} parent=11 // pred_region
          _
        $region16: #{tpu_custom_call.1} parent=11 // pred_fallthru
          _
        // Predicated region
        $region17: #{tpu_custom_call.1} parent=11 // pred_check
          %p500 = pneg %p178
        $region18: #{tpu_custom_call.1} parent=11 // pred_check_branch
          %502 = sbr.rel (%p500) target = $region20
        $region19: #{tpu_custom_call.1} parent=11 // pred_region
          _
        $region20: #{tpu_custom_call.1} parent=11 // pred_fallthru
          _
        // Predicated region
        $region21: #{tpu_custom_call.1} parent=11 // pred_check
          %p503 = pneg %p199
        $region22: #{tpu_custom_call.1} parent=11 // pred_check_branch
          %505 = sbr.rel (%p503) target = $region24
        $region23: #{tpu_custom_call.1} parent=11 // pred_region
          _
        $region24: #{tpu_custom_call.1} parent=11 // pred_fallthru
          _
        // Predicated region
        $region25: #{tpu_custom_call.1} parent=11 // pred_check
          %p506 = pneg %p220
        $region26: #{tpu_custom_call.1} parent=11 // pred_check_branch
          %508 = sbr.rel (%p506) target = $region28
        $region27: #{tpu_custom_call.1} parent=11 // pred_region
          _
        $region28: #{tpu_custom_call.1} parent=11 // pred_fallthru
          _
        // Predicated region
        $region29: #{tpu_custom_call.1} parent=11 // pred_check
          %p509 = pneg %p241
        $region30: #{tpu_custom_call.1} parent=11 // pred_check_branch
          %511 = sbr.rel (%p509) target = $region32
        $region31: #{tpu_custom_call.1} parent=11 // pred_region
          _
        $region32: #{tpu_custom_call.1} parent=11 // pred_fallthru
          _
        // Predicated region
        $region33: #{tpu_custom_call.1} parent=11 // pred_check
          %p512 = pneg %p262
        $region34: #{tpu_custom_call.1} parent=11 // pred_check_branch
          %514 = sbr.rel (%p512) target = $region36
        $region35: #{tpu_custom_call.1} parent=11 // pred_region
          _
        $region36: #{tpu_custom_call.1} parent=11 // pred_fallthru
          _
        // Predicated region
        $region37: #{tpu_custom_call.1} parent=11 // pred_check
          %p515 = pneg %p283
        $region38: #{tpu_custom_call.1} parent=11 // pred_check_branch
          %517 = sbr.rel (%p515) target = $region40
        $region39: #{tpu_custom_call.1} parent=11 // pred_region
          _
        $region40: #{tpu_custom_call.1} parent=11 // pred_fallthru
          _
        // Predicated region
        $region41: #{tpu_custom_call.1} parent=11 // pred_check
          %p518 = pneg %p304
        $region42: #{tpu_custom_call.1} parent=11 // pred_check_branch
          %520 = sbr.rel (%p518) target = $region44
        $region43: #{tpu_custom_call.1} parent=11 // pred_region
          _
        $region44: #{tpu_custom_call.1} parent=11 // pred_fallthru
          _
        // Predicated region
        $region45: #{tpu_custom_call.1} parent=11 // pred_check
          %p521 = pneg %p325
        $region46: #{tpu_custom_call.1} parent=11 // pred_check_branch
          %523 = sbr.rel (%p521) target = $region48
        $region47: #{tpu_custom_call.1} parent=11 // pred_region
          _
        $region48: #{tpu_custom_call.1} parent=11 // pred_fallthru
          _
        // Predicated region
        $region49: #{tpu_custom_call.1} parent=11 // pred_check
          %p524 = pneg %p346
        $region50: #{tpu_custom_call.1} parent=11 // pred_check_branch
          %526 = sbr.rel (%p524) target = $region52
        $region51: #{tpu_custom_call.1} parent=11 // pred_region
          _
        $region52: #{tpu_custom_call.1} parent=11 // pred_fallthru
          _
        // Predicated region
        $region53: #{tpu_custom_call.1} parent=11 // pred_check
          %p527 = pneg %p367
        $region54: #{tpu_custom_call.1} parent=11 // pred_check_branch
          %529 = sbr.rel (%p527) target = $region56
        $region55: #{tpu_custom_call.1} parent=11 // pred_region
          _
        $region56: #{tpu_custom_call.1} parent=11 // pred_fallthru
          _
        // Predicated region
        $region57: #{tpu_custom_call.1} parent=11 // pred_check
          %p530 = pneg %p388
        $region58: #{tpu_custom_call.1} parent=11 // pred_check_branch
          %532 = sbr.rel (%p530) target = $region60
        $region59: #{tpu_custom_call.1} parent=11 // pred_region
          _
        $region60: #{tpu_custom_call.1} parent=11 // pred_fallthru
          _
        // Predicated region
        $region61: #{tpu_custom_call.1} parent=11 // pred_check
          %p533 = pneg %p409
        $region62: #{tpu_custom_call.1} parent=11 // pred_check_branch
          %535 = sbr.rel (%p533) target = $region64
        $region63: #{tpu_custom_call.1} parent=11 // pred_region
          _
        $region64: #{tpu_custom_call.1} parent=11 // pred_fallthru
          _
        // Predicated region
        $region65: #{tpu_custom_call.1} parent=11 // pred_check
          %p536 = pneg %p430
        $region66: #{tpu_custom_call.1} parent=11 // pred_check_branch
          %538 = sbr.rel (%p536) target = $region68
        $region67: #{tpu_custom_call.1} parent=11 // pred_region
          _
        $region68: #{tpu_custom_call.1} parent=11 // pred_fallthru
          _
      $region12: #{tpu_custom_call.1} parent=5 // pred_fallthru
        _
      %p539 = scmp.lt.s32.totalorder %s32, 2
      // Predicated region
      $region69: #{tpu_custom_call.1} parent=5 // pred_check
        %p540 = pneg %p539
      $region70: #{tpu_custom_call.1} parent=5 // pred_check_branch
        %542 = sbr.rel (%p540) target = $region72
      $region71: #{tpu_custom_call.1} parent=5 // pred_region
        // Predicated region
        $region73: #{tpu_custom_call.1} parent=71 // pred_check
          %p543 = pneg %p52
        $region74: #{tpu_custom_call.1} parent=71 // pred_check_branch
          %545 = sbr.rel (%p543) target = $region76
        $region75: #{tpu_custom_call.1} parent=71 // pred_region
          %p546 = scmp.lt.s32.totalorder %s32, 1
          %s547 = scalar_select %p546, %s32, 1
          %s548 = smul.addr %s547, 8
          %s549 = scalar_lea.vmem %s0, %s548
        $region76: #{tpu_custom_call.1} parent=71 // pred_fallthru
          _
        // Predicated region
        $region77: #{tpu_custom_call.1} parent=71 // pred_check
          %p550 = pneg %p78
        $region78: #{tpu_custom_call.1} parent=71 // pred_check_branch
          %552 = sbr.rel (%p550) target = $region80
        $region79: #{tpu_custom_call.1} parent=71 // pred_region
          %s553 = smul.u32 16, %s32
          %p554 = scmp.lt.s32.totalorder %s553, 31
          %s555 = scalar_select %p554, %s553, 31
          %s556 = smul.addr %s555, 8
          %s557 = scalar_lea.vmem %s1, %s556
          %s558 = smul.u32 16, %s32
        $region80: #{tpu_custom_call.1} parent=71 // pred_fallthru
          _
        // Predicated region
        $region81: #{tpu_custom_call.1} parent=71 // pred_check
          %p559 = pneg %p104
        $region82: #{tpu_custom_call.1} parent=71 // pred_check_branch
          %561 = sbr.rel (%p559) target = $region84
        $region83: #{tpu_custom_call.1} parent=71 // pred_region
          %p562 = scmp.lt.s32.totalorder %s32, 1
          %s563 = scalar_select %p562, %s32, 1
          %s564 = smul.addr %s563, 8
          %s565 = scalar_lea.vmem %s2, %s564
        $region84: #{tpu_custom_call.1} parent=71 // pred_fallthru
          _
        // Predicated region
        $region85: #{tpu_custom_call.1} parent=71 // pred_check
          %p566 = pneg %p130
        $region86: #{tpu_custom_call.1} parent=71 // pred_check_branch
          %568 = sbr.rel (%p566) target = $region88
        $region87: #{tpu_custom_call.1} parent=71 // pred_region
          %s569 = smul.u32 16, %s32
          %p570 = scmp.lt.s32.totalorder %s569, 31
          %s571 = scalar_select %p570, %s569, 31
          %s572 = smul.addr %s571, 8
          %s573 = scalar_lea.vmem %s3, %s572
          %s574 = smul.u32 16, %s32
        $region88: #{tpu_custom_call.1} parent=71 // pred_fallthru
          _
      $region72: #{tpu_custom_call.1} parent=5 // pred_fallthru
        _
      %p575 = scmp.le.s32.totalorder 1, %s32
      %p576 = scmp.lt.s32.totalorder %s32, 3
      %p577 = pnand %p575, %p576
      %p578 = pneg %p577
      // Predicated region
      $region89: #{tpu_custom_call.1} parent=5 // pred_check
        _
      $region90: #{tpu_custom_call.1} parent=5 // pred_check_branch
        %580 = sbr.rel (%p577) target = $region92
      $region91: #{tpu_custom_call.1} parent=5 // pred_region
        %s581 = ssub.s32 %s32, 1
        %p582 = scmp.lt.s32.totalorder %s37, 1
        %s583 = scalar_select %p582, %s37, 1
        %s584 = smul.addr %s583, 8
        %s585 = scalar_lea.vmem %s0, %s584
        %p586 = pneg %p58
        %p587 = pneg %p55
        %s588 = smul.u32 16, %s37
        %p589 = scmp.lt.s32.totalorder %s588, 31
        %s590 = scalar_select %p589, %s588, 31
        %s591 = smul.addr %s590, 8
        %s592 = scalar_lea.vmem %s1, %s591
        %p593 = pneg %p84
        %p594 = pneg %p81
        %p595 = scmp.lt.s32.totalorder %s37, 1
        %s596 = scalar_select %p595, %s37, 1
        %s597 = smul.addr %s596, 8
        %s598 = scalar_lea.vmem %s2, %s597
        %p599 = pneg %p110
        %p600 = pneg %p107
        %s601 = smul.u32 16, %s37
        %p602 = scmp.lt.s32.totalorder %s601, 31
        %s603 = scalar_select %p602, %s601, 31
        %s604 = smul.addr %s603, 8
        %s605 = scalar_lea.vmem %s3, %s604
        %p606 = pneg %p136
        %p607 = pneg %p133
        %p608 = pneg %p157
        %p609 = pneg %p154
        %p610 = pneg %p178
        %p611 = pneg %p175
        %p612 = pneg %p199
        %p613 = pneg %p196
        %p614 = pneg %p220
        %p615 = pneg %p217
        %p616 = pneg %p241
        %p617 = pneg %p238
        %p618 = pneg %p262
        %p619 = pneg %p259
        %p620 = pneg %p283
        %p621 = pneg %p280
        %p622 = pneg %p304
        %p623 = pneg %p301
        %p624 = pneg %p325
        %p625 = pneg %p322
        %p626 = pneg %p346
        %p627 = pneg %p343
        %p628 = pneg %p367
        %p629 = pneg %p364
        %p630 = pneg %p388
        %p631 = pneg %p385
        %p632 = pneg %p409
        %p633 = pneg %p406
        %p634 = pneg %p430
        %p635 = pneg %p427
        %p636 = pneg %p456
        %p637 = pneg %p453
        %s638 = sand.u32 %s443, 1
        %s639 = scalar_lea.sflag [#allocation3], %s638
        %s640 = sand.u32 %s443, 1
        %s641 = smul.addr %s640, 8
        %s642 = scalar_lea.vmem [#allocation2], %s641
        %p643 = pneg %p482
        %p644 = pneg %p479
        %s645 = sand.u32 %s469, 1
        %s646 = scalar_lea.sflag [#allocation5], %s645
        %s647 = sand.u32 %s469, 1
        %s648 = smul.addr %s647, 8
        %s649 = scalar_lea.vmem [#allocation4], %s648
        %p650 = scmp.lt.s32.totalorder %s37, 1
        %s651 = scalar_select %p650, %s37, 1
        %s652 = smul.addr %s651, 8
        %s653 = scalar_lea.vmem %s0, %s652
        %s654 = smul.u32 16, %s37
        %p655 = scmp.lt.s32.totalorder %s654, 31
        %s656 = scalar_select %p655, %s654, 31
        %s657 = smul.addr %s656, 8
        %s658 = scalar_lea.vmem %s1, %s657
        %s659 = smul.u32 16, %s37
        %p660 = scmp.lt.s32.totalorder %s37, 1
        %s661 = scalar_select %p660, %s37, 1
        %s662 = smul.addr %s661, 8
        %s663 = scalar_lea.vmem %s2, %s662
        %s664 = smul.u32 16, %s37
        %p665 = scmp.lt.s32.totalorder %s664, 31
        %s666 = scalar_select %p665, %s664, 31
        %s667 = smul.addr %s666, 8
        %s668 = scalar_lea.vmem %s3, %s667
        %s669 = smul.u32 16, %s37
        %v670 = vld [vmem:[%s653] sm:$0xff]
        %v671 = vld [vmem:[%s663] sm:$0xff]
        %v672 = vld [vmem:[%s658] sm:$0xff]
        %v673 = vld [vmem:[%s658 + $0x8] sm:$0xff]
        %v674 = vld [vmem:[%s658 + $0x10] sm:$0xff]
        %v675 = vld [vmem:[%s658 + $0x18] sm:$0xff]
        %v676 = vld [vmem:[%s658 + $0x20] sm:$0xff]
        %v677 = vld [vmem:[%s658 + $0x28] sm:$0xff]
        %v678 = vld [vmem:[%s658 + $0x30] sm:$0xff]
        %v679 = vld [vmem:[%s658 + $0x38] sm:$0xff]
        %v680 = vld [vmem:[%s658 + $0x40] sm:$0xff]
        %v681 = vld [vmem:[%s658 + $0x48] sm:$0xff]
        %v682 = vld [vmem:[%s658 + $0x50] sm:$0xff]
        %v683 = vld [vmem:[%s658 + $0x58] sm:$0xff]
        %v684 = vld [vmem:[%s658 + $0x60] sm:$0xff]
        %v685 = vld [vmem:[%s658 + $0x68] sm:$0xff]
        %v686 = vld [vmem:[%s658 + $0x70] sm:$0xff]
        %v687 = vld [vmem:[%s658 + $0x78] sm:$0xff]
        %v688 = vld [vmem:[%s668] sm:$0xff]
        %v689 = vld [vmem:[%s668 + $0x8] sm:$0xff]
        %v690 = vld [vmem:[%s668 + $0x10] sm:$0xff]
        %v691 = vld [vmem:[%s668 + $0x18] sm:$0xff]
        %v692 = vld [vmem:[%s668 + $0x20] sm:$0xff]
        %v693 = vld [vmem:[%s668 + $0x28] sm:$0xff]
        %v694 = vld [vmem:[%s668 + $0x30] sm:$0xff]
        %v695 = vld [vmem:[%s668 + $0x38] sm:$0xff]
        %v696 = vld [vmem:[%s668 + $0x40] sm:$0xff]
        %v697 = vld [vmem:[%s668 + $0x48] sm:$0xff]
        %v698 = vld [vmem:[%s668 + $0x50] sm:$0xff]
        %v699 = vld [vmem:[%s668 + $0x58] sm:$0xff]
        %v700 = vld [vmem:[%s668 + $0x60] sm:$0xff]
        %v701 = vld [vmem:[%s668 + $0x68] sm:$0xff]
        %v702 = vld [vmem:[%s668 + $0x70] sm:$0xff]
        %v703 = vld [vmem:[%s668 + $0x78] sm:$0xff]
        %v704 = vld [vmem:[%s12] sm:$0x1]
        %v705 = vld [vmem:[%s13] sm:$0x1]
        %vm706 = vcmask 261120
        %v707 = vsel %vm706, %v670, 0.0
        %708 = vadd.xlane.f32.xlu0 %v707
        %v709 = vpop.xlane.xlu0 %708
        %v710 = vrcp.pop 32.0
        %v711 = vmul.f32 %v709, %v710
        %v712 = vsub.f32 %v670, %v711
        %v713 = vmul.f32 %v712, %v712
        %v714 = vsel %vm706, %v713, 0.0
        %715 = vadd.xlane.f32.xlu0 %v714
        %v716 = vpop.xlane.xlu0 %715
        %v717 = vmul.f32 %v716, %v710
        %v718 = vadd.f32 %v717, 1e-05
        %v719 = vrsqrt.pop %v718
        %v720 = vmul.f32 %v712, %v719
        %v722 = vlaneseq
        %v723 = vshrl.u32 %v722, 7
        %v724 = vsub.s32 0, %v723
        %v725 = vrot.slane %v704, %v724
        %v727 = vmul.f32 %v720, %v725
        %v729 = vlaneseq
        %v730 = vshrl.u32 %v729, 7
        %v731 = vsub.s32 0, %v730
        %v732 = vrot.slane %v705, %v731
        %v734 = vadd.f32 %v727, %v732
        %v735 = vld [vmem:[%s5] sm:$0x7]
        %v736 = vadd.f32 %v734, %v671
        %v737 = vadd.f32 %v672, %v688
        %v738 = vadd.f32 %v673, %v689
        %v739 = vadd.f32 %v674, %v690
        %v740 = vadd.f32 %v675, %v691
        %v741 = vadd.f32 %v676, %v692
        %v742 = vadd.f32 %v677, %v693
        %v743 = vadd.f32 %v678, %v694
        %v744 = vadd.f32 %v679, %v695
        %v745 = vadd.f32 %v680, %v696
        %v746 = vadd.f32 %v681, %v697
        %v747 = vadd.f32 %v682, %v698
        %v748 = vadd.f32 %v683, %v699
        %v749 = vadd.f32 %v684, %v700
        %v750 = vadd.f32 %v685, %v701
        %v751 = vadd.f32 %v686, %v702
        %v752 = vadd.f32 %v687, %v703
        %v753 = vld [vmem:[%s4] sm:$0xff]
        %v754 = vld [vmem:[%s4 + $0x8] sm:$0xff]
        %v755 = vld [vmem:[%s4 + $0x10] sm:$0xff]
        %v756 = vld [vmem:[%s4 + $0x18] sm:$0xff]
        %v757 = vlaneseq
        %v758 = vshrl.u32 %v757, 7
        %v759 = vsub.s32 0, %v758
        %v760 = vrot.slane %v735, %v759
        %v762 = vsel %vm706, %v736, 0
        %764 = vmatprep.subr.mxu0 0.0
        %765 = vmatpush1.msra.mxu0 0.0
        %766 = vmatprep.subr.mxu0 0.0
        %767 = vmatpush1.msra.mxu0 0.0
        %768 = vmatprep.subr.mxu0 0.0
        %769 = vmatpush1.msra.mxu0 0.0
        %770 = vmatprep.subr.mxu0 0.0
        %771 = vmatpush1.msra.mxu0 0.0
        %772 = vmatprep.subr.mxu0 0.0
        %773 = vmatpush1.msra.mxu0 0.0
        %774 = vmatprep.subr.mxu0 0.0
        %775 = vmatpush1.msra.mxu0 0.0
        %776 = vmatprep.subr.mxu0 0.0
        %777 = vmatpush1.msra.mxu0 0.0
        %778 = vmatprep.subr.mxu0 0.0
        %779 = vmatpush1.msra.mxu0 0.0
        %780 = vmatprep.subr.mxu0 0.0
        %781 = vmatpush1.msra.mxu0 0.0
        %782 = vmatprep.subr.mxu0 0.0
        %783 = vmatpush1.msra.mxu0 0.0
        %784 = vmatprep.subr.mxu0 0.0
        %785 = vmatpush1.msra.mxu0 0.0
        %786 = vmatprep.subr.mxu0 0.0
        %787 = vmatpush1.msra.mxu0 0.0
        %788 = vmatprep.subr.mxu0 0.0
        %789 = vmatpush1.msra.mxu0 %v756
        %790 = vmatprep.subr.mxu0 0.0
        %791 = vmatpush1.msra.mxu0 %v755
        %792 = vmatprep.subr.mxu0 0.0
        %793 = vmatpush1.msra.mxu0 %v754
        %794 = vmatprep.subr.mxu0 0.0
        %795 = vmatpush1.msra.mxu0 %v753
        %796 = vmatprep.subr.mxu0 0.0
        %797 = vmatpush2.msra.mxu0 0.0
        %798 = vmatprep.subr.mxu0 0.0
        %799 = vmatpush2.msra.mxu0 0.0
        %800 = vmatprep.subr.mxu0 0.0
        %801 = vmatpush2.msra.mxu0 0.0
        %802 = vmatprep.subr.mxu0 0.0
        %803 = vmatpush2.msra.mxu0 0.0
        %804 = vmatprep.subr.mxu0 0.0
        %805 = vmatpush2.msra.mxu0 0.0
        %806 = vmatprep.subr.mxu0 0.0
        %807 = vmatpush2.msra.mxu0 0.0
        %808 = vmatprep.subr.mxu0 0.0
        %809 = vmatpush2.msra.mxu0 0.0
        %810 = vmatprep.subr.mxu0 0.0
        %811 = vmatpush2.msra.mxu0 0.0
        %812 = vmatprep.subr.mxu0 0.0
        %813 = vmatpush2.msra.mxu0 0.0
        %814 = vmatprep.subr.mxu0 0.0
        %815 = vmatpush2.msra.mxu0 0.0
        %816 = vmatprep.subr.mxu0 0.0
        %817 = vmatpush2.msra.mxu0 0.0
        %818 = vmatprep.subr.mxu0 0.0
        %819 = vmatpush2.msra.mxu0 0.0
        %820 = vmatprep.subr.mxu0 0.0
        %821 = vmatpush2.msra.mxu0 0.0
        %822 = vmatprep.subr.mxu0 0.0
        %823 = vmatpush2.msra.mxu0 0.0
        %824 = vmatprep.subr.mxu0 0.0
        %825 = vmatpush2.msra.mxu0 0.0
        %826 = vmatprep.subr.mxu0 0.0
        %827 = vmatpush2.msra.mxu0 0.0
        %828 = vmatprep.mubr.f32.mxu0 0.0
        %829 = vmatmul.mubr.f32.gmra.mxu0 %v762
        %v830 = vpop.f32.mrf.mxu0
        %v831 = vadd.f32 %v760, %v830
        %v832 = vpop.f32.mrf.mxu0
        %833 = vdwg.mxu0
        %v834 = vmul.f32 %v831, 0.35355338
        %s835 = scalar_lea.vmem %s4, 32
        %v836 = vld [vmem:[%s835] sm:$0xff]
        %v837 = vld [vmem:[%s835 + $0x8] sm:$0xff]
        %v838 = vld [vmem:[%s835 + $0x10] sm:$0xff]
        %v839 = vld [vmem:[%s835 + $0x18] sm:$0xff]
        %v840 = vlaneseq
        %v841 = vshrl.u32 %v840, 7
        %v842 = vsub.s32 1, %v841
        %v843 = vrot.slane %v735, %v842
        %v845 = vsel %vm706, %v737, 0
        %v848 = vsel %vm706, %v738, 0
        %v851 = vsel %vm706, %v739, 0
        %v854 = vsel %vm706, %v740, 0
        %v857 = vsel %vm706, %v741, 0
        %v860 = vsel %vm706, %v742, 0
        %v863 = vsel %vm706, %v743, 0
        %v866 = vsel %vm706, %v744, 0
        %v869 = vsel %vm706, %v745, 0
        %v872 = vsel %vm706, %v746, 0
        %v875 = vsel %vm706, %v747, 0
        %v878 = vsel %vm706, %v748, 0
        %v881 = vsel %vm706, %v749, 0
        %v884 = vsel %vm706, %v750, 0
        %v887 = vsel %vm706, %v751, 0
        %v890 = vsel %vm706, %v752, 0
        %892 = vmatprep.subr.mxu0 0.0
        %893 = vmatpush1.msra.mxu0 0.0
        %894 = vmatprep.subr.mxu0 0.0
        %895 = vmatpush1.msra.mxu0 0.0
        %896 = vmatprep.subr.mxu0 0.0
        %897 = vmatpush1.msra.mxu0 0.0
        %898 = vmatprep.subr.mxu0 0.0
        %899 = vmatpush1.msra.mxu0 0.0
        %900 = vmatprep.subr.mxu0 0.0
        %901 = vmatpush1.msra.mxu0 0.0
        %902 = vmatprep.subr.mxu0 0.0
        %903 = vmatpush1.msra.mxu0 0.0
        %904 = vmatprep.subr.mxu0 0.0
        %905 = vmatpush1.msra.mxu0 0.0
        %906 = vmatprep.subr.mxu0 0.0
        %907 = vmatpush1.msra.mxu0 0.0
        %908 = vmatprep.subr.mxu0 0.0
        %909 = vmatpush1.msra.mxu0 0.0
        %910 = vmatprep.subr.mxu0 0.0
        %911 = vmatpush1.msra.mxu0 0.0
        %912 = vmatprep.subr.mxu0 0.0
        %913 = vmatpush1.msra.mxu0 0.0
        %914 = vmatprep.subr.mxu0 0.0
        %915 = vmatpush1.msra.mxu0 0.0
        %916 = vmatprep.subr.mxu0 0.0
        %917 = vmatpush1.msra.mxu0 %v839
        %918 = vmatprep.subr.mxu0 0.0
        %919 = vmatpush1.msra.mxu0 %v838
        %920 = vmatprep.subr.mxu0 0.0
        %921 = vmatpush1.msra.mxu0 %v837
        %922 = vmatprep.subr.mxu0 0.0
        %923 = vmatpush1.msra.mxu0 %v836
        %924 = vmatprep.subr.mxu0 0.0
        %925 = vmatpush2.msra.mxu0 0.0
        %926 = vmatprep.subr.mxu0 0.0
        %927 = vmatpush2.msra.mxu0 0.0
        %928 = vmatprep.subr.mxu0 0.0
        %929 = vmatpush2.msra.mxu0 0.0
        %930 = vmatprep.subr.mxu0 0.0
        %931 = vmatpush2.msra.mxu0 0.0
        %932 = vmatprep.subr.mxu0 0.0
        %933 = vmatpush2.msra.mxu0 0.0
        %934 = vmatprep.subr.mxu0 0.0
        %935 = vmatpush2.msra.mxu0 0.0
        %936 = vmatprep.subr.mxu0 0.0
        %937 = vmatpush2.msra.mxu0 0.0
        %938 = vmatprep.subr.mxu0 0.0
        %939 = vmatpush2.msra.mxu0 0.0
        %940 = vmatprep.subr.mxu0 0.0
        %941 = vmatpush2.msra.mxu0 0.0
        %942 = vmatprep.subr.mxu0 0.0
        %943 = vmatpush2.msra.mxu0 0.0
        %944 = vmatprep.subr.mxu0 0.0
        %945 = vmatpush2.msra.mxu0 0.0
        %946 = vmatprep.subr.mxu0 0.0
        %947 = vmatpush2.msra.mxu0 0.0
        %948 = vmatprep.subr.mxu0 0.0
        %949 = vmatpush2.msra.mxu0 0.0
        %950 = vmatprep.subr.mxu0 0.0
        %951 = vmatpush2.msra.mxu0 0.0
        %952 = vmatprep.subr.mxu0 0.0
        %953 = vmatpush2.msra.mxu0 0.0
        %954 = vmatprep.subr.mxu0 0.0
        %955 = vmatpush2.msra.mxu0 0.0
        %956 = vmatprep.mubr.f32.mxu0 0.0
        %957 = vmatmul.mubr.f32.gmra.mxu0 %v845
        %v958 = vpop.f32.mrf.mxu0
        %v959 = vadd.f32 %v843, %v958
        %v960 = vpop.f32.mrf.mxu0
        %961 = vmatprep.mubr.f32.mxu0 0.0
        %962 = vmatmul.mubr.f32.gmra.mxu0 %v848
        %v963 = vpop.f32.mrf.mxu0
        %v964 = vadd.f32 %v843, %v963
        %v965 = vpop.f32.mrf.mxu0
        %966 = vmatprep.mubr.f32.mxu0 0.0
        %967 = vmatmul.mubr.f32.gmra.mxu0 %v851
        %v968 = vpop.f32.mrf.mxu0
        %v969 = vadd.f32 %v843, %v968
        %v970 = vpop.f32.mrf.mxu0
        %971 = vmatprep.mubr.f32.mxu0 0.0
        %972 = vmatmul.mubr.f32.gmra.mxu0 %v854
        %v973 = vpop.f32.mrf.mxu0
        %v974 = vadd.f32 %v843, %v973
        %v975 = vpop.f32.mrf.mxu0
        %976 = vmatprep.mubr.f32.mxu0 0.0
        %977 = vmatmul.mubr.f32.gmra.mxu0 %v857
        %v978 = vpop.f32.mrf.mxu0
        %v979 = vadd.f32 %v843, %v978
        %v980 = vpop.f32.mrf.mxu0
        %981 = vmatprep.mubr.f32.mxu0 0.0
        %982 = vmatmul.mubr.f32.gmra.mxu0 %v860
        %v983 = vpop.f32.mrf.mxu0
        %v984 = vadd.f32 %v843, %v983
        %v985 = vpop.f32.mrf.mxu0
        %986 = vmatprep.mubr.f32.mxu0 0.0
        %987 = vmatmul.mubr.f32.gmra.mxu0 %v863
        %v988 = vpop.f32.mrf.mxu0
        %v989 = vadd.f32 %v843, %v988
        %v990 = vpop.f32.mrf.mxu0
        %991 = vmatprep.mubr.f32.mxu0 0.0
        %992 = vmatmul.mubr.f32.gmra.mxu0 %v866
        %v993 = vpop.f32.mrf.mxu0
        %v994 = vadd.f32 %v843, %v993
        %v995 = vpop.f32.mrf.mxu0
        %996 = vmatprep.mubr.f32.mxu0 0.0
        %997 = vmatmul.mubr.f32.gmra.mxu0 %v869
        %v998 = vpop.f32.mrf.mxu0
        %v999 = vadd.f32 %v843, %v998
        %v1000 = vpop.f32.mrf.mxu0
        %1001 = vmatprep.mubr.f32.mxu0 0.0
        %1002 = vmatmul.mubr.f32.gmra.mxu0 %v872
        %v1003 = vpop.f32.mrf.mxu0
        %v1004 = vadd.f32 %v843, %v1003
        %v1005 = vpop.f32.mrf.mxu0
        %1006 = vmatprep.mubr.f32.mxu0 0.0
        %1007 = vmatmul.mubr.f32.gmra.mxu0 %v875
        %v1008 = vpop.f32.mrf.mxu0
        %v1009 = vadd.f32 %v843, %v1008
        %v1010 = vpop.f32.mrf.mxu0
        %1011 = vmatprep.mubr.f32.mxu0 0.0
        %1012 = vmatmul.mubr.f32.gmra.mxu0 %v878
        %v1013 = vpop.f32.mrf.mxu0
        %v1014 = vadd.f32 %v843, %v1013
        %v1015 = vpop.f32.mrf.mxu0
        %1016 = vmatprep.mubr.f32.mxu0 0.0
        %1017 = vmatmul.mubr.f32.gmra.mxu0 %v881
        %v1018 = vpop.f32.mrf.mxu0
        %v1019 = vadd.f32 %v843, %v1018
        %v1020 = vpop.f32.mrf.mxu0
        %1021 = vmatprep.mubr.f32.mxu0 0.0
        %1022 = vmatmul.mubr.f32.gmra.mxu0 %v884
        %v1023 = vpop.f32.mrf.mxu0
        %v1024 = vadd.f32 %v843, %v1023
        %v1025 = vpop.f32.mrf.mxu0
        %1026 = vmatprep.mubr.f32.mxu0 0.0
        %1027 = vmatmul.mubr.f32.gmra.mxu0 %v887
        %v1028 = vpop.f32.mrf.mxu0
        %v1029 = vadd.f32 %v843, %v1028
        %v1030 = vpop.f32.mrf.mxu0
        %1031 = vmatprep.mubr.f32.mxu0 0.0
        %1032 = vmatmul.mubr.f32.gmra.mxu0 %v890
        %v1033 = vpop.f32.mrf.mxu0
        %v1034 = vadd.f32 %v843, %v1033
        %v1035 = vpop.f32.mrf.mxu0
        %1036 = vdwg.mxu0
        %s1037 = scalar_lea.vmem %s4, 64
        %v1038 = vld [vmem:[%s1037] sm:$0xff]
        %v1039 = vld [vmem:[%s1037 + $0x8] sm:$0xff]
        %v1040 = vld [vmem:[%s1037 + $0x10] sm:$0xff]
        %v1041 = vld [vmem:[%s1037 + $0x18] sm:$0xff]
        %v1042 = vlaneseq
        %v1043 = vshrl.u32 %v1042, 7
        %v1044 = vsub.s32 2, %v1043
        %v1045 = vrot.slane %v735, %v1044
        %v1047 = vsel %vm706, %v672, 0
        %v1050 = vsel %vm706, %v673, 0
        %v1053 = vsel %vm706, %v674, 0
        %v1056 = vsel %vm706, %v675, 0
        %v1059 = vsel %vm706, %v676, 0
        %v1062 = vsel %vm706, %v677, 0
        %v1065 = vsel %vm706, %v678, 0
        %v1068 = vsel %vm706, %v679, 0
        %v1071 = vsel %vm706, %v680, 0
        %v1074 = vsel %vm706, %v681, 0
        %v1077 = vsel %vm706, %v682, 0
        %v1080 = vsel %vm706, %v683, 0
        %v1083 = vsel %vm706, %v684, 0
        %v1086 = vsel %vm706, %v685, 0
        %v1089 = vsel %vm706, %v686, 0
        %v1092 = vsel %vm706, %v687, 0
        %1094 = vmatprep.subr.mxu0 0.0
        %1095 = vmatpush1.msra.mxu0 0.0
        %1096 = vmatprep.subr.mxu0 0.0
        %1097 = vmatpush1.msra.mxu0 0.0
        %1098 = vmatprep.subr.mxu0 0.0
        %1099 = vmatpush1.msra.mxu0 0.0
        %1100 = vmatprep.subr.mxu0 0.0
        %1101 = vmatpush1.msra.mxu0 0.0
        %1102 = vmatprep.subr.mxu0 0.0
        %1103 = vmatpush1.msra.mxu0 0.0
        %1104 = vmatprep.subr.mxu0 0.0
        %1105 = vmatpush1.msra.mxu0 0.0
        %1106 = vmatprep.subr.mxu0 0.0
        %1107 = vmatpush1.msra.mxu0 0.0
        %1108 = vmatprep.subr.mxu0 0.0
        %1109 = vmatpush1.msra.mxu0 0.0
        %1110 = vmatprep.subr.mxu0 0.0
        %1111 = vmatpush1.msra.mxu0 0.0
        %1112 = vmatprep.subr.mxu0 0.0
        %1113 = vmatpush1.msra.mxu0 0.0
        %1114 = vmatprep.subr.mxu0 0.0
        %1115 = vmatpush1.msra.mxu0 0.0
        %1116 = vmatprep.subr.mxu0 0.0
        %1117 = vmatpush1.msra.mxu0 0.0
        %1118 = vmatprep.subr.mxu0 0.0
        %1119 = vmatpush1.msra.mxu0 %v1041
        %1120 = vmatprep.subr.mxu0 0.0
        %1121 = vmatpush1.msra.mxu0 %v1040
        %1122 = vmatprep.subr.mxu0 0.0
        %1123 = vmatpush1.msra.mxu0 %v1039
        %1124 = vmatprep.subr.mxu0 0.0
        %1125 = vmatpush1.msra.mxu0 %v1038
        %1126 = vmatprep.subr.mxu0 0.0
        %1127 = vmatpush2.msra.mxu0 0.0
        %1128 = vmatprep.subr.mxu0 0.0
        %1129 = vmatpush2.msra.mxu0 0.0
        %1130 = vmatprep.subr.mxu0 0.0
        %1131 = vmatpush2.msra.mxu0 0.0
        %1132 = vmatprep.subr.mxu0 0.0
        %1133 = vmatpush2.msra.mxu0 0.0
        %1134 = vmatprep.subr.mxu0 0.0
        %1135 = vmatpush2.msra.mxu0 0.0
        %1136 = vmatprep.subr.mxu0 0.0
        %1137 = vmatpush2.msra.mxu0 0.0
        %1138 = vmatprep.subr.mxu0 0.0
        %1139 = vmatpush2.msra.mxu0 0.0
        %1140 = vmatprep.subr.mxu0 0.0
        %1141 = vmatpush2.msra.mxu0 0.0
        %1142 = vmatprep.subr.mxu0 0.0
        %1143 = vmatpush2.msra.mxu0 0.0
        %1144 = vmatprep.subr.mxu0 0.0
        %1145 = vmatpush2.msra.mxu0 0.0
        %1146 = vmatprep.subr.mxu0 0.0
        %1147 = vmatpush2.msra.mxu0 0.0
        %1148 = vmatprep.subr.mxu0 0.0
        %1149 = vmatpush2.msra.mxu0 0.0
        %1150 = vmatprep.subr.mxu0 0.0
        %1151 = vmatpush2.msra.mxu0 0.0
        %1152 = vmatprep.subr.mxu0 0.0
        %1153 = vmatpush2.msra.mxu0 0.0
        %1154 = vmatprep.subr.mxu0 0.0
        %1155 = vmatpush2.msra.mxu0 0.0
        %1156 = vmatprep.subr.mxu0 0.0
        %1157 = vmatpush2.msra.mxu0 0.0
        %1158 = vmatprep.mubr.f32.mxu0 0.0
        %1159 = vmatmul.mubr.f32.gmra.mxu0 %v1047
        %v1160 = vpop.f32.mrf.mxu0
        %v1161 = vadd.f32 %v1045, %v1160
        %v1162 = vpop.f32.mrf.mxu0
        %1163 = vmatprep.mubr.f32.mxu0 0.0
        %1164 = vmatmul.mubr.f32.gmra.mxu0 %v1050
        %v1165 = vpop.f32.mrf.mxu0
        %v1166 = vadd.f32 %v1045, %v1165
        %v1167 = vpop.f32.mrf.mxu0
        %1168 = vmatprep.mubr.f32.mxu0 0.0
        %1169 = vmatmul.mubr.f32.gmra.mxu0 %v1053
        %v1170 = vpop.f32.mrf.mxu0
        %v1171 = vadd.f32 %v1045, %v1170
        %v1172 = vpop.f32.mrf.mxu0
        %1173 = vmatprep.mubr.f32.mxu0 0.0
        %1174 = vmatmul.mubr.f32.gmra.mxu0 %v1056
        %v1175 = vpop.f32.mrf.mxu0
        %v1176 = vadd.f32 %v1045, %v1175
        %v1177 = vpop.f32.mrf.mxu0
        %1178 = vmatprep.mubr.f32.mxu0 0.0
        %1179 = vmatmul.mubr.f32.gmra.mxu0 %v1059
        %v1180 = vpop.f32.mrf.mxu0
        %v1181 = vadd.f32 %v1045, %v1180
        %v1182 = vpop.f32.mrf.mxu0
        %1183 = vmatprep.mubr.f32.mxu0 0.0
        %1184 = vmatmul.mubr.f32.gmra.mxu0 %v1062
        %v1185 = vpop.f32.mrf.mxu0
        %v1186 = vadd.f32 %v1045, %v1185
        %v1187 = vpop.f32.mrf.mxu0
        %1188 = vmatprep.mubr.f32.mxu0 0.0
        %1189 = vmatmul.mubr.f32.gmra.mxu0 %v1065
        %v1190 = vpop.f32.mrf.mxu0
        %v1191 = vadd.f32 %v1045, %v1190
        %v1192 = vpop.f32.mrf.mxu0
        %1193 = vmatprep.mubr.f32.mxu0 0.0
        %1194 = vmatmul.mubr.f32.gmra.mxu0 %v1068
        %v1195 = vpop.f32.mrf.mxu0
        %v1196 = vadd.f32 %v1045, %v1195
        %v1197 = vpop.f32.mrf.mxu0
        %1198 = vmatprep.mubr.f32.mxu0 0.0
        %1199 = vmatmul.mubr.f32.gmra.mxu0 %v1071
        %v1200 = vpop.f32.mrf.mxu0
        %v1201 = vadd.f32 %v1045, %v1200
        %v1202 = vpop.f32.mrf.mxu0
        %1203 = vmatprep.mubr.f32.mxu0 0.0
        %1204 = vmatmul.mubr.f32.gmra.mxu0 %v1074
        %v1205 = vpop.f32.mrf.mxu0
        %v1206 = vadd.f32 %v1045, %v1205
        %v1207 = vpop.f32.mrf.mxu0
        %1208 = vmatprep.mubr.f32.mxu0 0.0
        %1209 = vmatmul.mubr.f32.gmra.mxu0 %v1077
        %v1210 = vpop.f32.mrf.mxu0
        %v1211 = vadd.f32 %v1045, %v1210
        %v1212 = vpop.f32.mrf.mxu0
        %1213 = vmatprep.mubr.f32.mxu0 0.0
        %1214 = vmatmul.mubr.f32.gmra.mxu0 %v1080
        %v1215 = vpop.f32.mrf.mxu0
        %v1216 = vadd.f32 %v1045, %v1215
        %v1217 = vpop.f32.mrf.mxu0
        %1218 = vmatprep.mubr.f32.mxu0 0.0
        %1219 = vmatmul.mubr.f32.gmra.mxu0 %v1083
        %v1220 = vpop.f32.mrf.mxu0
        %v1221 = vadd.f32 %v1045, %v1220
        %v1222 = vpop.f32.mrf.mxu0
        %1223 = vmatprep.mubr.f32.mxu0 0.0
        %1224 = vmatmul.mubr.f32.gmra.mxu0 %v1086
        %v1225 = vpop.f32.mrf.mxu0
        %v1226 = vadd.f32 %v1045, %v1225
        %v1227 = vpop.f32.mrf.mxu0
        %1228 = vmatprep.mubr.f32.mxu0 0.0
        %1229 = vmatmul.mubr.f32.gmra.mxu0 %v1089
        %v1230 = vpop.f32.mrf.mxu0
        %v1231 = vadd.f32 %v1045, %v1230
        %v1232 = vpop.f32.mrf.mxu0
        %1233 = vmatprep.mubr.f32.mxu0 0.0
        %1234 = vmatmul.mubr.f32.gmra.mxu0 %v1092
        %v1235 = vpop.f32.mrf.mxu0
        %v1236 = vadd.f32 %v1045, %v1235
        %v1237 = vpop.f32.mrf.mxu0
        %1238 = vdwg.mxu0
        %v1239 = vlaneseq
        %v1240 = vand.u32 %v1239, 127
        %vm1241 = vcmp.lt.s32.totalorder %v1240, 8
        %v1242 = vsel %vm1241, 1, 0
        %v1243 = vcvt.s32.f32 %v1242
        %vm1244 = vcmask 64512
        %v1246 = vsel %vm1244, %v834, 0
        %v1249 = vsel %vm1244, %v959, 0
        %v1252 = vsel %vm1244, %v964, 0
        %v1255 = vsel %vm1244, %v969, 0
        %v1258 = vsel %vm1244, %v974, 0
        %v1261 = vsel %vm1244, %v979, 0
        %v1264 = vsel %vm1244, %v984, 0
        %v1267 = vsel %vm1244, %v989, 0
        %v1270 = vsel %vm1244, %v994, 0
        %v1273 = vsel %vm1244, %v999, 0
        %v1276 = vsel %vm1244, %v1004, 0
        %v1279 = vsel %vm1244, %v1009, 0
        %v1282 = vsel %vm1244, %v1014, 0
        %v1285 = vsel %vm1244, %v1019, 0
        %v1288 = vsel %vm1244, %v1024, 0
        %v1291 = vsel %vm1244, %v1029, 0
        %v1294 = vsel %vm1244, %v1034, 0
        %1296 = vmatprep.subr.mxu0 0.0
        %1297 = vmatpush1.xpose.msra.mxu0 %v1294
        %1298 = vmatprep.subr.mxu0 0.0
        %1299 = vmatpush1.xpose.msra.mxu0 %v1291
        %1300 = vmatprep.subr.mxu0 0.0
        %1301 = vmatpush1.xpose.msra.mxu0 %v1288
        %1302 = vmatprep.subr.mxu0 0.0
        %1303 = vmatpush1.xpose.msra.mxu0 %v1285
        %1304 = vmatprep.subr.mxu0 0.0
        %1305 = vmatpush1.xpose.msra.mxu0 %v1282
        %1306 = vmatprep.subr.mxu0 0.0
        %1307 = vmatpush1.xpose.msra.mxu0 %v1279
        %1308 = vmatprep.subr.mxu0 0.0
        %1309 = vmatpush1.xpose.msra.mxu0 %v1276
        %1310 = vmatprep.subr.mxu0 0.0
        %1311 = vmatpush1.xpose.msra.mxu0 %v1273
        %1312 = vmatprep.subr.mxu0 0.0
        %1313 = vmatpush1.xpose.msra.mxu0 %v1270
        %1314 = vmatprep.subr.mxu0 0.0
        %1315 = vmatpush1.xpose.msra.mxu0 %v1267
        %1316 = vmatprep.subr.mxu0 0.0
        %1317 = vmatpush1.xpose.msra.mxu0 %v1264
        %1318 = vmatprep.subr.mxu0 0.0
        %1319 = vmatpush1.xpose.msra.mxu0 %v1261
        %1320 = vmatprep.subr.mxu0 0.0
        %1321 = vmatpush1.xpose.msra.mxu0 %v1258
        %1322 = vmatprep.subr.mxu0 0.0
        %1323 = vmatpush1.xpose.msra.mxu0 %v1255
        %1324 = vmatprep.subr.mxu0 0.0
        %1325 = vmatpush1.xpose.msra.mxu0 %v1252
        %1326 = vmatprep.subr.mxu0 0.0
        %1327 = vmatpush1.xpose.msra.mxu0 %v1249
        %1328 = vmatprep.subr.mxu0 0.0
        %1329 = vmatpush2.xpose.msra.mxu0 0.0
        %1330 = vmatprep.subr.mxu0 0.0
        %1331 = vmatpush2.xpose.msra.mxu0 0.0
        %1332 = vmatprep.subr.mxu0 0.0
        %1333 = vmatpush2.xpose.msra.mxu0 0.0
        %1334 = vmatprep.subr.mxu0 0.0
        %1335 = vmatpush2.xpose.msra.mxu0 0.0
        %1336 = vmatprep.subr.mxu0 0.0
        %1337 = vmatpush2.xpose.msra.mxu0 0.0
        %1338 = vmatprep.subr.mxu0 0.0
        %1339 = vmatpush2.xpose.msra.mxu0 0.0
        %1340 = vmatprep.subr.mxu0 0.0
        %1341 = vmatpush2.xpose.msra.mxu0 0.0
        %1342 = vmatprep.subr.mxu0 0.0
        %1343 = vmatpush2.xpose.msra.mxu0 0.0
        %1344 = vmatprep.subr.mxu0 0.0
        %1345 = vmatpush2.xpose.msra.mxu0 0.0
        %1346 = vmatprep.subr.mxu0 0.0
        %1347 = vmatpush2.xpose.msra.mxu0 0.0
        %1348 = vmatprep.subr.mxu0 0.0
        %1349 = vmatpush2.xpose.msra.mxu0 0.0
        %1350 = vmatprep.subr.mxu0 0.0
        %1351 = vmatpush2.xpose.msra.mxu0 0.0
        %1352 = vmatprep.subr.mxu0 0.0
        %1353 = vmatpush2.xpose.msra.mxu0 0.0
        %1354 = vmatprep.subr.mxu0 0.0
        %1355 = vmatpush2.xpose.msra.mxu0 0.0
        %1356 = vmatprep.subr.mxu0 0.0
        %1357 = vmatpush2.xpose.msra.mxu0 0.0
        %1358 = vmatprep.subr.mxu0 0.0
        %1359 = vmatpush2.xpose.msra.mxu0 0.0
        %1360 = vmatprep.mubr.f32.mxu0 0.0
        %1361 = vmatmul.mubr.f32.gmra.mxu0 %v1246
        %v1362 = vpop.f32.mrf.mxu0
        %v1363 = vadd.f32 0.0, %v1362
        %v1364 = vpop.f32.mrf.mxu0
        %1365 = vdwg.mxu0
        %1366 = vmax.xlane.f32.xlu0 %v1363
        %v1367 = vpop.xlane.xlu0 %1366
        %v1368 = vsub.f32 %v1363, %v1367
        %v1369 = vmul.f32 %v1368, 1.442695
        %v1370 = vpow.pop %v1369
        %v1371 = vmul.f32 %v1370, %v1243
        %1372 = vadd.xlane.f32.xlu0 %v1371
        %v1373 = vpop.xlane.xlu0 %1372
        %v1374 = vrcp.pop %v1373
        %v1375 = vmul.f32 %v1371, %v1374
        %1376 = vmatprep.subr.mxu0 0.0
        %1377 = vmatpush1.msra.mxu0 %v1236
        %1378 = vmatprep.subr.mxu0 0.0
        %1379 = vmatpush1.msra.mxu0 %v1231
        %1380 = vmatprep.subr.mxu0 0.0
        %1381 = vmatpush1.msra.mxu0 %v1226
        %1382 = vmatprep.subr.mxu0 0.0
        %1383 = vmatpush1.msra.mxu0 %v1221
        %1384 = vmatprep.subr.mxu0 0.0
        %1385 = vmatpush1.msra.mxu0 %v1216
        %1386 = vmatprep.subr.mxu0 0.0
        %1387 = vmatpush1.msra.mxu0 %v1211
        %1388 = vmatprep.subr.mxu0 0.0
        %1389 = vmatpush1.msra.mxu0 %v1206
        %1390 = vmatprep.subr.mxu0 0.0
        %1391 = vmatpush1.msra.mxu0 %v1201
        %1392 = vmatprep.subr.mxu0 0.0
        %1393 = vmatpush1.msra.mxu0 %v1196
        %1394 = vmatprep.subr.mxu0 0.0
        %1395 = vmatpush1.msra.mxu0 %v1191
        %1396 = vmatprep.subr.mxu0 0.0
        %1397 = vmatpush1.msra.mxu0 %v1186
        %1398 = vmatprep.subr.mxu0 0.0
        %1399 = vmatpush1.msra.mxu0 %v1181
        %1400 = vmatprep.subr.mxu0 0.0
        %1401 = vmatpush1.msra.mxu0 %v1176
        %1402 = vmatprep.subr.mxu0 0.0
        %1403 = vmatpush1.msra.mxu0 %v1171
        %1404 = vmatprep.subr.mxu0 0.0
        %1405 = vmatpush1.msra.mxu0 %v1166
        %1406 = vmatprep.subr.mxu0 0.0
        %1407 = vmatpush1.msra.mxu0 %v1161
        %1408 = vmatprep.subr.mxu0 0.0
        %1409 = vmatpush2.msra.mxu0 0.0
        %1410 = vmatprep.subr.mxu0 0.0
        %1411 = vmatpush2.msra.mxu0 0.0
        %1412 = vmatprep.subr.mxu0 0.0
        %1413 = vmatpush2.msra.mxu0 0.0
        %1414 = vmatprep.subr.mxu0 0.0
        %1415 = vmatpush2.msra.mxu0 0.0
        %1416 = vmatprep.subr.mxu0 0.0
        %1417 = vmatpush2.msra.mxu0 0.0
        %1418 = vmatprep.subr.mxu0 0.0
        %1419 = vmatpush2.msra.mxu0 0.0
        %1420 = vmatprep.subr.mxu0 0.0
        %1421 = vmatpush2.msra.mxu0 0.0
        %1422 = vmatprep.subr.mxu0 0.0
        %1423 = vmatpush2.msra.mxu0 0.0
        %1424 = vmatprep.subr.mxu0 0.0
        %1425 = vmatpush2.msra.mxu0 0.0
        %1426 = vmatprep.subr.mxu0 0.0
        %1427 = vmatpush2.msra.mxu0 0.0
        %1428 = vmatprep.subr.mxu0 0.0
        %1429 = vmatpush2.msra.mxu0 0.0
        %1430 = vmatprep.subr.mxu0 0.0
        %1431 = vmatpush2.msra.mxu0 0.0
        %1432 = vmatprep.subr.mxu0 0.0
        %1433 = vmatpush2.msra.mxu0 0.0
        %1434 = vmatprep.subr.mxu0 0.0
        %1435 = vmatpush2.msra.mxu0 0.0
        %1436 = vmatprep.subr.mxu0 0.0
        %1437 = vmatpush2.msra.mxu0 0.0
        %1438 = vmatprep.subr.mxu0 0.0
        %1439 = vmatpush2.msra.mxu0 0.0
        %1440 = vmatprep.mubr.f32.mxu0 0.0
        %1441 = vmatmul.mubr.f32.gmra.mxu0 %v1375
        %v1442 = vpop.f32.mrf.mxu0
        %v1443 = vadd.f32 0.0, %v1442
        %v1444 = vpop.f32.mrf.mxu0
        %1445 = vdwg.mxu0
        %1446 = vrot.lane.b32.xlu0 %v834, 120
        %v1447 = vpop.permute.xlu0 %1446
        %1448 = vrot.lane.b32.xlu0 %v959, 120
        %v1449 = vpop.permute.xlu0 %1448
        %1450 = vrot.lane.b32.xlu0 %v964, 120
        %v1451 = vpop.permute.xlu0 %1450
        %1452 = vrot.lane.b32.xlu0 %v969, 120
        %v1453 = vpop.permute.xlu0 %1452
        %1454 = vrot.lane.b32.xlu0 %v974, 120
        %v1455 = vpop.permute.xlu0 %1454
        %1456 = vrot.lane.b32.xlu0 %v979, 120
        %v1457 = vpop.permute.xlu0 %1456
        %1458 = vrot.lane.b32.xlu0 %v984, 120
        %v1459 = vpop.permute.xlu0 %1458
        %1460 = vrot.lane.b32.xlu0 %v989, 120
        %v1461 = vpop.permute.xlu0 %1460
        %1462 = vrot.lane.b32.xlu0 %v994, 120
        %v1463 = vpop.permute.xlu0 %1462
        %1464 = vrot.lane.b32.xlu0 %v999, 120
        %v1465 = vpop.permute.xlu0 %1464
        %1466 = vrot.lane.b32.xlu0 %v1004, 120
        %v1467 = vpop.permute.xlu0 %1466
        %1468 = vrot.lane.b32.xlu0 %v1009, 120
        %v1469 = vpop.permute.xlu0 %1468
        %1470 = vrot.lane.b32.xlu0 %v1014, 120
        %v1471 = vpop.permute.xlu0 %1470
        %1472 = vrot.lane.b32.xlu0 %v1019, 120
        %v1473 = vpop.permute.xlu0 %1472
        %1474 = vrot.lane.b32.xlu0 %v1024, 120
        %v1475 = vpop.permute.xlu0 %1474
        %1476 = vrot.lane.b32.xlu0 %v1029, 120
        %v1477 = vpop.permute.xlu0 %1476
        %1478 = vrot.lane.b32.xlu0 %v1034, 120
        %v1479 = vpop.permute.xlu0 %1478
        %v1480 = vsel %vm1244, %v1447, 0
        %v1482 = vsel %vm1244, %v1449, 0
        %v1484 = vsel %vm1244, %v1451, 0
        %v1486 = vsel %vm1244, %v1453, 0
        %v1488 = vsel %vm1244, %v1455, 0
        %v1490 = vsel %vm1244, %v1457, 0
        %v1492 = vsel %vm1244, %v1459, 0
        %v1494 = vsel %vm1244, %v1461, 0
        %v1496 = vsel %vm1244, %v1463, 0
        %v1498 = vsel %vm1244, %v1465, 0
        %v1500 = vsel %vm1244, %v1467, 0
        %v1502 = vsel %vm1244, %v1469, 0
        %v1504 = vsel %vm1244, %v1471, 0
        %v1506 = vsel %vm1244, %v1473, 0
        %v1508 = vsel %vm1244, %v1475, 0
        %v1510 = vsel %vm1244, %v1477, 0
        %v1512 = vsel %vm1244, %v1479, 0
        %1514 = vmatprep.subr.mxu0 0.0
        %1515 = vmatpush1.xpose.msra.mxu0 %v1512
        %1516 = vmatprep.subr.mxu0 0.0
        %1517 = vmatpush1.xpose.msra.mxu0 %v1510
        %1518 = vmatprep.subr.mxu0 0.0
        %1519 = vmatpush1.xpose.msra.mxu0 %v1508
        %1520 = vmatprep.subr.mxu0 0.0
        %1521 = vmatpush1.xpose.msra.mxu0 %v1506
        %1522 = vmatprep.subr.mxu0 0.0
        %1523 = vmatpush1.xpose.msra.mxu0 %v1504
        %1524 = vmatprep.subr.mxu0 0.0
        %1525 = vmatpush1.xpose.msra.mxu0 %v1502
        %1526 = vmatprep.subr.mxu0 0.0
        %1527 = vmatpush1.xpose.msra.mxu0 %v1500
        %1528 = vmatprep.subr.mxu0 0.0
        %1529 = vmatpush1.xpose.msra.mxu0 %v1498
        %1530 = vmatprep.subr.mxu0 0.0
        %1531 = vmatpush1.xpose.msra.mxu0 %v1496
        %1532 = vmatprep.subr.mxu0 0.0
        %1533 = vmatpush1.xpose.msra.mxu0 %v1494
        %1534 = vmatprep.subr.mxu0 0.0
        %1535 = vmatpush1.xpose.msra.mxu0 %v1492
        %1536 = vmatprep.subr.mxu0 0.0
        %1537 = vmatpush1.xpose.msra.mxu0 %v1490
        %1538 = vmatprep.subr.mxu0 0.0
        %1539 = vmatpush1.xpose.msra.mxu0 %v1488
        %1540 = vmatprep.subr.mxu0 0.0
        %1541 = vmatpush1.xpose.msra.mxu0 %v1486
        %1542 = vmatprep.subr.mxu0 0.0
        %1543 = vmatpush1.xpose.msra.mxu0 %v1484
        %1544 = vmatprep.subr.mxu0 0.0
        %1545 = vmatpush1.xpose.msra.mxu0 %v1482
        %1546 = vmatprep.subr.mxu0 0.0
        %1547 = vmatpush2.xpose.msra.mxu0 0.0
        %1548 = vmatprep.subr.mxu0 0.0
        %1549 = vmatpush2.xpose.msra.mxu0 0.0
        %1550 = vmatprep.subr.mxu0 0.0
        %1551 = vmatpush2.xpose.msra.mxu0 0.0
        %1552 = vmatprep.subr.mxu0 0.0
        %1553 = vmatpush2.xpose.msra.mxu0 0.0
        %1554 = vmatprep.subr.mxu0 0.0
        %1555 = vmatpush2.xpose.msra.mxu0 0.0
        %1556 = vmatprep.subr.mxu0 0.0
        %1557 = vmatpush2.xpose.msra.mxu0 0.0
        %1558 = vmatprep.subr.mxu0 0.0
        %1559 = vmatpush2.xpose.msra.mxu0 0.0
        %1560 = vmatprep.subr.mxu0 0.0
        %1561 = vmatpush2.xpose.msra.mxu0 0.0
        %1562 = vmatprep.subr.mxu0 0.0
        %1563 = vmatpush2.xpose.msra.mxu0 0.0
        %1564 = vmatprep.subr.mxu0 0.0
        %1565 = vmatpush2.xpose.msra.mxu0 0.0
        %1566 = vmatprep.subr.mxu0 0.0
        %1567 = vmatpush2.xpose.msra.mxu0 0.0
        %1568 = vmatprep.subr.mxu0 0.0
        %1569 = vmatpush2.xpose.msra.mxu0 0.0
        %1570 = vmatprep.subr.mxu0 0.0
        %1571 = vmatpush2.xpose.msra.mxu0 0.0
        %1572 = vmatprep.subr.mxu0 0.0
        %1573 = vmatpush2.xpose.msra.mxu0 0.0
        %1574 = vmatprep.subr.mxu0 0.0
        %1575 = vmatpush2.xpose.msra.mxu0 0.0
        %1576 = vmatprep.subr.mxu0 0.0
        %1577 = vmatpush2.xpose.msra.mxu0 0.0
        %1578 = vmatprep.mubr.f32.mxu0 0.0
        %1579 = vmatmul.mubr.f32.gmra.mxu0 %v1480
        %v1580 = vpop.f32.mrf.mxu0
        %v1581 = vadd.f32 0.0, %v1580
        %v1582 = vpop.f32.mrf.mxu0
        %1583 = vdwg.mxu0
        %1584 = vmax.xlane.f32.xlu0 %v1581
        %v1585 = vpop.xlane.xlu0 %1584
        %v1586 = vsub.f32 %v1581, %v1585
        %v1587 = vmul.f32 %v1586, 1.442695
        %v1588 = vpow.pop %v1587
        %v1589 = vmul.f32 %v1588, %v1243
        %1590 = vadd.xlane.f32.xlu0 %v1589
        %v1591 = vpop.xlane.xlu0 %1590
        %v1592 = vrcp.pop %v1591
        %v1593 = vmul.f32 %v1589, %v1592
        %v1594 = vadd.f32 %v1375, %v1593
        %1611 = vrot.lane.b32.xlu0 %v1161, 120
        %v1612 = vpop.permute.xlu0 %1611
        %1613 = vrot.lane.b32.xlu0 %v1166, 120
        %v1614 = vpop.permute.xlu0 %1613
        %1615 = vrot.lane.b32.xlu0 %v1171, 120
        %v1616 = vpop.permute.xlu0 %1615
        %1617 = vrot.lane.b32.xlu0 %v1176, 120
        %v1618 = vpop.permute.xlu0 %1617
        %1619 = vrot.lane.b32.xlu0 %v1181, 120
        %v1620 = vpop.permute.xlu0 %1619
        %1621 = vrot.lane.b32.xlu0 %v1186, 120
        %v1622 = vpop.permute.xlu0 %1621
        %1623 = vrot.lane.b32.xlu0 %v1191, 120
        %v1624 = vpop.permute.xlu0 %1623
        %1625 = vrot.lane.b32.xlu0 %v1196, 120
        %v1626 = vpop.permute.xlu0 %1625
        %1627 = vrot.lane.b32.xlu0 %v1201, 120
        %v1628 = vpop.permute.xlu0 %1627
        %1629 = vrot.lane.b32.xlu0 %v1206, 120
        %v1630 = vpop.permute.xlu0 %1629
        %1631 = vrot.lane.b32.xlu0 %v1211, 120
        %v1632 = vpop.permute.xlu0 %1631
        %1633 = vrot.lane.b32.xlu0 %v1216, 120
        %v1634 = vpop.permute.xlu0 %1633
        %1635 = vrot.lane.b32.xlu0 %v1221, 120
        %v1636 = vpop.permute.xlu0 %1635
        %1637 = vrot.lane.b32.xlu0 %v1226, 120
        %v1638 = vpop.permute.xlu0 %1637
        %1639 = vrot.lane.b32.xlu0 %v1231, 120
        %v1640 = vpop.permute.xlu0 %1639
        %1641 = vrot.lane.b32.xlu0 %v1236, 120
        %v1642 = vpop.permute.xlu0 %1641
        %1659 = vmatprep.subr.mxu0 0.0
        %1660 = vmatpush1.msra.mxu0 %v1642
        %1661 = vmatprep.subr.mxu0 0.0
        %1662 = vmatpush1.msra.mxu0 %v1640
        %1663 = vmatprep.subr.mxu0 0.0
        %1664 = vmatpush1.msra.mxu0 %v1638
        %1665 = vmatprep.subr.mxu0 0.0
        %1666 = vmatpush1.msra.mxu0 %v1636
        %1667 = vmatprep.subr.mxu0 0.0
        %1668 = vmatpush1.msra.mxu0 %v1634
        %1669 = vmatprep.subr.mxu0 0.0
        %1670 = vmatpush1.msra.mxu0 %v1632
        %1671 = vmatprep.subr.mxu0 0.0
        %1672 = vmatpush1.msra.mxu0 %v1630
        %1673 = vmatprep.subr.mxu0 0.0
        %1674 = vmatpush1.msra.mxu0 %v1628
        %1675 = vmatprep.subr.mxu0 0.0
        %1676 = vmatpush1.msra.mxu0 %v1626
        %1677 = vmatprep.subr.mxu0 0.0
        %1678 = vmatpush1.msra.mxu0 %v1624
        %1679 = vmatprep.subr.mxu0 0.0
        %1680 = vmatpush1.msra.mxu0 %v1622
        %1681 = vmatprep.subr.mxu0 0.0
        %1682 = vmatpush1.msra.mxu0 %v1620
        %1683 = vmatprep.subr.mxu0 0.0
        %1684 = vmatpush1.msra.mxu0 %v1618
        %1685 = vmatprep.subr.mxu0 0.0
        %1686 = vmatpush1.msra.mxu0 %v1616
        %1687 = vmatprep.subr.mxu0 0.0
        %1688 = vmatpush1.msra.mxu0 %v1614
        %1689 = vmatprep.subr.mxu0 0.0
        %1690 = vmatpush1.msra.mxu0 %v1612
        %1691 = vmatprep.subr.mxu0 0.0
        %1692 = vmatpush2.msra.mxu0 0.0
        %1693 = vmatprep.subr.mxu0 0.0
        %1694 = vmatpush2.msra.mxu0 0.0
        %1695 = vmatprep.subr.mxu0 0.0
        %1696 = vmatpush2.msra.mxu0 0.0
        %1697 = vmatprep.subr.mxu0 0.0
        %1698 = vmatpush2.msra.mxu0 0.0
        %1699 = vmatprep.subr.mxu0 0.0
        %1700 = vmatpush2.msra.mxu0 0.0
        %1701 = vmatprep.subr.mxu0 0.0
        %1702 = vmatpush2.msra.mxu0 0.0
        %1703 = vmatprep.subr.mxu0 0.0
        %1704 = vmatpush2.msra.mxu0 0.0
        %1705 = vmatprep.subr.mxu0 0.0
        %1706 = vmatpush2.msra.mxu0 0.0
        %1707 = vmatprep.subr.mxu0 0.0
        %1708 = vmatpush2.msra.mxu0 0.0
        %1709 = vmatprep.subr.mxu0 0.0
        %1710 = vmatpush2.msra.mxu0 0.0
        %1711 = vmatprep.subr.mxu0 0.0
        %1712 = vmatpush2.msra.mxu0 0.0
        %1713 = vmatprep.subr.mxu0 0.0
        %1714 = vmatpush2.msra.mxu0 0.0
        %1715 = vmatprep.subr.mxu0 0.0
        %1716 = vmatpush2.msra.mxu0 0.0
        %1717 = vmatprep.subr.mxu0 0.0
        %1718 = vmatpush2.msra.mxu0 0.0
        %1719 = vmatprep.subr.mxu0 0.0
        %1720 = vmatpush2.msra.mxu0 0.0
        %1721 = vmatprep.subr.mxu0 0.0
        %1722 = vmatpush2.msra.mxu0 0.0
        %1723 = vmatprep.mubr.f32.mxu0 0.0
        %1724 = vmatmul.mubr.f32.gmra.mxu0 %v1593
        %v1725 = vpop.f32.mrf.mxu0
        %v1726 = vadd.f32 0.0, %v1725
        %v1727 = vpop.f32.mrf.mxu0
        %1728 = vdwg.mxu0
        %1729 = vrot.lane.b32.xlu0 %v834, 112
        %v1730 = vpop.permute.xlu0 %1729
        %1731 = vrot.lane.b32.xlu0 %v959, 112
        %v1732 = vpop.permute.xlu0 %1731
        %1733 = vrot.lane.b32.xlu0 %v964, 112
        %v1734 = vpop.permute.xlu0 %1733
        %1735 = vrot.lane.b32.xlu0 %v969, 112
        %v1736 = vpop.permute.xlu0 %1735
        %1737 = vrot.lane.b32.xlu0 %v974, 112
        %v1738 = vpop.permute.xlu0 %1737
        %1739 = vrot.lane.b32.xlu0 %v979, 112
        %v1740 = vpop.permute.xlu0 %1739
        %1741 = vrot.lane.b32.xlu0 %v984, 112
        %v1742 = vpop.permute.xlu0 %1741
        %1743 = vrot.lane.b32.xlu0 %v989, 112
        %v1744 = vpop.permute.xlu0 %1743
        %1745 = vrot.lane.b32.xlu0 %v994, 112
        %v1746 = vpop.permute.xlu0 %1745
        %1747 = vrot.lane.b32.xlu0 %v999, 112
        %v1748 = vpop.permute.xlu0 %1747
        %1749 = vrot.lane.b32.xlu0 %v1004, 112
        %v1750 = vpop.permute.xlu0 %1749
        %1751 = vrot.lane.b32.xlu0 %v1009, 112
        %v1752 = vpop.permute.xlu0 %1751
        %1753 = vrot.lane.b32.xlu0 %v1014, 112
        %v1754 = vpop.permute.xlu0 %1753
        %1755 = vrot.lane.b32.xlu0 %v1019, 112
        %v1756 = vpop.permute.xlu0 %1755
        %1757 = vrot.lane.b32.xlu0 %v1024, 112
        %v1758 = vpop.permute.xlu0 %1757
        %1759 = vrot.lane.b32.xlu0 %v1029, 112
        %v1760 = vpop.permute.xlu0 %1759
        %1761 = vrot.lane.b32.xlu0 %v1034, 112
        %v1762 = vpop.permute.xlu0 %1761
        %v1763 = vsel %vm1244, %v1730, 0
        %v1765 = vsel %vm1244, %v1732, 0
        %v1767 = vsel %vm1244, %v1734, 0
        %v1769 = vsel %vm1244, %v1736, 0
        %v1771 = vsel %vm1244, %v1738, 0
        %v1773 = vsel %vm1244, %v1740, 0
        %v1775 = vsel %vm1244, %v1742, 0
        %v1777 = vsel %vm1244, %v1744, 0
        %v1779 = vsel %vm1244, %v1746, 0
        %v1781 = vsel %vm1244, %v1748, 0
        %v1783 = vsel %vm1244, %v1750, 0
        %v1785 = vsel %vm1244, %v1752, 0
        %v1787 = vsel %vm1244, %v1754, 0
        %v1789 = vsel %vm1244, %v1756, 0
        %v1791 = vsel %vm1244, %v1758, 0
        %v1793 = vsel %vm1244, %v1760, 0
        %v1795 = vsel %vm1244, %v1762, 0
        %1797 = vmatprep.subr.mxu0 0.0
        %1798 = vmatpush1.xpose.msra.mxu0 %v1795
        %1799 = vmatprep.subr.mxu0 0.0
        %1800 = vmatpush1.xpose.msra.mxu0 %v1793
        %1801 = vmatprep.subr.mxu0 0.0
        %1802 = vmatpush1.xpose.msra.mxu0 %v1791
        %1803 = vmatprep.subr.mxu0 0.0
        %1804 = vmatpush1.xpose.msra.mxu0 %v1789
        %1805 = vmatprep.subr.mxu0 0.0
        %1806 = vmatpush1.xpose.msra.mxu0 %v1787
        %1807 = vmatprep.subr.mxu0 0.0
        %1808 = vmatpush1.xpose.msra.mxu0 %v1785
        %1809 = vmatprep.subr.mxu0 0.0
        %1810 = vmatpush1.xpose.msra.mxu0 %v1783
        %1811 = vmatprep.subr.mxu0 0.0
        %1812 = vmatpush1.xpose.msra.mxu0 %v1781
        %1813 = vmatprep.subr.mxu0 0.0
        %1814 = vmatpush1.xpose.msra.mxu0 %v1779
        %1815 = vmatprep.subr.mxu0 0.0
        %1816 = vmatpush1.xpose.msra.mxu0 %v1777
        %1817 = vmatprep.subr.mxu0 0.0
        %1818 = vmatpush1.xpose.msra.mxu0 %v1775
        %1819 = vmatprep.subr.mxu0 0.0
        %1820 = vmatpush1.xpose.msra.mxu0 %v1773
        %1821 = vmatprep.subr.mxu0 0.0
        %1822 = vmatpush1.xpose.msra.mxu0 %v1771
        %1823 = vmatprep.subr.mxu0 0.0
        %1824 = vmatpush1.xpose.msra.mxu0 %v1769
        %1825 = vmatprep.subr.mxu0 0.0
        %1826 = vmatpush1.xpose.msra.mxu0 %v1767
        %1827 = vmatprep.subr.mxu0 0.0
        %1828 = vmatpush1.xpose.msra.mxu0 %v1765
        %1829 = vmatprep.subr.mxu0 0.0
        %1830 = vmatpush2.xpose.msra.mxu0 0.0
        %1831 = vmatprep.subr.mxu0 0.0
        %1832 = vmatpush2.xpose.msra.mxu0 0.0
        %1833 = vmatprep.subr.mxu0 0.0
        %1834 = vmatpush2.xpose.msra.mxu0 0.0
        %1835 = vmatprep.subr.mxu0 0.0
        %1836 = vmatpush2.xpose.msra.mxu0 0.0
        %1837 = vmatprep.subr.mxu0 0.0
        %1838 = vmatpush2.xpose.msra.mxu0 0.0
        %1839 = vmatprep.subr.mxu0 0.0
        %1840 = vmatpush2.xpose.msra.mxu0 0.0
        %1841 = vmatprep.subr.mxu0 0.0
        %1842 = vmatpush2.xpose.msra.mxu0 0.0
        %1843 = vmatprep.subr.mxu0 0.0
        %1844 = vmatpush2.xpose.msra.mxu0 0.0
        %1845 = vmatprep.subr.mxu0 0.0
        %1846 = vmatpush2.xpose.msra.mxu0 0.0
        %1847 = vmatprep.subr.mxu0 0.0
        %1848 = vmatpush2.xpose.msra.mxu0 0.0
        %1849 = vmatprep.subr.mxu0 0.0
        %1850 = vmatpush2.xpose.msra.mxu0 0.0
        %1851 = vmatprep.subr.mxu0 0.0
        %1852 = vmatpush2.xpose.msra.mxu0 0.0
        %1853 = vmatprep.subr.mxu0 0.0
        %1854 = vmatpush2.xpose.msra.mxu0 0.0
        %1855 = vmatprep.subr.mxu0 0.0
        %1856 = vmatpush2.xpose.msra.mxu0 0.0
        %1857 = vmatprep.subr.mxu0 0.0
        %1858 = vmatpush2.xpose.msra.mxu0 0.0
        %1859 = vmatprep.subr.mxu0 0.0
        %1860 = vmatpush2.xpose.msra.mxu0 0.0
        %1861 = vmatprep.mubr.f32.mxu0 0.0
        %1862 = vmatmul.mubr.f32.gmra.mxu0 %v1763
        %v1863 = vpop.f32.mrf.mxu0
        %v1864 = vadd.f32 0.0, %v1863
        %v1865 = vpop.f32.mrf.mxu0
        %1866 = vdwg.mxu0
        %1867 = vmax.xlane.f32.xlu0 %v1864
        %v1868 = vpop.xlane.xlu0 %1867
        %v1869 = vsub.f32 %v1864, %v1868
        %v1870 = vmul.f32 %v1869, 1.442695
        %v1871 = vpow.pop %v1870
        %v1872 = vmul.f32 %v1871, %v1243
        %1873 = vadd.xlane.f32.xlu0 %v1872
        %v1874 = vpop.xlane.xlu0 %1873
        %v1875 = vrcp.pop %v1874
        %v1876 = vmul.f32 %v1872, %v1875
        %v1877 = vadd.f32 %v1594, %v1876
        %1878 = vrot.lane.b32.xlu0 %v1161, 112
        %v1879 = vpop.permute.xlu0 %1878
        %1880 = vrot.lane.b32.xlu0 %v1166, 112
        %v1881 = vpop.permute.xlu0 %1880
        %1882 = vrot.lane.b32.xlu0 %v1171, 112
        %v1883 = vpop.permute.xlu0 %1882
        %1884 = vrot.lane.b32.xlu0 %v1176, 112
        %v1885 = vpop.permute.xlu0 %1884
        %1886 = vrot.lane.b32.xlu0 %v1181, 112
        %v1887 = vpop.permute.xlu0 %1886
        %1888 = vrot.lane.b32.xlu0 %v1186, 112
        %v1889 = vpop.permute.xlu0 %1888
        %1890 = vrot.lane.b32.xlu0 %v1191, 112
        %v1891 = vpop.permute.xlu0 %1890
        %1892 = vrot.lane.b32.xlu0 %v1196, 112
        %v1893 = vpop.permute.xlu0 %1892
        %1894 = vrot.lane.b32.xlu0 %v1201, 112
        %v1895 = vpop.permute.xlu0 %1894
        %1896 = vrot.lane.b32.xlu0 %v1206, 112
        %v1897 = vpop.permute.xlu0 %1896
        %1898 = vrot.lane.b32.xlu0 %v1211, 112
        %v1899 = vpop.permute.xlu0 %1898
        %1900 = vrot.lane.b32.xlu0 %v1216, 112
        %v1901 = vpop.permute.xlu0 %1900
        %1902 = vrot.lane.b32.xlu0 %v1221, 112
        %v1903 = vpop.permute.xlu0 %1902
        %1904 = vrot.lane.b32.xlu0 %v1226, 112
        %v1905 = vpop.permute.xlu0 %1904
        %1906 = vrot.lane.b32.xlu0 %v1231, 112
        %v1907 = vpop.permute.xlu0 %1906
        %1908 = vrot.lane.b32.xlu0 %v1236, 112
        %v1909 = vpop.permute.xlu0 %1908
        %1926 = vmatprep.subr.mxu0 0.0
        %1927 = vmatpush1.msra.mxu0 %v1909
        %1928 = vmatprep.subr.mxu0 0.0
        %1929 = vmatpush1.msra.mxu0 %v1907
        %1930 = vmatprep.subr.mxu0 0.0
        %1931 = vmatpush1.msra.mxu0 %v1905
        %1932 = vmatprep.subr.mxu0 0.0
        %1933 = vmatpush1.msra.mxu0 %v1903
        %1934 = vmatprep.subr.mxu0 0.0
        %1935 = vmatpush1.msra.mxu0 %v1901
        %1936 = vmatprep.subr.mxu0 0.0
        %1937 = vmatpush1.msra.mxu0 %v1899
        %1938 = vmatprep.subr.mxu0 0.0
        %1939 = vmatpush1.msra.mxu0 %v1897
        %1940 = vmatprep.subr.mxu0 0.0
        %1941 = vmatpush1.msra.mxu0 %v1895
        %1942 = vmatprep.subr.mxu0 0.0
        %1943 = vmatpush1.msra.mxu0 %v1893
        %1944 = vmatprep.subr.mxu0 0.0
        %1945 = vmatpush1.msra.mxu0 %v1891
        %1946 = vmatprep.subr.mxu0 0.0
        %1947 = vmatpush1.msra.mxu0 %v1889
        %1948 = vmatprep.subr.mxu0 0.0
        %1949 = vmatpush1.msra.mxu0 %v1887
        %1950 = vmatprep.subr.mxu0 0.0
        %1951 = vmatpush1.msra.mxu0 %v1885
        %1952 = vmatprep.subr.mxu0 0.0
        %1953 = vmatpush1.msra.mxu0 %v1883
        %1954 = vmatprep.subr.mxu0 0.0
        %1955 = vmatpush1.msra.mxu0 %v1881
        %1956 = vmatprep.subr.mxu0 0.0
        %1957 = vmatpush1.msra.mxu0 %v1879
        %1958 = vmatprep.subr.mxu0 0.0
        %1959 = vmatpush2.msra.mxu0 0.0
        %1960 = vmatprep.subr.mxu0 0.0
        %1961 = vmatpush2.msra.mxu0 0.0
        %1962 = vmatprep.subr.mxu0 0.0
        %1963 = vmatpush2.msra.mxu0 0.0
        %1964 = vmatprep.subr.mxu0 0.0
        %1965 = vmatpush2.msra.mxu0 0.0
        %1966 = vmatprep.subr.mxu0 0.0
        %1967 = vmatpush2.msra.mxu0 0.0
        %1968 = vmatprep.subr.mxu0 0.0
        %1969 = vmatpush2.msra.mxu0 0.0
        %1970 = vmatprep.subr.mxu0 0.0
        %1971 = vmatpush2.msra.mxu0 0.0
        %1972 = vmatprep.subr.mxu0 0.0
        %1973 = vmatpush2.msra.mxu0 0.0
        %1974 = vmatprep.subr.mxu0 0.0
        %1975 = vmatpush2.msra.mxu0 0.0
        %1976 = vmatprep.subr.mxu0 0.0
        %1977 = vmatpush2.msra.mxu0 0.0
        %1978 = vmatprep.subr.mxu0 0.0
        %1979 = vmatpush2.msra.mxu0 0.0
        %1980 = vmatprep.subr.mxu0 0.0
        %1981 = vmatpush2.msra.mxu0 0.0
        %1982 = vmatprep.subr.mxu0 0.0
        %1983 = vmatpush2.msra.mxu0 0.0
        %1984 = vmatprep.subr.mxu0 0.0
        %1985 = vmatpush2.msra.mxu0 0.0
        %1986 = vmatprep.subr.mxu0 0.0
        %1987 = vmatpush2.msra.mxu0 0.0
        %1988 = vmatprep.subr.mxu0 0.0
        %1989 = vmatpush2.msra.mxu0 0.0
        %1990 = vmatprep.mubr.f32.mxu0 0.0
        %1991 = vmatmul.mubr.f32.gmra.mxu0 %v1876
        %v1992 = vpop.f32.mrf.mxu0
        %v1993 = vadd.f32 0.0, %v1992
        %v1994 = vpop.f32.mrf.mxu0
        %1995 = vdwg.mxu0
        %1996 = vrot.lane.b32.xlu0 %v834, 104
        %v1997 = vpop.permute.xlu0 %1996
        %1998 = vrot.lane.b32.xlu0 %v959, 104
        %v1999 = vpop.permute.xlu0 %1998
        %2000 = vrot.lane.b32.xlu0 %v964, 104
        %v2001 = vpop.permute.xlu0 %2000
        %2002 = vrot.lane.b32.xlu0 %v969, 104
        %v2003 = vpop.permute.xlu0 %2002
        %2004 = vrot.lane.b32.xlu0 %v974, 104
        %v2005 = vpop.permute.xlu0 %2004
        %2006 = vrot.lane.b32.xlu0 %v979, 104
        %v2007 = vpop.permute.xlu0 %2006
        %2008 = vrot.lane.b32.xlu0 %v984, 104
        %v2009 = vpop.permute.xlu0 %2008
        %2010 = vrot.lane.b32.xlu0 %v989, 104
        %v2011 = vpop.permute.xlu0 %2010
        %2012 = vrot.lane.b32.xlu0 %v994, 104
        %v2013 = vpop.permute.xlu0 %2012
        %2014 = vrot.lane.b32.xlu0 %v999, 104
        %v2015 = vpop.permute.xlu0 %2014
        %2016 = vrot.lane.b32.xlu0 %v1004, 104
        %v2017 = vpop.permute.xlu0 %2016
        %2018 = vrot.lane.b32.xlu0 %v1009, 104
        %v2019 = vpop.permute.xlu0 %2018
        %2020 = vrot.lane.b32.xlu0 %v1014, 104
        %v2021 = vpop.permute.xlu0 %2020
        %2022 = vrot.lane.b32.xlu0 %v1019, 104
        %v2023 = vpop.permute.xlu0 %2022
        %2024 = vrot.lane.b32.xlu0 %v1024, 104
        %v2025 = vpop.permute.xlu0 %2024
        %2026 = vrot.lane.b32.xlu0 %v1029, 104
        %v2027 = vpop.permute.xlu0 %2026
        %2028 = vrot.lane.b32.xlu0 %v1034, 104
        %v2029 = vpop.permute.xlu0 %2028
        %v2030 = vsel %vm1244, %v1997, 0
        %v2032 = vsel %vm1244, %v1999, 0
        %v2034 = vsel %vm1244, %v2001, 0
        %v2036 = vsel %vm1244, %v2003, 0
        %v2038 = vsel %vm1244, %v2005, 0
        %v2040 = vsel %vm1244, %v2007, 0
        %v2042 = vsel %vm1244, %v2009, 0
        %v2044 = vsel %vm1244, %v2011, 0
        %v2046 = vsel %vm1244, %v2013, 0
        %v2048 = vsel %vm1244, %v2015, 0
        %v2050 = vsel %vm1244, %v2017, 0
        %v2052 = vsel %vm1244, %v2019, 0
        %v2054 = vsel %vm1244, %v2021, 0
        %v2056 = vsel %vm1244, %v2023, 0
        %v2058 = vsel %vm1244, %v2025, 0
        %v2060 = vsel %vm1244, %v2027, 0
        %v2062 = vsel %vm1244, %v2029, 0
        %2064 = vmatprep.subr.mxu0 0.0
        %2065 = vmatpush1.xpose.msra.mxu0 %v2062
        %2066 = vmatprep.subr.mxu0 0.0
        %2067 = vmatpush1.xpose.msra.mxu0 %v2060
        %2068 = vmatprep.subr.mxu0 0.0
        %2069 = vmatpush1.xpose.msra.mxu0 %v2058
        %2070 = vmatprep.subr.mxu0 0.0
        %2071 = vmatpush1.xpose.msra.mxu0 %v2056
        %2072 = vmatprep.subr.mxu0 0.0
        %2073 = vmatpush1.xpose.msra.mxu0 %v2054
        %2074 = vmatprep.subr.mxu0 0.0
        %2075 = vmatpush1.xpose.msra.mxu0 %v2052
        %2076 = vmatprep.subr.mxu0 0.0
        %2077 = vmatpush1.xpose.msra.mxu0 %v2050
        %2078 = vmatprep.subr.mxu0 0.0
        %2079 = vmatpush1.xpose.msra.mxu0 %v2048
        %2080 = vmatprep.subr.mxu0 0.0
        %2081 = vmatpush1.xpose.msra.mxu0 %v2046
        %2082 = vmatprep.subr.mxu0 0.0
        %2083 = vmatpush1.xpose.msra.mxu0 %v2044
        %2084 = vmatprep.subr.mxu0 0.0
        %2085 = vmatpush1.xpose.msra.mxu0 %v2042
        %2086 = vmatprep.subr.mxu0 0.0
        %2087 = vmatpush1.xpose.msra.mxu0 %v2040
        %2088 = vmatprep.subr.mxu0 0.0
        %2089 = vmatpush1.xpose.msra.mxu0 %v2038
        %2090 = vmatprep.subr.mxu0 0.0
        %2091 = vmatpush1.xpose.msra.mxu0 %v2036
        %2092 = vmatprep.subr.mxu0 0.0
        %2093 = vmatpush1.xpose.msra.mxu0 %v2034
        %2094 = vmatprep.subr.mxu0 0.0
        %2095 = vmatpush1.xpose.msra.mxu0 %v2032
        %2096 = vmatprep.subr.mxu0 0.0
        %2097 = vmatpush2.xpose.msra.mxu0 0.0
        %2098 = vmatprep.subr.mxu0 0.0
        %2099 = vmatpush2.xpose.msra.mxu0 0.0
        %2100 = vmatprep.subr.mxu0 0.0
        %2101 = vmatpush2.xpose.msra.mxu0 0.0
        %2102 = vmatprep.subr.mxu0 0.0
        %2103 = vmatpush2.xpose.msra.mxu0 0.0
        %2104 = vmatprep.subr.mxu0 0.0
        %2105 = vmatpush2.xpose.msra.mxu0 0.0
        %2106 = vmatprep.subr.mxu0 0.0
        %2107 = vmatpush2.xpose.msra.mxu0 0.0
        %2108 = vmatprep.subr.mxu0 0.0
        %2109 = vmatpush2.xpose.msra.mxu0 0.0
        %2110 = vmatprep.subr.mxu0 0.0
        %2111 = vmatpush2.xpose.msra.mxu0 0.0
        %2112 = vmatprep.subr.mxu0 0.0
        %2113 = vmatpush2.xpose.msra.mxu0 0.0
        %2114 = vmatprep.subr.mxu0 0.0
        %2115 = vmatpush2.xpose.msra.mxu0 0.0
        %2116 = vmatprep.subr.mxu0 0.0
        %2117 = vmatpush2.xpose.msra.mxu0 0.0
        %2118 = vmatprep.subr.mxu0 0.0
        %2119 = vmatpush2.xpose.msra.mxu0 0.0
        %2120 = vmatprep.subr.mxu0 0.0
        %2121 = vmatpush2.xpose.msra.mxu0 0.0
        %2122 = vmatprep.subr.mxu0 0.0
        %2123 = vmatpush2.xpose.msra.mxu0 0.0
        %2124 = vmatprep.subr.mxu0 0.0
        %2125 = vmatpush2.xpose.msra.mxu0 0.0
        %2126 = vmatprep.subr.mxu0 0.0
        %2127 = vmatpush2.xpose.msra.mxu0 0.0
        %2128 = vmatprep.mubr.f32.mxu0 0.0
        %2129 = vmatmul.mubr.f32.gmra.mxu0 %v2030
        %v2130 = vpop.f32.mrf.mxu0
        %v2131 = vadd.f32 0.0, %v2130
        %v2132 = vpop.f32.mrf.mxu0
        %2133 = vdwg.mxu0
        %2134 = vmax.xlane.f32.xlu0 %v2131
        %v2135 = vpop.xlane.xlu0 %2134
        %v2136 = vsub.f32 %v2131, %v2135
        %v2137 = vmul.f32 %v2136, 1.442695
        %v2138 = vpow.pop %v2137
        %v2139 = vmul.f32 %v2138, %v1243
        %2140 = vadd.xlane.f32.xlu0 %v2139
        %v2141 = vpop.xlane.xlu0 %2140
        %v2142 = vrcp.pop %v2141
        %v2143 = vmul.f32 %v2139, %v2142
        %v2144 = vadd.f32 %v1877, %v2143
        %2145 = vrot.lane.b32.xlu0 %v1161, 104
        %v2146 = vpop.permute.xlu0 %2145
        %2147 = vrot.lane.b32.xlu0 %v1166, 104
        %v2148 = vpop.permute.xlu0 %2147
        %2149 = vrot.lane.b32.xlu0 %v1171, 104
        %v2150 = vpop.permute.xlu0 %2149
        %2151 = vrot.lane.b32.xlu0 %v1176, 104
        %v2152 = vpop.permute.xlu0 %2151
        %2153 = vrot.lane.b32.xlu0 %v1181, 104
        %v2154 = vpop.permute.xlu0 %2153
        %2155 = vrot.lane.b32.xlu0 %v1186, 104
        %v2156 = vpop.permute.xlu0 %2155
        %2157 = vrot.lane.b32.xlu0 %v1191, 104
        %v2158 = vpop.permute.xlu0 %2157
        %2159 = vrot.lane.b32.xlu0 %v1196, 104
        %v2160 = vpop.permute.xlu0 %2159
        %2161 = vrot.lane.b32.xlu0 %v1201, 104
        %v2162 = vpop.permute.xlu0 %2161
        %2163 = vrot.lane.b32.xlu0 %v1206, 104
        %v2164 = vpop.permute.xlu0 %2163
        %2165 = vrot.lane.b32.xlu0 %v1211, 104
        %v2166 = vpop.permute.xlu0 %2165
        %2167 = vrot.lane.b32.xlu0 %v1216, 104
        %v2168 = vpop.permute.xlu0 %2167
        %2169 = vrot.lane.b32.xlu0 %v1221, 104
        %v2170 = vpop.permute.xlu0 %2169
        %2171 = vrot.lane.b32.xlu0 %v1226, 104
        %v2172 = vpop.permute.xlu0 %2171
        %2173 = vrot.lane.b32.xlu0 %v1231, 104
        %v2174 = vpop.permute.xlu0 %2173
        %2175 = vrot.lane.b32.xlu0 %v1236, 104
        %v2176 = vpop.permute.xlu0 %2175
        %2193 = vmatprep.subr.mxu0 0.0
        %2194 = vmatpush1.msra.mxu0 %v2176
        %2195 = vmatprep.subr.mxu0 0.0
        %2196 = vmatpush1.msra.mxu0 %v2174
        %2197 = vmatprep.subr.mxu0 0.0
        %2198 = vmatpush1.msra.mxu0 %v2172
        %2199 = vmatprep.subr.mxu0 0.0
        %2200 = vmatpush1.msra.mxu0 %v2170
        %2201 = vmatprep.subr.mxu0 0.0
        %2202 = vmatpush1.msra.mxu0 %v2168
        %2203 = vmatprep.subr.mxu0 0.0
        %2204 = vmatpush1.msra.mxu0 %v2166
        %2205 = vmatprep.subr.mxu0 0.0
        %2206 = vmatpush1.msra.mxu0 %v2164
        %2207 = vmatprep.subr.mxu0 0.0
        %2208 = vmatpush1.msra.mxu0 %v2162
        %2209 = vmatprep.subr.mxu0 0.0
        %2210 = vmatpush1.msra.mxu0 %v2160
        %2211 = vmatprep.subr.mxu0 0.0
        %2212 = vmatpush1.msra.mxu0 %v2158
        %2213 = vmatprep.subr.mxu0 0.0
        %2214 = vmatpush1.msra.mxu0 %v2156
        %2215 = vmatprep.subr.mxu0 0.0
        %2216 = vmatpush1.msra.mxu0 %v2154
        %2217 = vmatprep.subr.mxu0 0.0
        %2218 = vmatpush1.msra.mxu0 %v2152
        %2219 = vmatprep.subr.mxu0 0.0
        %2220 = vmatpush1.msra.mxu0 %v2150
        %2221 = vmatprep.subr.mxu0 0.0
        %2222 = vmatpush1.msra.mxu0 %v2148
        %2223 = vmatprep.subr.mxu0 0.0
        %2224 = vmatpush1.msra.mxu0 %v2146
        %2225 = vmatprep.subr.mxu0 0.0
        %2226 = vmatpush2.msra.mxu0 0.0
        %2227 = vmatprep.subr.mxu0 0.0
        %2228 = vmatpush2.msra.mxu0 0.0
        %2229 = vmatprep.subr.mxu0 0.0
        %2230 = vmatpush2.msra.mxu0 0.0
        %2231 = vmatprep.subr.mxu0 0.0
        %2232 = vmatpush2.msra.mxu0 0.0
        %2233 = vmatprep.subr.mxu0 0.0
        %2234 = vmatpush2.msra.mxu0 0.0
        %2235 = vmatprep.subr.mxu0 0.0
        %2236 = vmatpush2.msra.mxu0 0.0
        %2237 = vmatprep.subr.mxu0 0.0
        %2238 = vmatpush2.msra.mxu0 0.0
        %2239 = vmatprep.subr.mxu0 0.0
        %2240 = vmatpush2.msra.mxu0 0.0
        %2241 = vmatprep.subr.mxu0 0.0
        %2242 = vmatpush2.msra.mxu0 0.0
        %2243 = vmatprep.subr.mxu0 0.0
        %2244 = vmatpush2.msra.mxu0 0.0
        %2245 = vmatprep.subr.mxu0 0.0
        %2246 = vmatpush2.msra.mxu0 0.0
        %2247 = vmatprep.subr.mxu0 0.0
        %2248 = vmatpush2.msra.mxu0 0.0
        %2249 = vmatprep.subr.mxu0 0.0
        %2250 = vmatpush2.msra.mxu0 0.0
        %2251 = vmatprep.subr.mxu0 0.0
        %2252 = vmatpush2.msra.mxu0 0.0
        %2253 = vmatprep.subr.mxu0 0.0
        %2254 = vmatpush2.msra.mxu0 0.0
        %2255 = vmatprep.subr.mxu0 0.0
        %2256 = vmatpush2.msra.mxu0 0.0
        %2257 = vmatprep.mubr.f32.mxu0 0.0
        %2258 = vmatmul.mubr.f32.gmra.mxu0 %v2143
        %v2259 = vpop.f32.mrf.mxu0
        %v2260 = vadd.f32 0.0, %v2259
        %v2261 = vpop.f32.mrf.mxu0
        %2262 = vdwg.mxu0
        %v2263 = vmul.f32 %v2144, 0.25
        %2264 = vst [vmem:[%s649] sm:$0xff] %v2263
        %2266 = vrot.lane.b32.xlu0 %v1726, 8
        %v2267 = vpop.permute.xlu0 %2266
        %2270 = vrot.lane.b32.xlu0 %v1993, 16
        %v2271 = vpop.permute.xlu0 %2270
        %2274 = vrot.lane.b32.xlu0 %v2260, 24
        %v2275 = vpop.permute.xlu0 %2274
        %v2277 = vsel %vm1244, %v1443, %v2267
        %vm2278 = vcmask 130048
        %v2279 = vsel %vm2278, %v2277, %v2271
        %vm2280 = vcmask 195584
        %v2281 = vsel %vm2280, %v2279, %v2275
        %v2282 = vld [vmem:[%s6] sm:$0xff]
        %v2283 = vld [vmem:[%s6 + $0x8] sm:$0xff]
        %v2284 = vld [vmem:[%s6 + $0x10] sm:$0xff]
        %v2285 = vld [vmem:[%s6 + $0x18] sm:$0xff]
        %v2286 = vld [vmem:[%s7] sm:$0x1]
        %v2288 = vlaneseq
        %v2289 = vshrl.u32 %v2288, 7
        %v2290 = vsub.s32 0, %v2289
        %v2291 = vrot.slane %v2286, %v2290
        %v2294 = vsel %vm706, %v2281, 0
        %2296 = vmatprep.subr.mxu0 0.0
        %2297 = vmatpush1.msra.mxu0 0.0
        %2298 = vmatprep.subr.mxu0 0.0
        %2299 = vmatpush1.msra.mxu0 0.0
        %2300 = vmatprep.subr.mxu0 0.0
        %2301 = vmatpush1.msra.mxu0 0.0
        %2302 = vmatprep.subr.mxu0 0.0
        %2303 = vmatpush1.msra.mxu0 0.0
        %2304 = vmatprep.subr.mxu0 0.0
        %2305 = vmatpush1.msra.mxu0 0.0
        %2306 = vmatprep.subr.mxu0 0.0
        %2307 = vmatpush1.msra.mxu0 0.0
        %2308 = vmatprep.subr.mxu0 0.0
        %2309 = vmatpush1.msra.mxu0 0.0
        %2310 = vmatprep.subr.mxu0 0.0
        %2311 = vmatpush1.msra.mxu0 0.0
        %2312 = vmatprep.subr.mxu0 0.0
        %2313 = vmatpush1.msra.mxu0 0.0
        %2314 = vmatprep.subr.mxu0 0.0
        %2315 = vmatpush1.msra.mxu0 0.0
        %2316 = vmatprep.subr.mxu0 0.0
        %2317 = vmatpush1.msra.mxu0 0.0
        %2318 = vmatprep.subr.mxu0 0.0
        %2319 = vmatpush1.msra.mxu0 0.0
        %2320 = vmatprep.subr.mxu0 0.0
        %2321 = vmatpush1.msra.mxu0 %v2285
        %2322 = vmatprep.subr.mxu0 0.0
        %2323 = vmatpush1.msra.mxu0 %v2284
        %2324 = vmatprep.subr.mxu0 0.0
        %2325 = vmatpush1.msra.mxu0 %v2283
        %2326 = vmatprep.subr.mxu0 0.0
        %2327 = vmatpush1.msra.mxu0 %v2282
        %2328 = vmatprep.subr.mxu0 0.0
        %2329 = vmatpush2.msra.mxu0 0.0
        %2330 = vmatprep.subr.mxu0 0.0
        %2331 = vmatpush2.msra.mxu0 0.0
        %2332 = vmatprep.subr.mxu0 0.0
        %2333 = vmatpush2.msra.mxu0 0.0
        %2334 = vmatprep.subr.mxu0 0.0
        %2335 = vmatpush2.msra.mxu0 0.0
        %2336 = vmatprep.subr.mxu0 0.0
        %2337 = vmatpush2.msra.mxu0 0.0
        %2338 = vmatprep.subr.mxu0 0.0
        %2339 = vmatpush2.msra.mxu0 0.0
        %2340 = vmatprep.subr.mxu0 0.0
        %2341 = vmatpush2.msra.mxu0 0.0
        %2342 = vmatprep.subr.mxu0 0.0
        %2343 = vmatpush2.msra.mxu0 0.0
        %2344 = vmatprep.subr.mxu0 0.0
        %2345 = vmatpush2.msra.mxu0 0.0
        %2346 = vmatprep.subr.mxu0 0.0
        %2347 = vmatpush2.msra.mxu0 0.0
        %2348 = vmatprep.subr.mxu0 0.0
        %2349 = vmatpush2.msra.mxu0 0.0
        %2350 = vmatprep.subr.mxu0 0.0
        %2351 = vmatpush2.msra.mxu0 0.0
        %2352 = vmatprep.subr.mxu0 0.0
        %2353 = vmatpush2.msra.mxu0 0.0
        %2354 = vmatprep.subr.mxu0 0.0
        %2355 = vmatpush2.msra.mxu0 0.0
        %2356 = vmatprep.subr.mxu0 0.0
        %2357 = vmatpush2.msra.mxu0 0.0
        %2358 = vmatprep.subr.mxu0 0.0
        %2359 = vmatpush2.msra.mxu0 0.0
        %2360 = vmatprep.mubr.f32.mxu0 0.0
        %2361 = vmatmul.mubr.f32.gmra.mxu0 %v2294
        %v2362 = vpop.f32.mrf.mxu0
        %v2363 = vadd.f32 %v2291, %v2362
        %v2364 = vpop.f32.mrf.mxu0
        %2365 = vdwg.mxu0
        %v2366 = vadd.f32 %v734, %v2363
        %v2367 = vld [vmem:[%s14] sm:$0x1]
        %v2368 = vld [vmem:[%s15] sm:$0x1]
        %v2369 = vsel %vm706, %v2366, 0.0
        %2370 = vadd.xlane.f32.xlu0 %v2369
        %v2371 = vpop.xlane.xlu0 %2370
        %v2372 = vmul.f32 %v2371, %v710
        %v2373 = vsub.f32 %v2366, %v2372
        %v2374 = vmul.f32 %v2373, %v2373
        %v2375 = vsel %vm706, %v2374, 0.0
        %2376 = vadd.xlane.f32.xlu0 %v2375
        %v2377 = vpop.xlane.xlu0 %2376
        %v2378 = vmul.f32 %v2377, %v710
        %v2379 = vadd.f32 %v2378, 1e-05
        %v2380 = vrsqrt.pop %v2379
        %v2381 = vmul.f32 %v2373, %v2380
        %v2383 = vlaneseq
        %v2384 = vshrl.u32 %v2383, 7
        %v2385 = vsub.s32 0, %v2384
        %v2386 = vrot.slane %v2367, %v2385
        %v2388 = vmul.f32 %v2381, %v2386
        %v2390 = vlaneseq
        %v2391 = vshrl.u32 %v2390, 7
        %v2392 = vsub.s32 0, %v2391
        %v2393 = vrot.slane %v2368, %v2392
        %v2395 = vadd.f32 %v2388, %v2393
        %v2396 = vld [vmem:[%s8] sm:$0xff]
        %v2397 = vld [vmem:[%s8 + $0x8] sm:$0xff]
        %v2398 = vld [vmem:[%s8 + $0x10] sm:$0xff]
        %v2399 = vld [vmem:[%s8 + $0x18] sm:$0xff]
        %v2400 = vld [vmem:[%s9] sm:$0x1]
        %v2402 = vlaneseq
        %v2403 = vshrl.u32 %v2402, 7
        %v2404 = vsub.s32 0, %v2403
        %v2405 = vrot.slane %v2400, %v2404
        %v2408 = vsel %vm706, %v2395, 0
        %2410 = vmatprep.subr.mxu0 0.0
        %2411 = vmatpush1.msra.mxu0 0.0
        %2412 = vmatprep.subr.mxu0 0.0
        %2413 = vmatpush1.msra.mxu0 0.0
        %2414 = vmatprep.subr.mxu0 0.0
        %2415 = vmatpush1.msra.mxu0 0.0
        %2416 = vmatprep.subr.mxu0 0.0
        %2417 = vmatpush1.msra.mxu0 0.0
        %2418 = vmatprep.subr.mxu0 0.0
        %2419 = vmatpush1.msra.mxu0 0.0
        %2420 = vmatprep.subr.mxu0 0.0
        %2421 = vmatpush1.msra.mxu0 0.0
        %2422 = vmatprep.subr.mxu0 0.0
        %2423 = vmatpush1.msra.mxu0 0.0
        %2424 = vmatprep.subr.mxu0 0.0
        %2425 = vmatpush1.msra.mxu0 0.0
        %2426 = vmatprep.subr.mxu0 0.0
        %2427 = vmatpush1.msra.mxu0 0.0
        %2428 = vmatprep.subr.mxu0 0.0
        %2429 = vmatpush1.msra.mxu0 0.0
        %2430 = vmatprep.subr.mxu0 0.0
        %2431 = vmatpush1.msra.mxu0 0.0
        %2432 = vmatprep.subr.mxu0 0.0
        %2433 = vmatpush1.msra.mxu0 0.0
        %2434 = vmatprep.subr.mxu0 0.0
        %2435 = vmatpush1.msra.mxu0 %v2399
        %2436 = vmatprep.subr.mxu0 0.0
        %2437 = vmatpush1.msra.mxu0 %v2398
        %2438 = vmatprep.subr.mxu0 0.0
        %2439 = vmatpush1.msra.mxu0 %v2397
        %2440 = vmatprep.subr.mxu0 0.0
        %2441 = vmatpush1.msra.mxu0 %v2396
        %2442 = vmatprep.subr.mxu0 0.0
        %2443 = vmatpush2.msra.mxu0 0.0
        %2444 = vmatprep.subr.mxu0 0.0
        %2445 = vmatpush2.msra.mxu0 0.0
        %2446 = vmatprep.subr.mxu0 0.0
        %2447 = vmatpush2.msra.mxu0 0.0
        %2448 = vmatprep.subr.mxu0 0.0
        %2449 = vmatpush2.msra.mxu0 0.0
        %2450 = vmatprep.subr.mxu0 0.0
        %2451 = vmatpush2.msra.mxu0 0.0
        %2452 = vmatprep.subr.mxu0 0.0
        %2453 = vmatpush2.msra.mxu0 0.0
        %2454 = vmatprep.subr.mxu0 0.0
        %2455 = vmatpush2.msra.mxu0 0.0
        %2456 = vmatprep.subr.mxu0 0.0
        %2457 = vmatpush2.msra.mxu0 0.0
        %2458 = vmatprep.subr.mxu0 0.0
        %2459 = vmatpush2.msra.mxu0 0.0
        %2460 = vmatprep.subr.mxu0 0.0
        %2461 = vmatpush2.msra.mxu0 0.0
        %2462 = vmatprep.subr.mxu0 0.0
        %2463 = vmatpush2.msra.mxu0 0.0
        %2464 = vmatprep.subr.mxu0 0.0
        %2465 = vmatpush2.msra.mxu0 0.0
        %2466 = vmatprep.subr.mxu0 0.0
        %2467 = vmatpush2.msra.mxu0 0.0
        %2468 = vmatprep.subr.mxu0 0.0
        %2469 = vmatpush2.msra.mxu0 0.0
        %2470 = vmatprep.subr.mxu0 0.0
        %2471 = vmatpush2.msra.mxu0 0.0
        %2472 = vmatprep.subr.mxu0 0.0
        %2473 = vmatpush2.msra.mxu0 0.0
        %2474 = vmatprep.mubr.f32.mxu0 0.0
        %2475 = vmatmul.mubr.f32.gmra.mxu0 %v2408
        %v2476 = vpop.f32.mrf.mxu0
        %v2477 = vadd.f32 %v2405, %v2476
        %v2478 = vpop.f32.mrf.mxu0
        %2479 = vdwg.mxu0
        %v2480 = vmax.f32 %v2477, 0.0
        %v2481 = vld [vmem:[%s10] sm:$0xff]
        %v2482 = vld [vmem:[%s10 + $0x8] sm:$0xff]
        %v2483 = vld [vmem:[%s10 + $0x10] sm:$0xff]
        %v2484 = vld [vmem:[%s10 + $0x18] sm:$0xff]
        %v2485 = vld [vmem:[%s10 + $0x20] sm:$0xff]
        %v2486 = vld [vmem:[%s10 + $0x28] sm:$0xff]
        %v2487 = vld [vmem:[%s10 + $0x30] sm:$0xff]
        %v2488 = vld [vmem:[%s10 + $0x38] sm:$0xff]
        %v2489 = vld [vmem:[%s11] sm:$0x1]
        %v2491 = vlaneseq
        %v2492 = vshrl.u32 %v2491, 7
        %v2493 = vsub.s32 0, %v2492
        %v2494 = vrot.slane %v2489, %v2493
        %vm2496 = vcmask 523264
        %v2498 = vsel %vm2496, %v2480, 0
        %2500 = vmatprep.subr.mxu0 0.0
        %2501 = vmatpush1.msra.mxu0 0.0
        %2502 = vmatprep.subr.mxu0 0.0
        %2503 = vmatpush1.msra.mxu0 0.0
        %2504 = vmatprep.subr.mxu0 0.0
        %2505 = vmatpush1.msra.mxu0 0.0
        %2506 = vmatprep.subr.mxu0 0.0
        %2507 = vmatpush1.msra.mxu0 0.0
        %2508 = vmatprep.subr.mxu0 0.0
        %2509 = vmatpush1.msra.mxu0 0.0
        %2510 = vmatprep.subr.mxu0 0.0
        %2511 = vmatpush1.msra.mxu0 0.0
        %2512 = vmatprep.subr.mxu0 0.0
        %2513 = vmatpush1.msra.mxu0 0.0
        %2514 = vmatprep.subr.mxu0 0.0
        %2515 = vmatpush1.msra.mxu0 0.0
        %2516 = vmatprep.subr.mxu0 0.0
        %2517 = vmatpush1.msra.mxu0 %v2488
        %2518 = vmatprep.subr.mxu0 0.0
        %2519 = vmatpush1.msra.mxu0 %v2487
        %2520 = vmatprep.subr.mxu0 0.0
        %2521 = vmatpush1.msra.mxu0 %v2486
        %2522 = vmatprep.subr.mxu0 0.0
        %2523 = vmatpush1.msra.mxu0 %v2485
        %2524 = vmatprep.subr.mxu0 0.0
        %2525 = vmatpush1.msra.mxu0 %v2484
        %2526 = vmatprep.subr.mxu0 0.0
        %2527 = vmatpush1.msra.mxu0 %v2483
        %2528 = vmatprep.subr.mxu0 0.0
        %2529 = vmatpush1.msra.mxu0 %v2482
        %2530 = vmatprep.subr.mxu0 0.0
        %2531 = vmatpush1.msra.mxu0 %v2481
        %2532 = vmatprep.subr.mxu0 0.0
        %2533 = vmatpush2.msra.mxu0 0.0
        %2534 = vmatprep.subr.mxu0 0.0
        %2535 = vmatpush2.msra.mxu0 0.0
        %2536 = vmatprep.subr.mxu0 0.0
        %2537 = vmatpush2.msra.mxu0 0.0
        %2538 = vmatprep.subr.mxu0 0.0
        %2539 = vmatpush2.msra.mxu0 0.0
        %2540 = vmatprep.subr.mxu0 0.0
        %2541 = vmatpush2.msra.mxu0 0.0
        %2542 = vmatprep.subr.mxu0 0.0
        %2543 = vmatpush2.msra.mxu0 0.0
        %2544 = vmatprep.subr.mxu0 0.0
        %2545 = vmatpush2.msra.mxu0 0.0
        %2546 = vmatprep.subr.mxu0 0.0
        %2547 = vmatpush2.msra.mxu0 0.0
        %2548 = vmatprep.subr.mxu0 0.0
        %2549 = vmatpush2.msra.mxu0 0.0
        %2550 = vmatprep.subr.mxu0 0.0
        %2551 = vmatpush2.msra.mxu0 0.0
        %2552 = vmatprep.subr.mxu0 0.0
        %2553 = vmatpush2.msra.mxu0 0.0
        %2554 = vmatprep.subr.mxu0 0.0
        %2555 = vmatpush2.msra.mxu0 0.0
        %2556 = vmatprep.subr.mxu0 0.0
        %2557 = vmatpush2.msra.mxu0 0.0
        %2558 = vmatprep.subr.mxu0 0.0
        %2559 = vmatpush2.msra.mxu0 0.0
        %2560 = vmatprep.subr.mxu0 0.0
        %2561 = vmatpush2.msra.mxu0 0.0
        %2562 = vmatprep.subr.mxu0 0.0
        %2563 = vmatpush2.msra.mxu0 0.0
        %2564 = vmatprep.mubr.f32.mxu0 0.0
        %2565 = vmatmul.mubr.f32.gmra.mxu0 %v2498
        %v2566 = vpop.f32.mrf.mxu0
        %v2567 = vadd.f32 %v2494, %v2566
        %v2568 = vpop.f32.mrf.mxu0
        %2569 = vdwg.mxu0
        %v2570 = vadd.f32 %v2395, %v2567
        %v2571 = vld [vmem:[%s16] sm:$0x1]
        %v2572 = vld [vmem:[%s17] sm:$0x1]
        %v2573 = vsel %vm706, %v2570, 0.0
        %2574 = vadd.xlane.f32.xlu0 %v2573
        %v2575 = vpop.xlane.xlu0 %2574
        %v2576 = vmul.f32 %v2575, %v710
        %v2577 = vsub.f32 %v2570, %v2576
        %v2578 = vmul.f32 %v2577, %v2577
        %v2579 = vsel %vm706, %v2578, 0.0
        %2580 = vadd.xlane.f32.xlu0 %v2579
        %v2581 = vpop.xlane.xlu0 %2580
        %v2582 = vmul.f32 %v2581, %v710
        %v2583 = vadd.f32 %v2582, 1e-05
        %v2584 = vrsqrt.pop %v2583
        %v2585 = vmul.f32 %v2577, %v2584
        %v2587 = vlaneseq
        %v2588 = vshrl.u32 %v2587, 7
        %v2589 = vsub.s32 0, %v2588
        %v2590 = vrot.slane %v2571, %v2589
        %v2592 = vmul.f32 %v2585, %v2590
        %v2594 = vlaneseq
        %v2595 = vshrl.u32 %v2594, 7
        %v2596 = vsub.s32 0, %v2595
        %v2597 = vrot.slane %v2572, %v2596
        %v2599 = vadd.f32 %v2592, %v2597
        %2600 = vst.msk [vmem:[%s642] sm:$0xff] %vm706, %v2599
        %s2601 = sand.u32 %s443, 1
        %s2602 = scalar_lea.sflag [#allocation3], %s2601
        %s2603 = sand.u32 %s443, 1
        %s2604 = smul.addr %s2603, 8
        %s2605 = scalar_lea.vmem [#allocation2], %s2604
        %s2606 = sand.u32 %s469, 1
        %s2607 = scalar_lea.sflag [#allocation5], %s2606
        %s2608 = sand.u32 %s469, 1
        %s2609 = smul.addr %s2608, 8
        %s2610 = scalar_lea.vmem [#allocation4], %s2609
        // Predicated region
        $region93: #{tpu_custom_call.1} parent=91 // pred_check
          %p2611 = pneg %p453
        $region94: #{tpu_custom_call.1} parent=91 // pred_check_branch
          %2613 = sbr.rel (%p2611) target = $region96
        $region95: #{tpu_custom_call.1} parent=91 // pred_region
          %s2615 = ssub.s32 128, 128
          %2616 = vsyncadd %s2602, %s2615
          %s2617 = smul.addr %s37, 128
          %s2618 = scalar_lea.hbm %s18, %s2617
          %s2620 = sshll.u32 %s2605, 4
          %s2621 = int_to_ptr.vmem [resolvable:$true] %s2620
          %2623 = dma.vmem_to_hbm [thread:$0]  %s2621, 128, %s2618, %s2602
        $region96: #{tpu_custom_call.1} parent=91 // pred_fallthru
          _
        // Predicated region
        $region97: #{tpu_custom_call.1} parent=91 // pred_check
          %p2624 = pneg %p479
        $region98: #{tpu_custom_call.1} parent=91 // pred_check_branch
          %2626 = sbr.rel (%p2624) target = $region100
        $region99: #{tpu_custom_call.1} parent=91 // pred_region
          %s2628 = ssub.s32 128, 128
          %2629 = vsyncadd %s2607, %s2628
          %s2630 = smul.addr %s37, 128
          %s2631 = scalar_lea.hbm %s19, %s2630
          %s2633 = sshll.u32 %s2610, 4
          %s2634 = int_to_ptr.vmem [resolvable:$true] %s2633
          %2636 = dma.vmem_to_hbm [thread:$0]  %s2634, 128, %s2631, %s2607
        $region100: #{tpu_custom_call.1} parent=91 // pred_fallthru
          _
      $region92: #{tpu_custom_call.1} parent=5 // pred_fallthru
        _
      %p2637 = scmp.le.s32.totalorder 2, %s32
      // Predicated region
      $region101: #{tpu_custom_call.1} parent=5 // pred_check
        %p2638 = pneg %p2637
      $region102: #{tpu_custom_call.1} parent=5 // pred_check_branch
        %2640 = sbr.rel (%p2638) target = $region104
      $region103: #{tpu_custom_call.1} parent=5 // pred_region
        %s2641 = ssub.s32 %s32, 2
        // Predicated region
        $region105: #{tpu_custom_call.1} parent=103 // pred_check
          %p2642 = pneg %p459
        $region106: #{tpu_custom_call.1} parent=103 // pred_check_branch
          %2644 = sbr.rel (%p2642) target = $region108
        $region107: #{tpu_custom_call.1} parent=103 // pred_region
          %s2645 = sand.u32 %s444, 1
          %s2646 = scalar_lea.sflag [#allocation3], %s2645
          %s2647 = sand.u32 %s444, 1
          %s2648 = smul.addr %s2647, 8
          %s2649 = scalar_lea.vmem [#allocation2], %s2648
          %2650 = dma.done %s2646, 128
        $region108: #{tpu_custom_call.1} parent=103 // pred_fallthru
          _
        // Predicated region
        $region109: #{tpu_custom_call.1} parent=103 // pred_check
          %p2651 = pneg %p485
        $region110: #{tpu_custom_call.1} parent=103 // pred_check_branch
          %2653 = sbr.rel (%p2651) target = $region112
        $region111: #{tpu_custom_call.1} parent=103 // pred_region
          %s2654 = sand.u32 %s470, 1
          %s2655 = scalar_lea.sflag [#allocation5], %s2654
          %s2656 = sand.u32 %s470, 1
          %s2657 = smul.addr %s2656, 8
          %s2658 = scalar_lea.vmem [#allocation4], %s2657
          %2659 = dma.done %s2655, 128
        $region112: #{tpu_custom_call.1} parent=103 // pred_fallthru
          _
      $region104: #{tpu_custom_call.1} parent=5 // pred_fallthru
        _
    $region6: #{tpu_custom_call.1} parent=1 // loop_footer
      %s36 = sadd.s32 1, %s32
    $region7: #{tpu_custom_call.1} parent=1 // loop_footer_branch
      %31 = sbr.rel target = $region3
    $region8: #{tpu_custom_call.1} parent=1 // loop_exit
      _
    %2660 = vsyncpa [#allocation3], 1
    %s2661 = scalar_lea.sflag [#allocation3], 1
    %2662 = vsyncpa %s2661, 1
    %2663 = vsyncpa [#allocation5], 1
    %s2664 = scalar_lea.sflag [#allocation5], 1
    %2665 = vsyncpa %s2664, 1

</llo_original>
